<compile_context>
chip_gen: v7x
topology: tpu7x:2x2x1
jax: 0.10.0
libtpu: 0.0.40
codegen_flags: <defaults>
</compile_context>

<pallas_src>
import functools

import jax
import jax.numpy as jnp
import numpy as np
from jax.experimental import pallas as pl
from jax.experimental.pallas import tpu as pltpu

# Above the 32 MiB scoped default, still below v7x's 64 MiB physical VMEM per TensorCore.
# TODO(synk): on v6e this could be raised toward ~100 MiB for larger resident blocks.
_VMEM_LIMIT = 48 * 1024 * 1024


# ------------------------------ Pallas kernel --------------------------------

def _decoder_level_kernel(*args, Hs, Ws, Cp, H, W, Ce, Cu, Co, groups, eps, out_ch):
    """One UNet decoder level for one batch item, fully fused in VMEM.

    deconv2x2(x) -> concat([enc, up]) -> conv3x3+GN+ReLU -> conv3x3+GN+ReLU (-> 1x1 head)

    xpad_ref is a bf16 padded-image scratch with a 1-row / 2-column halo (rows are the
    untiled outer dim; 2 columns keep every bf16 store at an even sublane offset).
    """
    if out_ch:
        (x_ref, enc_ref, wd_ref, bd_ref, gmat_ref,
         w1_ref, b1_ref, g1_ref, be1_ref,
         w2_ref, b2_ref, g2_ref, be2_ref,
         wo_ref, bo_ref, o_ref, head_ref, xpad_ref) = args
    else:
        (x_ref, enc_ref, wd_ref, bd_ref, gmat_ref,
         w1_ref, b1_ref, g1_ref, be1_ref,
         w2_ref, b2_ref, g2_ref, be2_ref,
         o_ref, xpad_ref) = args

    HW = H * W
    Cc = Ce + Cu
    gsize = Co // groups
    inv_n = 1.0 / float(HW * gsize)

    # --- halo zeroing only (interior is always fully rewritten below). Done every grid
    # --- step so it stays correct under megacore sharding of the "parallel" batch axis.
    xpad_ref[0:1, :, :] = jnp.zeros((1, W + 4, Cc), jnp.bfloat16)
    xpad_ref[H + 1:H + 2, :, :] = jnp.zeros((1, W + 4, Cc), jnp.bfloat16)
    xpad_ref[:, 0:2, :] = jnp.zeros((H + 2, 2, Cc), jnp.bfloat16)
    xpad_ref[:, W + 2:W + 4, :] = jnp.zeros((H + 2, 2, Cc), jnp.bfloat16)

    # --- ConvTranspose2d(kernel=2, stride=2): four (Hs*Ws, Cp) @ (Cp, Cu) MXU matmuls,
    # --- then a VMEM-only depth-to-space (major-dim concats + layout-safe reshapes).
    xm = x_ref[0].reshape(Hs * Ws, Cp).astype(jnp.bfloat16)
    taps = [jnp.dot(xm, wd_ref[k], preferred_element_type=jnp.float32) + bd_ref[...]
            for k in range(4)]                                      # k = 2*dy + dx

    def interleave_rows(a, b):
        # (N, C), (N, C) -> (2N, C) with rows alternating a[0], b[0], a[1], b[1], ...
        n, c = a.shape
        stacked = jnp.concatenate([a.reshape(n, 1, 1, c), b.reshape(n, 1, 1, c)], axis=1)
        return stacked.reshape(2 * n, c)

    row0 = interleave_rows(taps[0], taps[1]).reshape(Hs, 1, W, Cu)  # dy = 0 output rows
    row1 = interleave_rows(taps[2], taps[3]).reshape(Hs, 1, W, Cu)  # dy = 1 output rows
    up = jnp.concatenate([row0, row1], axis=1).reshape(H, W, Cu)

    # --- skip concat straight into the padded scratch: channels = [enc | up].
    cat = jnp.concatenate(
        [enc_ref[0].astype(jnp.bfloat16), up.astype(jnp.bfloat16)], axis=-1)
    xpad_ref[1:H + 1, 2:W + 2, :] = cat

    def im2col(cin):
        # (HW, 9*cin) bf16 patches built from the padded scratch; K order = (dy, dx, ci).
        return jnp.concatenate(
            [xpad_ref[dy:dy + H, dx + 1:dx + 1 + W, :cin].reshape(HW, cin)
             for dy in range(3) for dx in range(3)], axis=-1)

    def group_norm_relu(acc, gamma, beta):
        # Centered two-pass statistics; group reduce via the resident 0/1 group matrix.
        s = jnp.sum(acc, axis=0, keepdims=True)                                # (1, Co)
        mean = jnp.dot(s, gmat_ref[...], preferred_element_type=jnp.float32) * inv_n
        d = acc - mean
        v = jnp.sum(d * d, axis=0, keepdims=True)
        var = jnp.dot(v, gmat_ref[...], preferred_element_type=jnp.float32) * inv_n
        y = d * jax.lax.rsqrt(var + eps) * gamma + beta
        return jnp.maximum(y, 0.0)

    # --- conv1 (+GN+ReLU): one big-K matmul over the concatenated input.
    acc1 = jnp.dot(im2col(Cc), w1_ref[...], preferred_element_type=jnp.float32)
    y1 = group_norm_relu(acc1 + b1_ref[...], g1_ref[...], be1_ref[...])        # (HW, Co)

    # --- conv2 (+GN+ReLU): reads conv1's output straight from VMEM.
    xpad_ref[1:H + 1, 2:W + 2, :Co] = y1.reshape(H, W, Co).astype(jnp.bfloat16)
    acc2 = jnp.dot(im2col(Co), w2_ref[...], preferred_element_type=jnp.float32)
    y2 = group_norm_relu(acc2 + b2_ref[...], g2_ref[...], be2_ref[...])        # (HW, Co)

    o_ref[0] = y2.reshape(H, W, Co).astype(o_ref.dtype)

    if out_ch:
        # Final 1x1 output conv fused into the last level (no HBM re-read, no extra call).
        yh = jnp.dot(y2.astype(jnp.bfloat16), wo_ref[...],
                     preferred_element_type=jnp.float32) + bo_ref[...]
        head_ref[0] = yh.reshape(H, W, out_ch).astype(head_ref.dtype)


# ------------------------------ Pallas wrapper --------------------------------

def _decoder_level(x_nhwc, enc_nhwc, lp, head=None, eps=1e-5):
    """One decoder level: deconv + skip concat + UNetConvBlock2D (+ optional 1x1 head)."""
    B, Hs, Ws, Cp = x_nhwc.shape
    _, H, W, Ce = enc_nhwc.shape
    Cu = lp["wd"].shape[1]
    Co = lp["w1"].shape[0]
    Cc = Ce + Cu
    assert H == 2 * Hs and W == 2 * Ws and lp["w1"].shape[1] == Cc
    groups = Co // 2  # TODO(synk): GroupNorm group count assumed to be out_channels // 2
    gsize = Co // groups

    # ConvTranspose2d weight (Cin, Cout, 2, 2) -> (2*dy+dx, Cin, Cout) bf16.
    wd = jnp.transpose(lp["wd"], (2, 3, 0, 1)).reshape(4, Cp, Cu).astype(jnp.bfloat16)
    bd = lp["bd"].reshape(1, Cu).astype(jnp.float32)

    def conv_w(w_oihw):  # (Co, Cin, 3, 3) -> (9*Cin, Co) bf16, K order = (dy, dx, cin)
        cin = w_oihw.shape[1]
        return jnp.transpose(w_oihw, (2, 3, 1, 0)).reshape(9 * cin, Co).astype(jnp.bfloat16)

    def row(v):
        return v.reshape(1, Co).astype(jnp.float32)

    gidx = jnp.arange(Co, dtype=jnp.int32) // gsize
    gmat = (gidx[:, None] == gidx[None, :]).astype(jnp.float32)

    weight_args = [wd, bd, gmat,
                   conv_w(lp["w1"]), row(lp["b1"]), row(lp["g1"]), row(lp["be1"]),
                   conv_w(lp["w2"]), row(lp["b2"]), row(lp["g2"]), row(lp["be2"])]

    out_ch = 0
    if head is not None:
        wo_oihw, bo = head
        out_ch = wo_oihw.shape[0]
        wo = jnp.transpose(wo_oihw.reshape(out_ch, Co), (1, 0)).astype(jnp.bfloat16)
        weight_args += [wo, bo.reshape(1, out_ch).astype(jnp.float32)]

    def const_spec(a):
        nd = a.ndim
        return pl.BlockSpec(a.shape, lambda i, _nd=nd: (0,) * _nd)

    in_specs = [pl.BlockSpec((1, Hs, Ws, Cp), lambda i: (i, 0, 0, 0)),
                pl.BlockSpec((1, H, W, Ce), lambda i: (i, 0, 0, 0))]
    in_specs += [const_spec(a) for a in weight_args]

    out_shapes = [jax.ShapeDtypeStruct((B, H, W, Co), jnp.float32)]
    out_specs = [pl.BlockSpec((1, H, W, Co), lambda i: (i, 0, 0, 0))]
    if head is not None:
        out_shapes.append(jax.ShapeDtypeStruct((B, H, W, out_ch), jnp.float32))
        out_specs.append(pl.BlockSpec((1, H, W, out_ch), lambda i: (i, 0, 0, 0)))

    kernel = functools.partial(
        _decoder_level_kernel, Hs=Hs, Ws=Ws, Cp=Cp, H=H, W=W, Ce=Ce, Cu=Cu, Co=Co,
        groups=groups, eps=eps, out_ch=out_ch)

    flops = 2 * B * (Hs * Ws * Cp * Cu * 4 + H * W * 9 * Cc * Co + H * W * 9 * Co * Co
                     + H * W * Co * out_ch)
    bytes_accessed = int(
        x_nhwc.size * x_nhwc.dtype.itemsize + enc_nhwc.size * enc_nhwc.dtype.itemsize
        + sum(int(a.size) * a.dtype.itemsize for a in weight_args)
        + B * H * W * (Co + out_ch) * 4)

    res = pl.pallas_call(
        kernel,
        out_shape=tuple(out_shapes) if head is not None else out_shapes[0],
        grid=(B,),
        in_specs=in_specs,
        out_specs=tuple(out_specs) if head is not None else out_specs[0],
        scratch_shapes=[pltpu.VMEM((H + 2, W + 4, Cc), jnp.bfloat16)],
        compiler_params=pltpu.CompilerParams(
            dimension_semantics=("parallel",),
            vmem_limit_bytes=_VMEM_LIMIT),
        cost_estimate=pl.CostEstimate(flops=int(flops), transcendentals=int(4 * B * Co),
                                      bytes_accessed=bytes_accessed),
    )(x_nhwc, enc_nhwc, *weight_args)

    if head is not None:
        return res[0], res[1]
    return res, None


# -------------------------------- Model glue ----------------------------------

def init_unet_decoder_params(key, out_channels, feature_maps, levels):
    params = {"levels": []}
    keys = jax.random.split(key, levels + 1)
    for i in range(levels):
        cin = 2 ** (levels - i) * feature_maps       # deconv in channels
        co = 2 ** (levels - i - 1) * feature_maps    # deconv/out channels
        ks = jax.random.split(keys[i], 10)
        sd = 1.0 / np.sqrt(4.0 * cin)
        s1 = 1.0 / np.sqrt(9.0 * (2 * co))
        s2 = 1.0 / np.sqrt(9.0 * co)
        params["levels"].append(dict(
            wd=jax.random.normal(ks[0], (cin, co, 2, 2), jnp.float32) * sd,
            bd=jax.random.normal(ks[1], (co,), jnp.float32) * 0.1,
            w1=jax.random.normal(ks[2], (co, 2 * co, 3, 3), jnp.float32) * s1,
            b1=jax.random.normal(ks[3], (co,), jnp.float32) * 0.1,
            g1=1.0 + 0.1 * jax.random.normal(ks[4], (co,), jnp.float32),
            be1=0.1 * jax.random.normal(ks[5], (co,), jnp.float32),
            w2=jax.random.normal(ks[6], (co, co, 3, 3), jnp.float32) * s2,
            b2=jax.random.normal(ks[7], (co,), jnp.float32) * 0.1,
            g2=1.0 + 0.1 * jax.random.normal(ks[8], (co,), jnp.float32),
            be2=0.1 * jax.random.normal(ks[9], (co,), jnp.float32),
        ))
    ko1, ko2 = jax.random.split(keys[levels])
    params["out_w"] = jax.random.normal(ko1, (out_channels, feature_maps, 1, 1),
                                        jnp.float32) / np.sqrt(float(feature_maps))
    params["out_b"] = jax.random.normal(ko2, (out_channels,), jnp.float32) * 0.1
    return params


def unet_decoder_2d(inputs_nchw, encoder_outputs_nchw, params, levels):
    """Forward of UNetDecoder2D (skip_connections=True, group_norm=True), NCHW in/out."""
    enc_rev = list(encoder_outputs_nchw)[::-1]       # PyTorch reverses the list
    x = jnp.transpose(inputs_nchw, (0, 2, 3, 1))     # NCHW -> NHWC
    decoder_outputs = []
    head_out = None
    for i in range(levels):
        lp = params["levels"][i]
        enc = jnp.transpose(enc_rev[i], (0, 2, 3, 1))
        head = (params["out_w"], params["out_b"]) if i == levels - 1 else None
        x, h = _decoder_level(x, enc, lp, head=head)  # fused level kernel, f32 NHWC out
        decoder_outputs.append(jnp.transpose(x, (0, 3, 1, 2)))
        if h is not None:
            head_out = jnp.transpose(h, (0, 3, 1, 2))
    return decoder_outputs, head_out


# ----------------------------- Pure-JAX reference -----------------------------

def _ref_deconv2x2(x_nhwc, w_iohw, bias):
    xb = x_nhwc.astype(jnp.bfloat16)
    wb = w_iohw.astype(jnp.bfloat16)
    y = jnp.einsum("bhwi,ioyx->bhywxo", xb, wb, preferred_element_type=jnp.float32)
    B, Hs, _, Ws, _, Co = y.shape
    return y.reshape(B, 2 * Hs, 2 * Ws, Co) + bias


def _ref_conv3x3(x_nhwc, w_oihw, bias):
    xb = x_nhwc.astype(jnp.bfloat16)
    wb = jnp.transpose(w_oihw, (2, 3, 1, 0)).astype(jnp.bfloat16)
    y = jax.lax.conv_general_dilated(
        xb, wb, window_strides=(1, 1), padding="SAME",
        dimension_numbers=("NHWC", "HWIO", "NHWC"),
        preferred_element_type=jnp.float32)
    return y + bias


def _ref_gn_relu(y, gamma, beta, groups, eps=1e-5):
    B, H, W, C = y.shape
    gs = C // groups
    yg = y.reshape(B, H, W, groups, gs)
    mean = yg.mean(axis=(1, 2, 4), keepdims=True)
    var = jnp.mean((yg - mean) ** 2, axis=(1, 2, 4), keepdims=True)
    yn = ((yg - mean) * jax.lax.rsqrt(var + eps)).reshape(B, H, W, C)
    return jnp.maximum(yn * gamma + beta, 0.0)


def _ref_forward(inputs_nchw, encoder_outputs, params, levels, eps=1e-5):
    enc_rev = list(encoder_outputs)[::-1]
    x = jnp.transpose(inputs_nchw, (0, 2, 3, 1))
    dec = []
    for i in range(levels):
        lp = params["levels"][i]
        up = _ref_deconv2x2(x, lp["wd"], lp["bd"])
        enc = jnp.transpose(enc_rev[i], (0, 2, 3, 1))
        cat = jnp.concatenate([enc, up], axis=-1)
        g = lp["w1"].shape[0] // 2
        y = _ref_gn_relu(_ref_conv3x3(cat, lp["w1"], lp["b1"]), lp["g1"], lp["be1"], g, eps)
        y = _ref_gn_relu(_ref_conv3x3(y, lp["w2"], lp["b2"]), lp["g2"], lp["be2"], g, eps)
        x = y
        dec.append(jnp.transpose(x, (0, 3, 1, 2)))
    wo, bo = params["out_w"], params["out_b"]
    out_ch = wo.shape[0]
    y = jnp.einsum("bhwc,oc->bhwo", x.astype(jnp.bfloat16),
                   wo.reshape(out_ch, -1).astype(jnp.bfloat16),
                   preferred_element_type=jnp.float32) + bo
    return dec, jnp.transpose(y, (0, 3, 1, 2))


# ------------------------------------ Main -------------------------------------

if __name__ == "__main__":
    key = jax.random.PRNGKey(0)
    k_in, k_e0, k_e1, k_p = jax.random.split(key, 4)

    B, feature_maps, levels, out_channels = 2, 8, 2, 2
    H = W = 16

    inputs = jax.random.normal(
        k_in, (B, 2 ** levels * feature_maps, H // 4, W // 4), jnp.float32)
    encoder_outputs = [
        jax.random.normal(k_e0, (B, feature_maps, H, W), jnp.float32),
        jax.random.normal(k_e1, (B, 2 * feature_maps, H // 2, W // 2), jnp.float32),
    ]
    params = init_unet_decoder_params(k_p, out_channels, feature_maps, levels)

    dec_outs, out = unet_decoder_2d(inputs, encoder_outputs, params, levels)
    out = jax.block_until_ready(out)
    dec_outs = [jax.block_until_ready(d) for d in dec_outs]

    # Shape checks (mirror PyTorch NCHW outputs).
    assert dec_outs[0].shape == (B, 2 * feature_maps, H // 2, W // 2)
    assert dec_outs[1].shape == (B, feature_maps, H, W)
    assert out.shape == (B, out_channels, H, W)

    # Numerical check against a pure-JAX reference (same bf16-input / f32-accum numerics).
    r_dec, r_out = _ref_forward(inputs, encoder_outputs, params, levels)
    for got, ref in zip(dec_outs + [out], list(r_dec) + [r_out]):
        np.testing.assert_allclose(np.asarray(got), np.asarray(ref),
                                   atol=2e-2, rtol=2e-2)

    print("KERNEL_OK")
</pallas_src>

<mosaic_0001>
module attributes {stable_mosaic.version = 11 : i64} {
  func.func @_decoder_level_kernel(%arg0: i32, %arg1: memref<1x4x4x32xf32, #tpu.memory_space<vmem>>, %arg2: memref<1x8x8x16xf32, #tpu.memory_space<vmem>>, %arg3: memref<4x32x16xbf16, #tpu.memory_space<vmem>>, %arg4: memref<1x16xf32, #tpu.memory_space<vmem>>, %arg5: memref<16x16xf32, #tpu.memory_space<vmem>>, %arg6: memref<288x16xbf16, #tpu.memory_space<vmem>>, %arg7: memref<1x16xf32, #tpu.memory_space<vmem>>, %arg8: memref<1x16xf32, #tpu.memory_space<vmem>>, %arg9: memref<1x16xf32, #tpu.memory_space<vmem>>, %arg10: memref<144x16xbf16, #tpu.memory_space<vmem>>, %arg11: memref<1x16xf32, #tpu.memory_space<vmem>>, %arg12: memref<1x16xf32, #tpu.memory_space<vmem>>, %arg13: memref<1x16xf32, #tpu.memory_space<vmem>>, %arg14: memref<1x8x8x16xf32, #tpu.memory_space<vmem>>, %arg15: memref<10x12x32xbf16, #tpu.memory_space<vmem>>) attributes {dimension_semantics = [#tpu.dimension_semantics<parallel>], iteration_bounds = array<i64: 2>, scalar_prefetch = 0 : i64, scratch_operands = 1 : i64, tpu.core_type = #tpu.core_type<tc>, window_params = [{transform_indices = @transform_0, window_bounds = array<i64: 1, 4, 4, 32>}, {transform_indices = @transform_1, window_bounds = array<i64: 1, 8, 8, 16>}, {pipeline_mode = #tpu.pipeline_mode<synchronous>, transform_indices = @transform_2, window_bounds = array<i64: 4, 32, 16>}, {pipeline_mode = #tpu.pipeline_mode<synchronous>, transform_indices = @transform_3, window_bounds = array<i64: 1, 16>}, {pipeline_mode = #tpu.pipeline_mode<synchronous>, transform_indices = @transform_4, window_bounds = array<i64: 16, 16>}, {pipeline_mode = #tpu.pipeline_mode<synchronous>, transform_indices = @transform_5, window_bounds = array<i64: 288, 16>}, {pipeline_mode = #tpu.pipeline_mode<synchronous>, transform_indices = @transform_6, window_bounds = array<i64: 1, 16>}, {pipeline_mode = #tpu.pipeline_mode<synchronous>, transform_indices = @transform_7, window_bounds = array<i64: 1, 16>}, {pipeline_mode = #tpu.pipeline_mode<synchronous>, transform_indices = @transform_8, window_bounds = array<i64: 1, 16>}, {pipeline_mode = #tpu.pipeline_mode<synchronous>, transform_indices = @transform_9, window_bounds = array<i64: 144, 16>}, {pipeline_mode = #tpu.pipeline_mode<synchronous>, transform_indices = @transform_10, window_bounds = array<i64: 1, 16>}, {pipeline_mode = #tpu.pipeline_mode<synchronous>, transform_indices = @transform_11, window_bounds = array<i64: 1, 16>}, {pipeline_mode = #tpu.pipeline_mode<synchronous>, transform_indices = @transform_12, window_bounds = array<i64: 1, 16>}, {transform_indices = @transform_13, window_bounds = array<i64: 1, 8, 8, 16>}]} {
    %cst = arith.constant 0.000000e+00 : bf16
    %0 = vector.broadcast %cst : bf16 to vector<1x12x32xbf16>
    %c0 = arith.constant 0 : index
    %c0_0 = arith.constant 0 : index
    %c0_1 = arith.constant 0 : index
    %1 = vector.load %arg15[%c0, %c0_0, %c0_1] : memref<10x12x32xbf16, #tpu.memory_space<vmem>>, vector<1x12x32xbf16>
    tpu.vector_store %arg15[%c0, %c0_0, %c0_1], %0 {strides = array<i32>} : memref<10x12x32xbf16, #tpu.memory_space<vmem>>, vector<1x12x32xbf16>,
    %cst_2 = arith.constant 0.000000e+00 : bf16
    %2 = vector.broadcast %cst_2 : bf16 to vector<1x12x32xbf16>
    %c9 = arith.constant 9 : index
    %c0_3 = arith.constant 0 : index
    %c0_4 = arith.constant 0 : index
    %3 = vector.load %arg15[%c9, %c0_3, %c0_4] : memref<10x12x32xbf16, #tpu.memory_space<vmem>>, vector<1x12x32xbf16>
    tpu.vector_store %arg15[%c9, %c0_3, %c0_4], %2 {strides = array<i32>} : memref<10x12x32xbf16, #tpu.memory_space<vmem>>, vector<1x12x32xbf16>,
    %cst_5 = arith.constant 0.000000e+00 : bf16
    %4 = vector.broadcast %cst_5 : bf16 to vector<10x2x32xbf16>
    %c0_6 = arith.constant 0 : index
    %c0_7 = arith.constant 0 : index
    %c0_8 = arith.constant 0 : index
    %5 = vector.load %arg15[%c0_6, %c0_7, %c0_8] : memref<10x12x32xbf16, #tpu.memory_space<vmem>>, vector<10x2x32xbf16>
    tpu.vector_store %arg15[%c0_6, %c0_7, %c0_8], %4 {strides = array<i32>} : memref<10x12x32xbf16, #tpu.memory_space<vmem>>, vector<10x2x32xbf16>,
    %cst_9 = arith.constant 0.000000e+00 : bf16
    %6 = vector.broadcast %cst_9 : bf16 to vector<10x2x32xbf16>
    %c0_10 = arith.constant 0 : index
    %c10 = arith.constant 10 : index
    %c0_11 = arith.constant 0 : index
    %7 = vector.load %arg15[%c0_10, %c10, %c0_11] : memref<10x12x32xbf16, #tpu.memory_space<vmem>>, vector<10x2x32xbf16>
    tpu.vector_store %arg15[%c0_10, %c10, %c0_11], %6 {strides = array<i32>} : memref<10x12x32xbf16, #tpu.memory_space<vmem>>, vector<10x2x32xbf16>,
    %c0_12 = arith.constant 0 : index
    %c0_13 = arith.constant 0 : index
    %c0_14 = arith.constant 0 : index
    %c0_15 = arith.constant 0 : index
    %8 = vector.load %arg1[%c0_12, %c0_13, %c0_14, %c0_15] : memref<1x4x4x32xf32, #tpu.memory_space<vmem>>, vector<1x4x4x32xf32>
    %9 = vector.shape_cast %8 : vector<1x4x4x32xf32> to vector<4x4x32xf32>
    %10 = vector.shape_cast %9 : vector<4x4x32xf32> to vector<16x32xf32>
    %11 = arith.truncf %10 : vector<16x32xf32> to vector<16x32xbf16>
    %c0_16 = arith.constant 0 : index
    %c0_17 = arith.constant 0 : index
    %c0_18 = arith.constant 0 : index
    %12 = vector.load %arg3[%c0_16, %c0_17, %c0_18] : memref<4x32x16xbf16, #tpu.memory_space<vmem>>, vector<1x32x16xbf16>
    %13 = vector.shape_cast %12 : vector<1x32x16xbf16> to vector<32x16xbf16>
    %cst_19 = arith.constant dense<0.000000e+00> : vector<16x16xf32>
    %14 = tpu.matmul %11, %13, %cst_19 {dimension_numbers = #tpu.dot_dimension_numbers<[1], [0], [0], [1], [0, 0, 1, 1], [], []>} : vector<16x32xbf16>, vector<32x16xbf16>, vector<16x16xf32> -> vector<16x16xf32>
    %c0_20 = arith.constant 0 : index
    %c0_21 = arith.constant 0 : index
    %15 = vector.load %arg4[%c0_20, %c0_21] : memref<1x16xf32, #tpu.memory_space<vmem>>, vector<1x16xf32>
    %16 = vector.broadcast %15 : vector<1x16xf32> to vector<16x16xf32>
    %17 = arith.addf %14, %16 : vector<16x16xf32>
    %c1 = arith.constant 1 : index
    %c0_22 = arith.constant 0 : index
    %c0_23 = arith.constant 0 : index
    %18 = vector.load %arg3[%c1, %c0_22, %c0_23] : memref<4x32x16xbf16, #tpu.memory_space<vmem>>, vector<1x32x16xbf16>
    %19 = vector.shape_cast %18 : vector<1x32x16xbf16> to vector<32x16xbf16>
    %cst_24 = arith.constant dense<0.000000e+00> : vector<16x16xf32>
    %20 = tpu.matmul %11, %19, %cst_24 {dimension_numbers = #tpu.dot_dimension_numbers<[1], [0], [0], [1], [0, 0, 1, 1], [], []>} : vector<16x32xbf16>, vector<32x16xbf16>, vector<16x16xf32> -> vector<16x16xf32>
    %c0_25 = arith.constant 0 : index
    %c0_26 = arith.constant 0 : index
    %21 = vector.load %arg4[%c0_25, %c0_26] : memref<1x16xf32, #tpu.memory_space<vmem>>, vector<1x16xf32>
    %22 = vector.broadcast %21 : vector<1x16xf32> to vector<16x16xf32>
    %23 = arith.addf %20, %22 : vector<16x16xf32>
    %c2 = arith.constant 2 : index
    %c0_27 = arith.constant 0 : index
    %c0_28 = arith.constant 0 : index
    %24 = vector.load %arg3[%c2, %c0_27, %c0_28] : memref<4x32x16xbf16, #tpu.memory_space<vmem>>, vector<1x32x16xbf16>
    %25 = vector.shape_cast %24 : vector<1x32x16xbf16> to vector<32x16xbf16>
    %cst_29 = arith.constant dense<0.000000e+00> : vector<16x16xf32>
    %26 = tpu.matmul %11, %25, %cst_29 {dimension_numbers = #tpu.dot_dimension_numbers<[1], [0], [0], [1], [0, 0, 1, 1], [], []>} : vector<16x32xbf16>, vector<32x16xbf16>, vector<16x16xf32> -> vector<16x16xf32>
    %c0_30 = arith.constant 0 : index
    %c0_31 = arith.constant 0 : index
    %27 = vector.load %arg4[%c0_30, %c0_31] : memref<1x16xf32, #tpu.memory_space<vmem>>, vector<1x16xf32>
    %28 = vector.broadcast %27 : vector<1x16xf32> to vector<16x16xf32>
    %29 = arith.addf %26, %28 : vector<16x16xf32>
    %c3 = arith.constant 3 : index
    %c0_32 = arith.constant 0 : index
    %c0_33 = arith.constant 0 : index
    %30 = vector.load %arg3[%c3, %c0_32, %c0_33] : memref<4x32x16xbf16, #tpu.memory_space<vmem>>, vector<1x32x16xbf16>
    %31 = vector.shape_cast %30 : vector<1x32x16xbf16> to vector<32x16xbf16>
    %cst_34 = arith.constant dense<0.000000e+00> : vector<16x16xf32>
    %32 = tpu.matmul %11, %31, %cst_34 {dimension_numbers = #tpu.dot_dimension_numbers<[1], [0], [0], [1], [0, 0, 1, 1], [], []>} : vector<16x32xbf16>, vector<32x16xbf16>, vector<16x16xf32> -> vector<16x16xf32>
    %c0_35 = arith.constant 0 : index
    %c0_36 = arith.constant 0 : index
    %33 = vector.load %arg4[%c0_35, %c0_36] : memref<1x16xf32, #tpu.memory_space<vmem>>, vector<1x16xf32>
    %34 = vector.broadcast %33 : vector<1x16xf32> to vector<16x16xf32>
    %35 = arith.addf %32, %34 : vector<16x16xf32>
    %36 = vector.shape_cast %17 : vector<16x16xf32> to vector<16x1x1x16xf32>
    %37 = vector.shape_cast %23 : vector<16x16xf32> to vector<16x1x1x16xf32>
    %38 = tpu.concatenate %36, %37 in 1 : vector<16x1x1x16xf32>, vector<16x1x1x16xf32> -> vector<16x2x1x16xf32>
    %39 = vector.shape_cast %38 : vector<16x2x1x16xf32> to vector<32x16xf32>
    %40 = vector.shape_cast %39 : vector<32x16xf32> to vector<4x1x8x16xf32>
    %41 = vector.shape_cast %29 : vector<16x16xf32> to vector<16x1x1x16xf32>
    %42 = vector.shape_cast %35 : vector<16x16xf32> to vector<16x1x1x16xf32>
    %43 = tpu.concatenate %41, %42 in 1 : vector<16x1x1x16xf32>, vector<16x1x1x16xf32> -> vector<16x2x1x16xf32>
    %44 = vector.shape_cast %43 : vector<16x2x1x16xf32> to vector<32x16xf32>
    %45 = vector.shape_cast %44 : vector<32x16xf32> to vector<4x1x8x16xf32>
    %46 = tpu.concatenate %40, %45 in 1 : vector<4x1x8x16xf32>, vector<4x1x8x16xf32> -> vector<4x2x8x16xf32>
    %47 = vector.shape_cast %46 : vector<4x2x8x16xf32> to vector<8x8x16xf32>
    %c0_37 = arith.constant 0 : index
    %c0_38 = arith.constant 0 : index
    %c0_39 = arith.constant 0 : index
    %c0_40 = arith.constant 0 : index
    %48 = vector.load %arg2[%c0_37, %c0_38, %c0_39, %c0_40] : memref<1x8x8x16xf32, #tpu.memory_space<vmem>>, vector<1x8x8x16xf32>
    %49 = vector.shape_cast %48 : vector<1x8x8x16xf32> to vector<8x8x16xf32>
    %50 = arith.truncf %49 : vector<8x8x16xf32> to vector<8x8x16xbf16>
    %51 = arith.truncf %47 : vector<8x8x16xf32> to vector<8x8x16xbf16>
    %52 = tpu.concatenate %50, %51 in 2 : vector<8x8x16xbf16>, vector<8x8x16xbf16> -> vector<8x8x32xbf16>
    %c1_41 = arith.constant 1 : index
    %c2_42 = arith.constant 2 : index
    %c0_43 = arith.constant 0 : index
    %53 = vector.load %arg15[%c1_41, %c2_42, %c0_43] : memref<10x12x32xbf16, #tpu.memory_space<vmem>>, vector<8x8x32xbf16>
    tpu.vector_store %arg15[%c1_41, %c2_42, %c0_43], %52 {strides = array<i32>} : memref<10x12x32xbf16, #tpu.memory_space<vmem>>, vector<8x8x32xbf16>,
    %c0_44 = arith.constant 0 : index
    %c1_45 = arith.constant 1 : index
    %c0_46 = arith.constant 0 : index
    %54 = vector.load %arg15[%c0_44, %c1_45, %c0_46] : memref<10x12x32xbf16, #tpu.memory_space<vmem>>, vector<8x8x32xbf16>
    %55 = vector.shape_cast %54 : vector<8x8x32xbf16> to vector<64x32xbf16>
    %c0_47 = arith.constant 0 : index
    %c2_48 = arith.constant 2 : index
    %c0_49 = arith.constant 0 : index
    %56 = vector.load %arg15[%c0_47, %c2_48, %c0_49] : memref<10x12x32xbf16, #tpu.memory_space<vmem>>, vector<8x8x32xbf16>
    %57 = vector.shape_cast %56 : vector<8x8x32xbf16> to vector<64x32xbf16>
    %c0_50 = arith.constant 0 : index
    %c3_51 = arith.constant 3 : index
    %c0_52 = arith.constant 0 : index
    %58 = vector.load %arg15[%c0_50, %c3_51, %c0_52] : memref<10x12x32xbf16, #tpu.memory_space<vmem>>, vector<8x8x32xbf16>
    %59 = vector.shape_cast %58 : vector<8x8x32xbf16> to vector<64x32xbf16>
    %c1_53 = arith.constant 1 : index
    %c1_54 = arith.constant 1 : index
    %c0_55 = arith.constant 0 : index
    %60 = vector.load %arg15[%c1_53, %c1_54, %c0_55] : memref<10x12x32xbf16, #tpu.memory_space<vmem>>, vector<8x8x32xbf16>
    %61 = vector.shape_cast %60 : vector<8x8x32xbf16> to vector<64x32xbf16>
    %c1_56 = arith.constant 1 : index
    %c2_57 = arith.constant 2 : index
    %c0_58 = arith.constant 0 : index
    %62 = vector.load %arg15[%c1_56, %c2_57, %c0_58] : memref<10x12x32xbf16, #tpu.memory_space<vmem>>, vector<8x8x32xbf16>
    %63 = vector.shape_cast %62 : vector<8x8x32xbf16> to vector<64x32xbf16>
    %c1_59 = arith.constant 1 : index
    %c3_60 = arith.constant 3 : index
    %c0_61 = arith.constant 0 : index
    %64 = vector.load %arg15[%c1_59, %c3_60, %c0_61] : memref<10x12x32xbf16, #tpu.memory_space<vmem>>, vector<8x8x32xbf16>
    %65 = vector.shape_cast %64 : vector<8x8x32xbf16> to vector<64x32xbf16>
    %c2_62 = arith.constant 2 : index
    %c1_63 = arith.constant 1 : index
    %c0_64 = arith.constant 0 : index
    %66 = vector.load %arg15[%c2_62, %c1_63, %c0_64] : memref<10x12x32xbf16, #tpu.memory_space<vmem>>, vector<8x8x32xbf16>
    %67 = vector.shape_cast %66 : vector<8x8x32xbf16> to vector<64x32xbf16>
    %c2_65 = arith.constant 2 : index
    %c2_66 = arith.constant 2 : index
    %c0_67 = arith.constant 0 : index
    %68 = vector.load %arg15[%c2_65, %c2_66, %c0_67] : memref<10x12x32xbf16, #tpu.memory_space<vmem>>, vector<8x8x32xbf16>
    %69 = vector.shape_cast %68 : vector<8x8x32xbf16> to vector<64x32xbf16>
    %c2_68 = arith.constant 2 : index
    %c3_69 = arith.constant 3 : index
    %c0_70 = arith.constant 0 : index
    %70 = vector.load %arg15[%c2_68, %c3_69, %c0_70] : memref<10x12x32xbf16, #tpu.memory_space<vmem>>, vector<8x8x32xbf16>
    %71 = vector.shape_cast %70 : vector<8x8x32xbf16> to vector<64x32xbf16>
    %72 = tpu.concatenate %55, %57, %59, %61, %63, %65, %67, %69, %71 in 1 : vector<64x32xbf16>, vector<64x32xbf16>, vector<64x32xbf16>, vector<64x32xbf16>, vector<64x32xbf16>, vector<64x32xbf16>, vector<64x32xbf16>, vector<64x32xbf16>, vector<64x32xbf16> -> vector<64x288xbf16>
    %c0_71 = arith.constant 0 : index
    %c0_72 = arith.constant 0 : index
    %73 = vector.load %arg6[%c0_71, %c0_72] : memref<288x16xbf16, #tpu.memory_space<vmem>>, vector<288x16xbf16>
    %cst_73 = arith.constant dense<0.000000e+00> : vector<64x16xf32>
    %74 = tpu.matmul %72, %73, %cst_73 {dimension_numbers = #tpu.dot_dimension_numbers<[1], [0], [0], [1], [0, 0, 1, 1], [], []>} : vector<64x288xbf16>, vector<288x16xbf16>, vector<64x16xf32> -> vector<64x16xf32>
    %c0_74 = arith.constant 0 : index
    %c0_75 = arith.constant 0 : index
    %75 = vector.load %arg7[%c0_74, %c0_75] : memref<1x16xf32, #tpu.memory_space<vmem>>, vector<1x16xf32>
    %76 = vector.broadcast %75 : vector<1x16xf32> to vector<64x16xf32>
    %77 = arith.addf %74, %76 : vector<64x16xf32>
    %c0_76 = arith.constant 0 : index
    %c0_77 = arith.constant 0 : index
    %78 = vector.load %arg8[%c0_76, %c0_77] : memref<1x16xf32, #tpu.memory_space<vmem>>, vector<1x16xf32>
    %c0_78 = arith.constant 0 : index
    %c0_79 = arith.constant 0 : index
    %79 = vector.load %arg9[%c0_78, %c0_79] : memref<1x16xf32, #tpu.memory_space<vmem>>, vector<1x16xf32>
    %cst_80 = arith.constant dense<0.000000e+00> : vector<16xf32>
    %80 = vector.multi_reduction <add>, %77, %cst_80 [0] : vector<64x16xf32> to vector<16xf32>
    %81 = vector.shape_cast %80 : vector<16xf32> to vector<1x16xf32>
    %c0_81 = arith.constant 0 : index
    %c0_82 = arith.constant 0 : index
    %82 = vector.load %arg5[%c0_81, %c0_82] : memref<16x16xf32, #tpu.memory_space<vmem>>, vector<16x16xf32>
    %cst_83 = arith.constant dense<0.000000e+00> : vector<1x16xf32>
    %83 = tpu.matmul %81, %82, %cst_83 {dimension_numbers = #tpu.dot_dimension_numbers<[1], [0], [0], [1], [0, 0, 1, 1], [], []>} : vector<1x16xf32>, vector<16x16xf32>, vector<1x16xf32> -> vector<1x16xf32>
    %cst_84 = arith.constant 7.812500e-03 : f32
    %84 = vector.broadcast %cst_84 : f32 to vector<1x16xf32>
    %85 = arith.mulf %83, %84 : vector<1x16xf32>
    %86 = vector.broadcast %85 : vector<1x16xf32> to vector<64x16xf32>
    %87 = arith.subf %77, %86 : vector<64x16xf32>
    %88 = arith.mulf %87, %87 : vector<64x16xf32>
    %cst_85 = arith.constant dense<0.000000e+00> : vector<16xf32>
    %89 = vector.multi_reduction <add>, %88, %cst_85 [0] : vector<64x16xf32> to vector<16xf32>
    %90 = vector.shape_cast %89 : vector<16xf32> to vector<1x16xf32>
    %c0_86 = arith.constant 0 : index
    %c0_87 = arith.constant 0 : index
    %91 = vector.load %arg5[%c0_86, %c0_87] : memref<16x16xf32, #tpu.memory_space<vmem>>, vector<16x16xf32>
    %cst_88 = arith.constant dense<0.000000e+00> : vector<1x16xf32>
    %92 = tpu.matmul %90, %91, %cst_88 {dimension_numbers = #tpu.dot_dimension_numbers<[1], [0], [0], [1], [0, 0, 1, 1], [], []>} : vector<1x16xf32>, vector<16x16xf32>, vector<1x16xf32> -> vector<1x16xf32>
    %cst_89 = arith.constant 7.812500e-03 : f32
    %93 = vector.broadcast %cst_89 : f32 to vector<1x16xf32>
    %94 = arith.mulf %92, %93 : vector<1x16xf32>
    %cst_90 = arith.constant 9.99999974E-6 : f32
    %95 = vector.broadcast %cst_90 : f32 to vector<1x16xf32>
    %96 = arith.addf %94, %95 : vector<1x16xf32>
    %97 = math.rsqrt %96 : vector<1x16xf32>
    %98 = vector.broadcast %97 : vector<1x16xf32> to vector<64x16xf32>
    %99 = arith.mulf %87, %98 : vector<64x16xf32>
    %100 = vector.broadcast %78 : vector<1x16xf32> to vector<64x16xf32>
    %101 = arith.mulf %99, %100 : vector<64x16xf32>
    %102 = vector.broadcast %79 : vector<1x16xf32> to vector<64x16xf32>
    %103 = arith.addf %101, %102 : vector<64x16xf32>
    %cst_91 = arith.constant 0.000000e+00 : f32
    %104 = vector.broadcast %cst_91 : f32 to vector<64x16xf32>
    %105 = arith.maximumf %103, %104 : vector<64x16xf32>
    %106 = vector.shape_cast %105 : vector<64x16xf32> to vector<8x8x16xf32>
    %107 = arith.truncf %106 : vector<8x8x16xf32> to vector<8x8x16xbf16>
    %c1_92 = arith.constant 1 : index
    %c2_93 = arith.constant 2 : index
    %c0_94 = arith.constant 0 : index
    %108 = vector.load %arg15[%c1_92, %c2_93, %c0_94] : memref<10x12x32xbf16, #tpu.memory_space<vmem>>, vector<8x8x16xbf16>
    tpu.vector_store %arg15[%c1_92, %c2_93, %c0_94], %107 {strides = array<i32>} : memref<10x12x32xbf16, #tpu.memory_space<vmem>>, vector<8x8x16xbf16>,
    %c0_95 = arith.constant 0 : index
    %c1_96 = arith.constant 1 : index
    %c0_97 = arith.constant 0 : index
    %109 = vector.load %arg15[%c0_95, %c1_96, %c0_97] : memref<10x12x32xbf16, #tpu.memory_space<vmem>>, vector<8x8x16xbf16>
    %110 = vector.shape_cast %109 : vector<8x8x16xbf16> to vector<64x16xbf16>
    %c0_98 = arith.constant 0 : index
    %c2_99 = arith.constant 2 : index
    %c0_100 = arith.constant 0 : index
    %111 = vector.load %arg15[%c0_98, %c2_99, %c0_100] : memref<10x12x32xbf16, #tpu.memory_space<vmem>>, vector<8x8x16xbf16>
    %112 = vector.shape_cast %111 : vector<8x8x16xbf16> to vector<64x16xbf16>
    %c0_101 = arith.constant 0 : index
    %c3_102 = arith.constant 3 : index
    %c0_103 = arith.constant 0 : index
    %113 = vector.load %arg15[%c0_101, %c3_102, %c0_103] : memref<10x12x32xbf16, #tpu.memory_space<vmem>>, vector<8x8x16xbf16>
    %114 = vector.shape_cast %113 : vector<8x8x16xbf16> to vector<64x16xbf16>
    %c1_104 = arith.constant 1 : index
    %c1_105 = arith.constant 1 : index
    %c0_106 = arith.constant 0 : index
    %115 = vector.load %arg15[%c1_104, %c1_105, %c0_106] : memref<10x12x32xbf16, #tpu.memory_space<vmem>>, vector<8x8x16xbf16>
    %116 = vector.shape_cast %115 : vector<8x8x16xbf16> to vector<64x16xbf16>
    %c1_107 = arith.constant 1 : index
    %c2_108 = arith.constant 2 : index
    %c0_109 = arith.constant 0 : index
    %117 = vector.load %arg15[%c1_107, %c2_108, %c0_109] : memref<10x12x32xbf16, #tpu.memory_space<vmem>>, vector<8x8x16xbf16>
    %118 = vector.shape_cast %117 : vector<8x8x16xbf16> to vector<64x16xbf16>
    %c1_110 = arith.constant 1 : index
    %c3_111 = arith.constant 3 : index
    %c0_112 = arith.constant 0 : index
    %119 = vector.load %arg15[%c1_110, %c3_111, %c0_112] : memref<10x12x32xbf16, #tpu.memory_space<vmem>>, vector<8x8x16xbf16>
    %120 = vector.shape_cast %119 : vector<8x8x16xbf16> to vector<64x16xbf16>
    %c2_113 = arith.constant 2 : index
    %c1_114 = arith.constant 1 : index
    %c0_115 = arith.constant 0 : index
    %121 = vector.load %arg15[%c2_113, %c1_114, %c0_115] : memref<10x12x32xbf16, #tpu.memory_space<vmem>>, vector<8x8x16xbf16>
    %122 = vector.shape_cast %121 : vector<8x8x16xbf16> to vector<64x16xbf16>
    %c2_116 = arith.constant 2 : index
    %c2_117 = arith.constant 2 : index
    %c0_118 = arith.constant 0 : index
    %123 = vector.load %arg15[%c2_116, %c2_117, %c0_118] : memref<10x12x32xbf16, #tpu.memory_space<vmem>>, vector<8x8x16xbf16>
    %124 = vector.shape_cast %123 : vector<8x8x16xbf16> to vector<64x16xbf16>
    %c2_119 = arith.constant 2 : index
    %c3_120 = arith.constant 3 : index
    %c0_121 = arith.constant 0 : index
    %125 = vector.load %arg15[%c2_119, %c3_120, %c0_121] : memref<10x12x32xbf16, #tpu.memory_space<vmem>>, vector<8x8x16xbf16>
    %126 = vector.shape_cast %125 : vector<8x8x16xbf16> to vector<64x16xbf16>
    %127 = tpu.concatenate %110, %112, %114, %116, %118, %120, %122, %124, %126 in 1 : vector<64x16xbf16>, vector<64x16xbf16>, vector<64x16xbf16>, vector<64x16xbf16>, vector<64x16xbf16>, vector<64x16xbf16>, vector<64x16xbf16>, vector<64x16xbf16>, vector<64x16xbf16> -> vector<64x144xbf16>
    %c0_122 = arith.constant 0 : index
    %c0_123 = arith.constant 0 : index
    %128 = vector.load %arg10[%c0_122, %c0_123] : memref<144x16xbf16, #tpu.memory_space<vmem>>, vector<144x16xbf16>
    %cst_124 = arith.constant dense<0.000000e+00> : vector<64x16xf32>
    %129 = tpu.matmul %127, %128, %cst_124 {dimension_numbers = #tpu.dot_dimension_numbers<[1], [0], [0], [1], [0, 0, 1, 1], [], []>} : vector<64x144xbf16>, vector<144x16xbf16>, vector<64x16xf32> -> vector<64x16xf32>
    %c0_125 = arith.constant 0 : index
    %c0_126 = arith.constant 0 : index
    %130 = vector.load %arg11[%c0_125, %c0_126] : memref<1x16xf32, #tpu.memory_space<vmem>>, vector<1x16xf32>
    %131 = vector.broadcast %130 : vector<1x16xf32> to vector<64x16xf32>
    %132 = arith.addf %129, %131 : vector<64x16xf32>
    %c0_127 = arith.constant 0 : index
    %c0_128 = arith.constant 0 : index
    %133 = vector.load %arg12[%c0_127, %c0_128] : memref<1x16xf32, #tpu.memory_space<vmem>>, vector<1x16xf32>
    %c0_129 = arith.constant 0 : index
    %c0_130 = arith.constant 0 : index
    %134 = vector.load %arg13[%c0_129, %c0_130] : memref<1x16xf32, #tpu.memory_space<vmem>>, vector<1x16xf32>
    %cst_131 = arith.constant dense<0.000000e+00> : vector<16xf32>
    %135 = vector.multi_reduction <add>, %132, %cst_131 [0] : vector<64x16xf32> to vector<16xf32>
    %136 = vector.shape_cast %135 : vector<16xf32> to vector<1x16xf32>
    %c0_132 = arith.constant 0 : index
    %c0_133 = arith.constant 0 : index
    %137 = vector.load %arg5[%c0_132, %c0_133] : memref<16x16xf32, #tpu.memory_space<vmem>>, vector<16x16xf32>
    %cst_134 = arith.constant dense<0.000000e+00> : vector<1x16xf32>
    %138 = tpu.matmul %136, %137, %cst_134 {dimension_numbers = #tpu.dot_dimension_numbers<[1], [0], [0], [1], [0, 0, 1, 1], [], []>} : vector<1x16xf32>, vector<16x16xf32>, vector<1x16xf32> -> vector<1x16xf32>
    %cst_135 = arith.constant 7.812500e-03 : f32
    %139 = vector.broadcast %cst_135 : f32 to vector<1x16xf32>
    %140 = arith.mulf %138, %139 : vector<1x16xf32>
    %141 = vector.broadcast %140 : vector<1x16xf32> to vector<64x16xf32>
    %142 = arith.subf %132, %141 : vector<64x16xf32>
    %143 = arith.mulf %142, %142 : vector<64x16xf32>
    %cst_136 = arith.constant dense<0.000000e+00> : vector<16xf32>
    %144 = vector.multi_reduction <add>, %143, %cst_136 [0] : vector<64x16xf32> to vector<16xf32>
    %145 = vector.shape_cast %144 : vector<16xf32> to vector<1x16xf32>
    %c0_137 = arith.constant 0 : index
    %c0_138 = arith.constant 0 : index
    %146 = vector.load %arg5[%c0_137, %c0_138] : memref<16x16xf32, #tpu.memory_space<vmem>>, vector<16x16xf32>
    %cst_139 = arith.constant dense<0.000000e+00> : vector<1x16xf32>
    %147 = tpu.matmul %145, %146, %cst_139 {dimension_numbers = #tpu.dot_dimension_numbers<[1], [0], [0], [1], [0, 0, 1, 1], [], []>} : vector<1x16xf32>, vector<16x16xf32>, vector<1x16xf32> -> vector<1x16xf32>
    %cst_140 = arith.constant 7.812500e-03 : f32
    %148 = vector.broadcast %cst_140 : f32 to vector<1x16xf32>
    %149 = arith.mulf %147, %148 : vector<1x16xf32>
    %cst_141 = arith.constant 9.99999974E-6 : f32
    %150 = vector.broadcast %cst_141 : f32 to vector<1x16xf32>
    %151 = arith.addf %149, %150 : vector<1x16xf32>
    %152 = math.rsqrt %151 : vector<1x16xf32>
    %153 = vector.broadcast %152 : vector<1x16xf32> to vector<64x16xf32>
    %154 = arith.mulf %142, %153 : vector<64x16xf32>
    %155 = vector.broadcast %133 : vector<1x16xf32> to vector<64x16xf32>
    %156 = arith.mulf %154, %155 : vector<64x16xf32>
    %157 = vector.broadcast %134 : vector<1x16xf32> to vector<64x16xf32>
    %158 = arith.addf %156, %157 : vector<64x16xf32>
    %cst_142 = arith.constant 0.000000e+00 : f32
    %159 = vector.broadcast %cst_142 : f32 to vector<64x16xf32>
    %160 = arith.maximumf %158, %159 : vector<64x16xf32>
    %161 = vector.shape_cast %160 : vector<64x16xf32> to vector<8x8x16xf32>
    %c0_143 = arith.constant 0 : index
    %c0_144 = arith.constant 0 : index
    %c0_145 = arith.constant 0 : index
    %c0_146 = arith.constant 0 : index
    %162 = vector.load %arg14[%c0_143, %c0_144, %c0_145, %c0_146] : memref<1x8x8x16xf32, #tpu.memory_space<vmem>>, vector<1x8x8x16xf32>
    %163 = vector.shape_cast %162 : vector<1x8x8x16xf32> to vector<8x8x16xf32>
    %164 = vector.shape_cast %161 : vector<8x8x16xf32> to vector<1x8x8x16xf32>
    tpu.vector_store %arg14[%c0_143, %c0_144, %c0_145, %c0_146], %164 {strides = array<i32>} : memref<1x8x8x16xf32, #tpu.memory_space<vmem>>, vector<1x8x8x16xf32>,
    return
  }
  func.func @transform_0(%arg0: i32) -> (i32, i32, i32, i32) {
    %c0_i32 = arith.constant 0 : i32
    %c0_i32_0 = arith.constant 0 : i32
    %c0_i32_1 = arith.constant 0 : i32
    %c0_i32_2 = arith.constant 0 : i32
    return %arg0, %c0_i32, %c0_i32_0, %c0_i32_1 : i32, i32, i32, i32
  }
  func.func @transform_1(%arg0: i32) -> (i32, i32, i32, i32) {
    %c0_i32 = arith.constant 0 : i32
    %c0_i32_0 = arith.constant 0 : i32
    %c0_i32_1 = arith.constant 0 : i32
    %c0_i32_2 = arith.constant 0 : i32
    return %arg0, %c0_i32, %c0_i32_0, %c0_i32_1 : i32, i32, i32, i32
  }
  func.func @transform_2(%arg0: i32) -> (i32, i32, i32) {
    %c0_i32 = arith.constant 0 : i32
    %c0_i32_0 = arith.constant 0 : i32
    %c0_i32_1 = arith.constant 0 : i32
    %c0_i32_2 = arith.constant 0 : i32
    return %c0_i32, %c0_i32_0, %c0_i32_1 : i32, i32, i32
  }
  func.func @transform_3(%arg0: i32) -> (i32, i32) {
    %c0_i32 = arith.constant 0 : i32
    %c0_i32_0 = arith.constant 0 : i32
    %c0_i32_1 = arith.constant 0 : i32
    return %c0_i32, %c0_i32_0 : i32, i32
  }
  func.func @transform_4(%arg0: i32) -> (i32, i32) {
    %c0_i32 = arith.constant 0 : i32
    %c0_i32_0 = arith.constant 0 : i32
    %c0_i32_1 = arith.constant 0 : i32
    return %c0_i32, %c0_i32_0 : i32, i32
  }
  func.func @transform_5(%arg0: i32) -> (i32, i32) {
    %c0_i32 = arith.constant 0 : i32
    %c0_i32_0 = arith.constant 0 : i32
    %c0_i32_1 = arith.constant 0 : i32
    return %c0_i32, %c0_i32_0 : i32, i32
  }
  func.func @transform_6(%arg0: i32) -> (i32, i32) {
    %c0_i32 = arith.constant 0 : i32
    %c0_i32_0 = arith.constant 0 : i32
    %c0_i32_1 = arith.constant 0 : i32
    return %c0_i32, %c0_i32_0 : i32, i32
  }
  func.func @transform_7(%arg0: i32) -> (i32, i32) {
    %c0_i32 = arith.constant 0 : i32
    %c0_i32_0 = arith.constant 0 : i32
    %c0_i32_1 = arith.constant 0 : i32
    return %c0_i32, %c0_i32_0 : i32, i32
  }
  func.func @transform_8(%arg0: i32) -> (i32, i32) {
    %c0_i32 = arith.constant 0 : i32
    %c0_i32_0 = arith.constant 0 : i32
    %c0_i32_1 = arith.constant 0 : i32
    return %c0_i32, %c0_i32_0 : i32, i32
  }
  func.func @transform_9(%arg0: i32) -> (i32, i32) {
    %c0_i32 = arith.constant 0 : i32
    %c0_i32_0 = arith.constant 0 : i32
    %c0_i32_1 = arith.constant 0 : i32
    return %c0_i32, %c0_i32_0 : i32, i32
  }
  func.func @transform_10(%arg0: i32) -> (i32, i32) {
    %c0_i32 = arith.constant 0 : i32
    %c0_i32_0 = arith.constant 0 : i32
    %c0_i32_1 = arith.constant 0 : i32
    return %c0_i32, %c0_i32_0 : i32, i32
  }
  func.func @transform_11(%arg0: i32) -> (i32, i32) {
    %c0_i32 = arith.constant 0 : i32
    %c0_i32_0 = arith.constant 0 : i32
    %c0_i32_1 = arith.constant 0 : i32
    return %c0_i32, %c0_i32_0 : i32, i32
  }
  func.func @transform_12(%arg0: i32) -> (i32, i32) {
    %c0_i32 = arith.constant 0 : i32
    %c0_i32_0 = arith.constant 0 : i32
    %c0_i32_1 = arith.constant 0 : i32
    return %c0_i32, %c0_i32_0 : i32, i32
  }
  func.func @transform_13(%arg0: i32) -> (i32, i32, i32, i32) {
    %c0_i32 = arith.constant 0 : i32
    %c0_i32_0 = arith.constant 0 : i32
    %c0_i32_1 = arith.constant 0 : i32
    %c0_i32_2 = arith.constant 0 : i32
    return %arg0, %c0_i32, %c0_i32_0, %c0_i32_1 : i32, i32, i32, i32
  }
}

</mosaic_0001>

<llo_original>
// kernel: tpu_custom_call.1
$region0: #{tpu_custom_call.1}
  #allocation0 [shape = 'u32[]', space=smem, size = 0x4, offset = 0x4, fixed_abs, tag = 'smem constant byte address 0x4 - core index']
  #allocation1 [shape = 'u32[144,128]{1,0:T(1,128)}', space=vmem, size = 0x12000, scoped, tag = 'internal scratch']
  #allocation2 [shape = 'bf16[10,12,32]{2,1,0:T(8,128)(2,1)}', space=vmem, size = 0xa000, scoped, tag = 'scratch operand']
  %s0 = inlined_call_operand.vmem [shape: f32[2,4,4,32], index: 0, kind: input, shape index: {}]
  %s1 = inlined_call_operand.vmem [shape: f32[2,8,8,16], index: 1, kind: input, shape index: {}]
  %s2 = inlined_call_operand.vmem [shape: bf16[4,32,16], index: 2, kind: input, shape index: {}]
  %s3 = inlined_call_operand.vmem [shape: f32[1,16], index: 3, kind: input, shape index: {}]
  %s4 = inlined_call_operand.vmem [shape: f32[16,16], index: 4, kind: input, shape index: {}]
  %s5 = inlined_call_operand.vmem [shape: bf16[288,16], index: 5, kind: input, shape index: {}]
  %s6 = inlined_call_operand.vmem [shape: f32[1,16], index: 6, kind: input, shape index: {}]
  %s7 = inlined_call_operand.vmem [shape: f32[1,16], index: 7, kind: input, shape index: {}]
  %s8 = inlined_call_operand.vmem [shape: f32[1,16], index: 8, kind: input, shape index: {}]
  %s9 = inlined_call_operand.vmem [shape: bf16[144,16], index: 9, kind: input, shape index: {}]
  %s10 = inlined_call_operand.vmem [shape: f32[1,16], index: 10, kind: input, shape index: {}]
  %s11 = inlined_call_operand.vmem [shape: f32[1,16], index: 11, kind: input, shape index: {}]
  %s12 = inlined_call_operand.vmem [shape: f32[1,16], index: 12, kind: input, shape index: {}]
  %s13 = inlined_call_operand.hbm [shape: f32[2,8,8,16], index: 13, kind: output, shape index: {}]
  %s14 = sld [smem:[#allocation0]]
  $region85: #{tpu_custom_call.1} parent=0
    _
  %s16 = ssub.s32 1, %s14
  %s17 = scalar_select 0, %s16, %s14
  $region1: #{tpu_custom_call.1} parent=0
    #allocation3 [shape = 'u8[65536]{0}', space=vmem, size = 0x10000, scoped, tag = 'output window, operand 0']
    #allocation4 [shape = 's32[2]{0}', space=sflag, size = 0x8, scoped, tag = 'scoped memory for tpu_custom_call.1']
    %18 = vsyncpa [#allocation4], 0
    %s19 = scalar_lea.sflag [#allocation4], 1
    %20 = vsyncpa %s19, 0
    loop: start=0, step=1, limit=4
    $region2: #{tpu_custom_call.1} parent=1 // loop_pre_header
      _
    $region3: #{tpu_custom_call.1} parent=1 // loop_header
      %s22 = sphi 0, %s26
      %p23 = scmp.ge.s32.totalorder %s22, 4
      %s32 = sphi 0, %s34
      %s35 = sphi 0, %s32
      %s36 = sphi 0, %s35
      %s52 = sphi 0, %s36
      %s58 = sphi 0, %s60
      %s61 = sphi 0, %s58
      %s62 = sphi 0, %s61
      %s78 = sphi 0, %s62
      %s82 = sphi 0, %s82
      %s84 = sphi 0, %s82
      %s85 = sphi 0, %s84
      %s99 = sphi 0, %s85
      %s103 = sphi 0, %s103
      %s105 = sphi 0, %s103
      %s106 = sphi 0, %s105
      %s120 = sphi 0, %s106
      %s124 = sphi 0, %s124
      %s126 = sphi 0, %s124
      %s127 = sphi 0, %s126
      %s141 = sphi 0, %s127
      %s145 = sphi 0, %s145
      %s147 = sphi 0, %s145
      %s148 = sphi 0, %s147
      %s162 = sphi 0, %s148
      %s166 = sphi 0, %s166
      %s168 = sphi 0, %s166
      %s169 = sphi 0, %s168
      %s183 = sphi 0, %s169
      %s187 = sphi 0, %s187
      %s189 = sphi 0, %s187
      %s190 = sphi 0, %s189
      %s204 = sphi 0, %s190
      %s208 = sphi 0, %s208
      %s210 = sphi 0, %s208
      %s211 = sphi 0, %s210
      %s225 = sphi 0, %s211
      %s229 = sphi 0, %s229
      %s231 = sphi 0, %s229
      %s232 = sphi 0, %s231
      %s246 = sphi 0, %s232
      %s250 = sphi 0, %s250
      %s252 = sphi 0, %s250
      %s253 = sphi 0, %s252
      %s267 = sphi 0, %s253
      %s271 = sphi 0, %s271
      %s273 = sphi 0, %s271
      %s274 = sphi 0, %s273
      %s288 = sphi 0, %s274
      %s292 = sphi 0, %s292
      %s294 = sphi 0, %s292
      %s295 = sphi 0, %s294
      %s309 = sphi 0, %s295
      %s315 = sphi 0, %s317
      %s318 = sphi 0, %s315
      %s319 = sphi 0, %s318
      %s335 = sphi 0, %s319
    $region4: #{tpu_custom_call.1} parent=1 // loop_header_branch
      %25 = sbr.rel (%p23) target = $region8
    $region5: #{tpu_custom_call.1} parent=1 // loop_body
      %s27 = ssub.s32 %s22, 1
      %s28 = ssub.s32 %s22, 2
      %s29 = sadd.s32 %s22, 1
      %s30 = ssub.s32 %s22, %s29
      %p31 = scmp.eq.s32.totalorder %s30, 0
      %s33 = sadd.s32 %s32, 1
      %s34 = scalar_select %p31, %s32, %s33
      %p37 = pneg %p31
      %p38 = scmp.eq.s32.totalorder %s22, 1
      %p39 = por %p37, %p38
      %p40 = scmp.ne.s32.totalorder %s32, %s35
      %p41 = scmp.eq.s32.totalorder %s22, 0
      %p42 = por %p40, %p41
      %p43 = scmp.ne.s32.totalorder %s32, %s35
      %p44 = scmp.eq.s32.totalorder %s27, 1
      %p45 = por %p43, %p44
      %p46 = scmp.ne.s32.totalorder %s35, %s36
      %p47 = scmp.eq.s32.totalorder %s27, 0
      %p48 = por %p46, %p47
      %p49 = scmp.ne.s32.totalorder %s35, %s36
      %p50 = scmp.eq.s32.totalorder %s28, 1
      %p51 = por %p49, %p50
      %p53 = scmp.ne.s32.totalorder %s36, %s52
      %p54 = scmp.eq.s32.totalorder %s28, 0
      %p55 = por %p53, %p54
      %s56 = ssub.s32 %s22, %s29
      %p57 = scmp.eq.s32.totalorder %s56, 0
      %s59 = sadd.s32 %s58, 1
      %s60 = scalar_select %p57, %s58, %s59
      %p63 = pneg %p57
      %p64 = scmp.eq.s32.totalorder %s22, 1
      %p65 = por %p63, %p64
      %p66 = scmp.ne.s32.totalorder %s58, %s61
      %p67 = scmp.eq.s32.totalorder %s22, 0
      %p68 = por %p66, %p67
      %p69 = scmp.ne.s32.totalorder %s58, %s61
      %p70 = scmp.eq.s32.totalorder %s27, 1
      %p71 = por %p69, %p70
      %p72 = scmp.ne.s32.totalorder %s61, %s62
      %p73 = scmp.eq.s32.totalorder %s27, 0
      %p74 = por %p72, %p73
      %p75 = scmp.ne.s32.totalorder %s61, %s62
      %p76 = scmp.eq.s32.totalorder %s28, 1
      %p77 = por %p75, %p76
      %p79 = scmp.ne.s32.totalorder %s62, %s78
      %p80 = scmp.eq.s32.totalorder %s28, 0
      %p81 = por %p79, %p80
      %s83 = sadd.s32 %s82, 1
      %p86 = scmp.eq.s32.totalorder %s22, 1
      %p87 = scmp.ne.s32.totalorder %s82, %s84
      %p88 = scmp.eq.s32.totalorder %s22, 0
      %p89 = por %p87, %p88
      %p90 = scmp.ne.s32.totalorder %s82, %s84
      %p91 = scmp.eq.s32.totalorder %s27, 1
      %p92 = por %p90, %p91
      %p93 = scmp.ne.s32.totalorder %s84, %s85
      %p94 = scmp.eq.s32.totalorder %s27, 0
      %p95 = por %p93, %p94
      %p96 = scmp.ne.s32.totalorder %s84, %s85
      %p97 = scmp.eq.s32.totalorder %s28, 1
      %p98 = por %p96, %p97
      %p100 = scmp.ne.s32.totalorder %s85, %s99
      %p101 = scmp.eq.s32.totalorder %s28, 0
      %p102 = por %p100, %p101
      %s104 = sadd.s32 %s103, 1
      %p107 = scmp.eq.s32.totalorder %s22, 1
      %p108 = scmp.ne.s32.totalorder %s103, %s105
      %p109 = scmp.eq.s32.totalorder %s22, 0
      %p110 = por %p108, %p109
      %p111 = scmp.ne.s32.totalorder %s103, %s105
      %p112 = scmp.eq.s32.totalorder %s27, 1
      %p113 = por %p111, %p112
      %p114 = scmp.ne.s32.totalorder %s105, %s106
      %p115 = scmp.eq.s32.totalorder %s27, 0
      %p116 = por %p114, %p115
      %p117 = scmp.ne.s32.totalorder %s105, %s106
      %p118 = scmp.eq.s32.totalorder %s28, 1
      %p119 = por %p117, %p118
      %p121 = scmp.ne.s32.totalorder %s106, %s120
      %p122 = scmp.eq.s32.totalorder %s28, 0
      %p123 = por %p121, %p122
      %s125 = sadd.s32 %s124, 1
      %p128 = scmp.eq.s32.totalorder %s22, 1
      %p129 = scmp.ne.s32.totalorder %s124, %s126
      %p130 = scmp.eq.s32.totalorder %s22, 0
      %p131 = por %p129, %p130
      %p132 = scmp.ne.s32.totalorder %s124, %s126
      %p133 = scmp.eq.s32.totalorder %s27, 1
      %p134 = por %p132, %p133
      %p135 = scmp.ne.s32.totalorder %s126, %s127
      %p136 = scmp.eq.s32.totalorder %s27, 0
      %p137 = por %p135, %p136
      %p138 = scmp.ne.s32.totalorder %s126, %s127
      %p139 = scmp.eq.s32.totalorder %s28, 1
      %p140 = por %p138, %p139
      %p142 = scmp.ne.s32.totalorder %s127, %s141
      %p143 = scmp.eq.s32.totalorder %s28, 0
      %p144 = por %p142, %p143
      %s146 = sadd.s32 %s145, 1
      %p149 = scmp.eq.s32.totalorder %s22, 1
      %p150 = scmp.ne.s32.totalorder %s145, %s147
      %p151 = scmp.eq.s32.totalorder %s22, 0
      %p152 = por %p150, %p151
      %p153 = scmp.ne.s32.totalorder %s145, %s147
      %p154 = scmp.eq.s32.totalorder %s27, 1
      %p155 = por %p153, %p154
      %p156 = scmp.ne.s32.totalorder %s147, %s148
      %p157 = scmp.eq.s32.totalorder %s27, 0
      %p158 = por %p156, %p157
      %p159 = scmp.ne.s32.totalorder %s147, %s148
      %p160 = scmp.eq.s32.totalorder %s28, 1
      %p161 = por %p159, %p160
      %p163 = scmp.ne.s32.totalorder %s148, %s162
      %p164 = scmp.eq.s32.totalorder %s28, 0
      %p165 = por %p163, %p164
      %s167 = sadd.s32 %s166, 1
      %p170 = scmp.eq.s32.totalorder %s22, 1
      %p171 = scmp.ne.s32.totalorder %s166, %s168
      %p172 = scmp.eq.s32.totalorder %s22, 0
      %p173 = por %p171, %p172
      %p174 = scmp.ne.s32.totalorder %s166, %s168
      %p175 = scmp.eq.s32.totalorder %s27, 1
      %p176 = por %p174, %p175
      %p177 = scmp.ne.s32.totalorder %s168, %s169
      %p178 = scmp.eq.s32.totalorder %s27, 0
      %p179 = por %p177, %p178
      %p180 = scmp.ne.s32.totalorder %s168, %s169
      %p181 = scmp.eq.s32.totalorder %s28, 1
      %p182 = por %p180, %p181
      %p184 = scmp.ne.s32.totalorder %s169, %s183
      %p185 = scmp.eq.s32.totalorder %s28, 0
      %p186 = por %p184, %p185
      %s188 = sadd.s32 %s187, 1
      %p191 = scmp.eq.s32.totalorder %s22, 1
      %p192 = scmp.ne.s32.totalorder %s187, %s189
      %p193 = scmp.eq.s32.totalorder %s22, 0
      %p194 = por %p192, %p193
      %p195 = scmp.ne.s32.totalorder %s187, %s189
      %p196 = scmp.eq.s32.totalorder %s27, 1
      %p197 = por %p195, %p196
      %p198 = scmp.ne.s32.totalorder %s189, %s190
      %p199 = scmp.eq.s32.totalorder %s27, 0
      %p200 = por %p198, %p199
      %p201 = scmp.ne.s32.totalorder %s189, %s190
      %p202 = scmp.eq.s32.totalorder %s28, 1
      %p203 = por %p201, %p202
      %p205 = scmp.ne.s32.totalorder %s190, %s204
      %p206 = scmp.eq.s32.totalorder %s28, 0
      %p207 = por %p205, %p206
      %s209 = sadd.s32 %s208, 1
      %p212 = scmp.eq.s32.totalorder %s22, 1
      %p213 = scmp.ne.s32.totalorder %s208, %s210
      %p214 = scmp.eq.s32.totalorder %s22, 0
      %p215 = por %p213, %p214
      %p216 = scmp.ne.s32.totalorder %s208, %s210
      %p217 = scmp.eq.s32.totalorder %s27, 1
      %p218 = por %p216, %p217
      %p219 = scmp.ne.s32.totalorder %s210, %s211
      %p220 = scmp.eq.s32.totalorder %s27, 0
      %p221 = por %p219, %p220
      %p222 = scmp.ne.s32.totalorder %s210, %s211
      %p223 = scmp.eq.s32.totalorder %s28, 1
      %p224 = por %p222, %p223
      %p226 = scmp.ne.s32.totalorder %s211, %s225
      %p227 = scmp.eq.s32.totalorder %s28, 0
      %p228 = por %p226, %p227
      %s230 = sadd.s32 %s229, 1
      %p233 = scmp.eq.s32.totalorder %s22, 1
      %p234 = scmp.ne.s32.totalorder %s229, %s231
      %p235 = scmp.eq.s32.totalorder %s22, 0
      %p236 = por %p234, %p235
      %p237 = scmp.ne.s32.totalorder %s229, %s231
      %p238 = scmp.eq.s32.totalorder %s27, 1
      %p239 = por %p237, %p238
      %p240 = scmp.ne.s32.totalorder %s231, %s232
      %p241 = scmp.eq.s32.totalorder %s27, 0
      %p242 = por %p240, %p241
      %p243 = scmp.ne.s32.totalorder %s231, %s232
      %p244 = scmp.eq.s32.totalorder %s28, 1
      %p245 = por %p243, %p244
      %p247 = scmp.ne.s32.totalorder %s232, %s246
      %p248 = scmp.eq.s32.totalorder %s28, 0
      %p249 = por %p247, %p248
      %s251 = sadd.s32 %s250, 1
      %p254 = scmp.eq.s32.totalorder %s22, 1
      %p255 = scmp.ne.s32.totalorder %s250, %s252
      %p256 = scmp.eq.s32.totalorder %s22, 0
      %p257 = por %p255, %p256
      %p258 = scmp.ne.s32.totalorder %s250, %s252
      %p259 = scmp.eq.s32.totalorder %s27, 1
      %p260 = por %p258, %p259
      %p261 = scmp.ne.s32.totalorder %s252, %s253
      %p262 = scmp.eq.s32.totalorder %s27, 0
      %p263 = por %p261, %p262
      %p264 = scmp.ne.s32.totalorder %s252, %s253
      %p265 = scmp.eq.s32.totalorder %s28, 1
      %p266 = por %p264, %p265
      %p268 = scmp.ne.s32.totalorder %s253, %s267
      %p269 = scmp.eq.s32.totalorder %s28, 0
      %p270 = por %p268, %p269
      %s272 = sadd.s32 %s271, 1
      %p275 = scmp.eq.s32.totalorder %s22, 1
      %p276 = scmp.ne.s32.totalorder %s271, %s273
      %p277 = scmp.eq.s32.totalorder %s22, 0
      %p278 = por %p276, %p277
      %p279 = scmp.ne.s32.totalorder %s271, %s273
      %p280 = scmp.eq.s32.totalorder %s27, 1
      %p281 = por %p279, %p280
      %p282 = scmp.ne.s32.totalorder %s273, %s274
      %p283 = scmp.eq.s32.totalorder %s27, 0
      %p284 = por %p282, %p283
      %p285 = scmp.ne.s32.totalorder %s273, %s274
      %p286 = scmp.eq.s32.totalorder %s28, 1
      %p287 = por %p285, %p286
      %p289 = scmp.ne.s32.totalorder %s274, %s288
      %p290 = scmp.eq.s32.totalorder %s28, 0
      %p291 = por %p289, %p290
      %s293 = sadd.s32 %s292, 1
      %p296 = scmp.eq.s32.totalorder %s22, 1
      %p297 = scmp.ne.s32.totalorder %s292, %s294
      %p298 = scmp.eq.s32.totalorder %s22, 0
      %p299 = por %p297, %p298
      %p300 = scmp.ne.s32.totalorder %s292, %s294
      %p301 = scmp.eq.s32.totalorder %s27, 1
      %p302 = por %p300, %p301
      %p303 = scmp.ne.s32.totalorder %s294, %s295
      %p304 = scmp.eq.s32.totalorder %s27, 0
      %p305 = por %p303, %p304
      %p306 = scmp.ne.s32.totalorder %s294, %s295
      %p307 = scmp.eq.s32.totalorder %s28, 1
      %p308 = por %p306, %p307
      %p310 = scmp.ne.s32.totalorder %s295, %s309
      %p311 = scmp.eq.s32.totalorder %s28, 0
      %p312 = por %p310, %p311
      %s313 = ssub.s32 %s22, %s29
      %p314 = scmp.eq.s32.totalorder %s313, 0
      %s316 = sadd.s32 %s315, 1
      %s317 = scalar_select %p314, %s315, %s316
      %p320 = pneg %p314
      %p321 = scmp.eq.s32.totalorder %s22, 1
      %p322 = por %p320, %p321
      %p323 = scmp.ne.s32.totalorder %s315, %s318
      %p324 = scmp.eq.s32.totalorder %s22, 0
      %p325 = por %p323, %p324
      %p326 = scmp.ne.s32.totalorder %s315, %s318
      %p327 = scmp.eq.s32.totalorder %s27, 1
      %p328 = por %p326, %p327
      %p329 = scmp.ne.s32.totalorder %s318, %s319
      %p330 = scmp.eq.s32.totalorder %s27, 0
      %p331 = por %p329, %p330
      %p332 = scmp.ne.s32.totalorder %s318, %s319
      %p333 = scmp.eq.s32.totalorder %s28, 1
      %p334 = por %p332, %p333
      %p336 = scmp.ne.s32.totalorder %s319, %s335
      %p337 = scmp.eq.s32.totalorder %s28, 0
      %p338 = por %p336, %p337
      %p339 = scmp.le.s32.totalorder 1, %s22
      %p340 = scmp.lt.s32.totalorder %s22, 3
      %p341 = pnand %p339, %p340
      %p342 = pneg %p341
      // Predicated region
      $region9: #{tpu_custom_call.1} parent=5 // pred_check
        _
      $region10: #{tpu_custom_call.1} parent=5 // pred_check_branch
        %344 = sbr.rel (%p341) target = $region12
      $region11: #{tpu_custom_call.1} parent=5 // pred_region
        %s345 = ssub.s32 %s22, 1
        // Predicated region
        $region13: #{tpu_custom_call.1} parent=11 // pred_check
          %p346 = pneg %p95
        $region14: #{tpu_custom_call.1} parent=11 // pred_check_branch
          %348 = sbr.rel (%p346) target = $region16
        $region15: #{tpu_custom_call.1} parent=11 // pred_region
          _
        $region16: #{tpu_custom_call.1} parent=11 // pred_fallthru
          _
        // Predicated region
        $region17: #{tpu_custom_call.1} parent=11 // pred_check
          %p349 = pneg %p116
        $region18: #{tpu_custom_call.1} parent=11 // pred_check_branch
          %351 = sbr.rel (%p349) target = $region20
        $region19: #{tpu_custom_call.1} parent=11 // pred_region
          _
        $region20: #{tpu_custom_call.1} parent=11 // pred_fallthru
          _
        // Predicated region
        $region21: #{tpu_custom_call.1} parent=11 // pred_check
          %p352 = pneg %p137
        $region22: #{tpu_custom_call.1} parent=11 // pred_check_branch
          %354 = sbr.rel (%p352) target = $region24
        $region23: #{tpu_custom_call.1} parent=11 // pred_region
          _
        $region24: #{tpu_custom_call.1} parent=11 // pred_fallthru
          _
        // Predicated region
        $region25: #{tpu_custom_call.1} parent=11 // pred_check
          %p355 = pneg %p158
        $region26: #{tpu_custom_call.1} parent=11 // pred_check_branch
          %357 = sbr.rel (%p355) target = $region28
        $region27: #{tpu_custom_call.1} parent=11 // pred_region
          _
        $region28: #{tpu_custom_call.1} parent=11 // pred_fallthru
          _
        // Predicated region
        $region29: #{tpu_custom_call.1} parent=11 // pred_check
          %p358 = pneg %p179
        $region30: #{tpu_custom_call.1} parent=11 // pred_check_branch
          %360 = sbr.rel (%p358) target = $region32
        $region31: #{tpu_custom_call.1} parent=11 // pred_region
          _
        $region32: #{tpu_custom_call.1} parent=11 // pred_fallthru
          _
        // Predicated region
        $region33: #{tpu_custom_call.1} parent=11 // pred_check
          %p361 = pneg %p200
        $region34: #{tpu_custom_call.1} parent=11 // pred_check_branch
          %363 = sbr.rel (%p361) target = $region36
        $region35: #{tpu_custom_call.1} parent=11 // pred_region
          _
        $region36: #{tpu_custom_call.1} parent=11 // pred_fallthru
          _
        // Predicated region
        $region37: #{tpu_custom_call.1} parent=11 // pred_check
          %p364 = pneg %p221
        $region38: #{tpu_custom_call.1} parent=11 // pred_check_branch
          %366 = sbr.rel (%p364) target = $region40
        $region39: #{tpu_custom_call.1} parent=11 // pred_region
          _
        $region40: #{tpu_custom_call.1} parent=11 // pred_fallthru
          _
        // Predicated region
        $region41: #{tpu_custom_call.1} parent=11 // pred_check
          %p367 = pneg %p242
        $region42: #{tpu_custom_call.1} parent=11 // pred_check_branch
          %369 = sbr.rel (%p367) target = $region44
        $region43: #{tpu_custom_call.1} parent=11 // pred_region
          _
        $region44: #{tpu_custom_call.1} parent=11 // pred_fallthru
          _
        // Predicated region
        $region45: #{tpu_custom_call.1} parent=11 // pred_check
          %p370 = pneg %p263
        $region46: #{tpu_custom_call.1} parent=11 // pred_check_branch
          %372 = sbr.rel (%p370) target = $region48
        $region47: #{tpu_custom_call.1} parent=11 // pred_region
          _
        $region48: #{tpu_custom_call.1} parent=11 // pred_fallthru
          _
        // Predicated region
        $region49: #{tpu_custom_call.1} parent=11 // pred_check
          %p373 = pneg %p284
        $region50: #{tpu_custom_call.1} parent=11 // pred_check_branch
          %375 = sbr.rel (%p373) target = $region52
        $region51: #{tpu_custom_call.1} parent=11 // pred_region
          _
        $region52: #{tpu_custom_call.1} parent=11 // pred_fallthru
          _
        // Predicated region
        $region53: #{tpu_custom_call.1} parent=11 // pred_check
          %p376 = pneg %p305
        $region54: #{tpu_custom_call.1} parent=11 // pred_check_branch
          %378 = sbr.rel (%p376) target = $region56
        $region55: #{tpu_custom_call.1} parent=11 // pred_region
          _
        $region56: #{tpu_custom_call.1} parent=11 // pred_fallthru
          _
      $region12: #{tpu_custom_call.1} parent=5 // pred_fallthru
        _
      %p379 = scmp.lt.s32.totalorder %s22, 2
      // Predicated region
      $region57: #{tpu_custom_call.1} parent=5 // pred_check
        %p380 = pneg %p379
      $region58: #{tpu_custom_call.1} parent=5 // pred_check_branch
        %382 = sbr.rel (%p380) target = $region60
      $region59: #{tpu_custom_call.1} parent=5 // pred_region
        // Predicated region
        $region61: #{tpu_custom_call.1} parent=59 // pred_check
          %p383 = pneg %p42
        $region62: #{tpu_custom_call.1} parent=59 // pred_check_branch
          %385 = sbr.rel (%p383) target = $region64
        $region63: #{tpu_custom_call.1} parent=59 // pred_region
          %p386 = scmp.lt.s32.totalorder %s22, 1
          %s387 = scalar_select %p386, %s22, 1
          %s388 = smul.addr %s387, 4
          %s389 = smul.addr %s388, 4
          %s390 = scalar_lea.vmem %s0, %s389
        $region64: #{tpu_custom_call.1} parent=59 // pred_fallthru
          _
        // Predicated region
        $region65: #{tpu_custom_call.1} parent=59 // pred_check
          %p391 = pneg %p68
        $region66: #{tpu_custom_call.1} parent=59 // pred_check_branch
          %393 = sbr.rel (%p391) target = $region68
        $region67: #{tpu_custom_call.1} parent=59 // pred_region
          %p394 = scmp.lt.s32.totalorder %s22, 1
          %s395 = scalar_select %p394, %s22, 1
          %s396 = smul.addr %s395, 8
          %s397 = smul.addr %s396, 8
          %s398 = scalar_lea.vmem %s1, %s397
        $region68: #{tpu_custom_call.1} parent=59 // pred_fallthru
          _
      $region60: #{tpu_custom_call.1} parent=5 // pred_fallthru
        _
      %p399 = scmp.le.s32.totalorder 1, %s22
      %p400 = scmp.lt.s32.totalorder %s22, 3
      %p401 = pnand %p399, %p400
      %p402 = pneg %p401
      // Predicated region
      $region69: #{tpu_custom_call.1} parent=5 // pred_check
        _
      $region70: #{tpu_custom_call.1} parent=5 // pred_check_branch
        %404 = sbr.rel (%p401) target = $region72
      $region71: #{tpu_custom_call.1} parent=5 // pred_region
        %s405 = ssub.s32 %s22, 1
        %p406 = scmp.lt.s32.totalorder %s27, 1
        %s407 = scalar_select %p406, %s27, 1
        %s408 = smul.addr %s407, 4
        %s409 = smul.addr %s408, 4
        %s410 = scalar_lea.vmem %s0, %s409
        %p411 = pneg %p48
        %p412 = pneg %p45
        %p413 = scmp.lt.s32.totalorder %s27, 1
        %s414 = scalar_select %p413, %s27, 1
        %s415 = smul.addr %s414, 8
        %s416 = smul.addr %s415, 8
        %s417 = scalar_lea.vmem %s1, %s416
        %p418 = pneg %p74
        %p419 = pneg %p71
        %p420 = pneg %p95
        %p421 = pneg %p92
        %p422 = pneg %p116
        %p423 = pneg %p113
        %p424 = pneg %p137
        %p425 = pneg %p134
        %p426 = pneg %p158
        %p427 = pneg %p155
        %p428 = pneg %p179
        %p429 = pneg %p176
        %p430 = pneg %p200
        %p431 = pneg %p197
        %p432 = pneg %p221
        %p433 = pneg %p218
        %p434 = pneg %p242
        %p435 = pneg %p239
        %p436 = pneg %p263
        %p437 = pneg %p260
        %p438 = pneg %p284
        %p439 = pneg %p281
        %p440 = pneg %p305
        %p441 = pneg %p302
        %p442 = pneg %p331
        %p443 = pneg %p328
        %s444 = sand.u32 %s318, 1
        %s445 = scalar_lea.sflag [#allocation4], %s444
        %s446 = sand.u32 %s318, 1
        %s447 = smul.addr %s446, 64
        %s448 = scalar_lea.vmem [#allocation3], %s447
        %p449 = scmp.lt.s32.totalorder %s27, 1
        %s450 = scalar_select %p449, %s27, 1
        %s451 = smul.addr %s450, 4
        %s452 = smul.addr %s451, 4
        %s453 = scalar_lea.vmem %s0, %s452
        %p454 = scmp.lt.s32.totalorder %s27, 1
        %s455 = scalar_select %p454, %s27, 1
        %s456 = smul.addr %s455, 8
        %s457 = smul.addr %s456, 8
        %s458 = scalar_lea.vmem %s1, %s457
        %vm460 = vcmask 257024
        %461 = vst.msk [vmem:[#allocation2] sm:$0xf] %vm460, 0
        %vm462 = vcmask 254976
        %463 = vst.msk [vmem:[#allocation2 + $0x4] sm:$0x3] %vm462, 0
        %s464 = scalar_lea.vmem [#allocation2], 72
        %465 = vst.msk [vmem:[%s464] sm:$0xf] %vm460, 0
        %466 = vst.msk [vmem:[%s464 + $0x4] sm:$0x3] %vm462, 0
        %vm467 = vcmask 253952
        %468 = vst.msk [vmem:[#allocation2] sm:$0x1] %vm467, 0
        %469 = vst.msk [vmem:[#allocation2 + $0x8] sm:$0x1] %vm467, 0
        %470 = vst.msk [vmem:[#allocation2 + $0x10] sm:$0x1] %vm467, 0
        %471 = vst.msk [vmem:[#allocation2 + $0x18] sm:$0x1] %vm467, 0
        %472 = vst.msk [vmem:[#allocation2 + $0x20] sm:$0x1] %vm467, 0
        %473 = vst.msk [vmem:[#allocation2 + $0x28] sm:$0x1] %vm467, 0
        %474 = vst.msk [vmem:[#allocation2 + $0x30] sm:$0x1] %vm467, 0
        %475 = vst.msk [vmem:[#allocation2 + $0x38] sm:$0x1] %vm467, 0
        %476 = vst.msk [vmem:[#allocation2 + $0x40] sm:$0x1] %vm467, 0
        %477 = vst.msk [vmem:[#allocation2 + $0x48] sm:$0x1] %vm467, 0
        %vm478 = vcmask 254977
        %479 = vst.msk [vmem:[#allocation2 + $0x4] sm:$0x2] %vm478, 0
        %480 = vst.msk [vmem:[#allocation2 + $0xc] sm:$0x2] %vm478, 0
        %481 = vst.msk [vmem:[#allocation2 + $0x14] sm:$0x2] %vm478, 0
        %482 = vst.msk [vmem:[#allocation2 + $0x1c] sm:$0x2] %vm478, 0
        %483 = vst.msk [vmem:[#allocation2 + $0x24] sm:$0x2] %vm478, 0
        %484 = vst.msk [vmem:[#allocation2 + $0x2c] sm:$0x2] %vm478, 0
        %485 = vst.msk [vmem:[#allocation2 + $0x34] sm:$0x2] %vm478, 0
        %486 = vst.msk [vmem:[#allocation2 + $0x3c] sm:$0x2] %vm478, 0
        %487 = vst.msk [vmem:[#allocation2 + $0x44] sm:$0x2] %vm478, 0
        %488 = vst.msk [vmem:[#allocation2 + $0x4c] sm:$0x2] %vm478, 0
        %v489 = vld [vmem:[%s453] sm:$0xf]
        %v490 = vld [vmem:[%s453 + $0x4] sm:$0xf]
        %v491 = vld [vmem:[%s453 + $0x8] sm:$0xf]
        %v492 = vld [vmem:[%s453 + $0xc] sm:$0xf]
        %v497 = vcombine.low %v489, %v490
        %v498 = vcombine.low %v491, %v492
        %v501 = vpack.c.bf16 %v498, %v497
        %v502 = vld [vmem:[%s2] sm:$0xf]
        %v503 = vld [vmem:[%s2 + $0x4] sm:$0xf]
        %v504 = vld [vmem:[%s2 + $0x8] sm:$0xf]
        %v505 = vld [vmem:[%s2 + $0xc] sm:$0xf]
        %v506 = vld [vmem:[%s3] sm:$0x1]
        %v508 = vlaneseq
        %v509 = vshrl.u32 %v508, 7
        %v510 = vsub.s32 0, %v509
        %v511 = vrot.slane %v506, %v510
        %v517 = vunpack.c.l.b16 %v502
        %v518 = vunpack.c.l.b16 %v503
        %v519 = vunpack.c.l.b16 %v504
        %v520 = vunpack.c.l.b16 %v505
        %v521 = vpack.c.b16 %v518, %v517
        %v522 = vpack.c.b16 %v520, %v519
        %vm525 = vcmask 261120
        %v527 = vsel %vm525, %v501, 0
        %529 = vmatprep.subr.bf16.mxu0 0
        %530 = vmatpush1.bf16.msra.mxu0 %v521
        %531 = vmatprep.subr.bf16.mxu0 0
        %532 = vmatpush1.bf16.msra.mxu0 %v522
        %533 = vmatprep.subr.bf16.mxu0 0
        %534 = vmatpush1.bf16.msra.mxu0 0
        %535 = vmatprep.subr.bf16.mxu0 0
        %536 = vmatpush1.bf16.msra.mxu0 0
        %537 = vmatprep.subr.bf16.mxu0 0
        %538 = vmatpush1.bf16.msra.mxu0 0
        %539 = vmatprep.subr.bf16.mxu0 0
        %540 = vmatpush1.bf16.msra.mxu0 0
        %541 = vmatprep.subr.bf16.mxu0 0
        %542 = vmatpush1.bf16.msra.mxu0 0
        %543 = vmatprep.subr.bf16.mxu0 0
        %544 = vmatpush1.bf16.msra.mxu0 0
        %545 = vmatprep.subr.bf16.mxu0 0
        %546 = vmatpush1.bf16.msra.mxu0 0
        %547 = vmatprep.subr.bf16.mxu0 0
        %548 = vmatpush1.bf16.msra.mxu0 0
        %549 = vmatprep.subr.bf16.mxu0 0
        %550 = vmatpush1.bf16.msra.mxu0 0
        %551 = vmatprep.subr.bf16.mxu0 0
        %552 = vmatpush1.bf16.msra.mxu0 0
        %553 = vmatprep.subr.bf16.mxu0 0
        %554 = vmatpush1.bf16.msra.mxu0 0
        %555 = vmatprep.subr.bf16.mxu0 0
        %556 = vmatpush1.bf16.msra.mxu0 0
        %557 = vmatprep.subr.bf16.mxu0 0
        %558 = vmatpush1.bf16.msra.mxu0 0
        %559 = vmatprep.subr.bf16.mxu0 0
        %560 = vmatpush1.bf16.msra.mxu0 0
        %561 = vmatprep.mubr.bf16.mxu0 0
        %562 = vmatmul.mubr.bf16.gmra.mrb[0].mxu0 %v527
        %v563 = vpop.f32.mrb[0].mxu0
        %v564 = vadd.f32 %v511, %v563
        %v565 = vpop.f32.mrb[0].mxu0
        %v566 = vpop.f32.mrb[0].mxu0
        %v567 = vadd.f32 %v511, %v566
        %v568 = vpop.f32.mrb[0].mxu0
        %569 = vdwg.mxu0
        %s570 = scalar_lea.vmem %s2, 16
        %v571 = vld [vmem:[%s570] sm:$0xf]
        %v572 = vld [vmem:[%s570 + $0x4] sm:$0xf]
        %v573 = vld [vmem:[%s570 + $0x8] sm:$0xf]
        %v574 = vld [vmem:[%s570 + $0xc] sm:$0xf]
        %v579 = vunpack.c.l.b16 %v571
        %v580 = vunpack.c.l.b16 %v572
        %v581 = vunpack.c.l.b16 %v573
        %v582 = vunpack.c.l.b16 %v574
        %v583 = vpack.c.b16 %v580, %v579
        %v584 = vpack.c.b16 %v582, %v581
        %587 = vmatprep.subr.bf16.mxu0 0
        %588 = vmatpush1.bf16.msra.mxu0 %v583
        %589 = vmatprep.subr.bf16.mxu0 0
        %590 = vmatpush1.bf16.msra.mxu0 %v584
        %591 = vmatprep.subr.bf16.mxu0 0
        %592 = vmatpush1.bf16.msra.mxu0 0
        %593 = vmatprep.subr.bf16.mxu0 0
        %594 = vmatpush1.bf16.msra.mxu0 0
        %595 = vmatprep.subr.bf16.mxu0 0
        %596 = vmatpush1.bf16.msra.mxu0 0
        %597 = vmatprep.subr.bf16.mxu0 0
        %598 = vmatpush1.bf16.msra.mxu0 0
        %599 = vmatprep.subr.bf16.mxu0 0
        %600 = vmatpush1.bf16.msra.mxu0 0
        %601 = vmatprep.subr.bf16.mxu0 0
        %602 = vmatpush1.bf16.msra.mxu0 0
        %603 = vmatprep.subr.bf16.mxu0 0
        %604 = vmatpush1.bf16.msra.mxu0 0
        %605 = vmatprep.subr.bf16.mxu0 0
        %606 = vmatpush1.bf16.msra.mxu0 0
        %607 = vmatprep.subr.bf16.mxu0 0
        %608 = vmatpush1.bf16.msra.mxu0 0
        %609 = vmatprep.subr.bf16.mxu0 0
        %610 = vmatpush1.bf16.msra.mxu0 0
        %611 = vmatprep.subr.bf16.mxu0 0
        %612 = vmatpush1.bf16.msra.mxu0 0
        %613 = vmatprep.subr.bf16.mxu0 0
        %614 = vmatpush1.bf16.msra.mxu0 0
        %615 = vmatprep.subr.bf16.mxu0 0
        %616 = vmatpush1.bf16.msra.mxu0 0
        %617 = vmatprep.subr.bf16.mxu0 0
        %618 = vmatpush1.bf16.msra.mxu0 0
        %619 = vmatprep.mubr.bf16.mxu0 0
        %620 = vmatmul.mubr.bf16.gmra.mrb[0].mxu0 %v527
        %v621 = vpop.f32.mrb[0].mxu0
        %v622 = vadd.f32 %v511, %v621
        %v623 = vpop.f32.mrb[0].mxu0
        %v624 = vpop.f32.mrb[0].mxu0
        %v625 = vadd.f32 %v511, %v624
        %v626 = vpop.f32.mrb[0].mxu0
        %627 = vdwg.mxu0
        %s628 = scalar_lea.vmem %s2, 32
        %v629 = vld [vmem:[%s628] sm:$0xf]
        %v630 = vld [vmem:[%s628 + $0x4] sm:$0xf]
        %v631 = vld [vmem:[%s628 + $0x8] sm:$0xf]
        %v632 = vld [vmem:[%s628 + $0xc] sm:$0xf]
        %v637 = vunpack.c.l.b16 %v629
        %v638 = vunpack.c.l.b16 %v630
        %v639 = vunpack.c.l.b16 %v631
        %v640 = vunpack.c.l.b16 %v632
        %v641 = vpack.c.b16 %v638, %v637
        %v642 = vpack.c.b16 %v640, %v639
        %645 = vmatprep.subr.bf16.mxu0 0
        %646 = vmatpush1.bf16.msra.mxu0 %v641
        %647 = vmatprep.subr.bf16.mxu0 0
        %648 = vmatpush1.bf16.msra.mxu0 %v642
        %649 = vmatprep.subr.bf16.mxu0 0
        %650 = vmatpush1.bf16.msra.mxu0 0
        %651 = vmatprep.subr.bf16.mxu0 0
        %652 = vmatpush1.bf16.msra.mxu0 0
        %653 = vmatprep.subr.bf16.mxu0 0
        %654 = vmatpush1.bf16.msra.mxu0 0
        %655 = vmatprep.subr.bf16.mxu0 0
        %656 = vmatpush1.bf16.msra.mxu0 0
        %657 = vmatprep.subr.bf16.mxu0 0
        %658 = vmatpush1.bf16.msra.mxu0 0
        %659 = vmatprep.subr.bf16.mxu0 0
        %660 = vmatpush1.bf16.msra.mxu0 0
        %661 = vmatprep.subr.bf16.mxu0 0
        %662 = vmatpush1.bf16.msra.mxu0 0
        %663 = vmatprep.subr.bf16.mxu0 0
        %664 = vmatpush1.bf16.msra.mxu0 0
        %665 = vmatprep.subr.bf16.mxu0 0
        %666 = vmatpush1.bf16.msra.mxu0 0
        %667 = vmatprep.subr.bf16.mxu0 0
        %668 = vmatpush1.bf16.msra.mxu0 0
        %669 = vmatprep.subr.bf16.mxu0 0
        %670 = vmatpush1.bf16.msra.mxu0 0
        %671 = vmatprep.subr.bf16.mxu0 0
        %672 = vmatpush1.bf16.msra.mxu0 0
        %673 = vmatprep.subr.bf16.mxu0 0
        %674 = vmatpush1.bf16.msra.mxu0 0
        %675 = vmatprep.subr.bf16.mxu0 0
        %676 = vmatpush1.bf16.msra.mxu0 0
        %677 = vmatprep.mubr.bf16.mxu0 0
        %678 = vmatmul.mubr.bf16.gmra.mrb[0].mxu0 %v527
        %v679 = vpop.f32.mrb[0].mxu0
        %v680 = vadd.f32 %v511, %v679
        %v681 = vpop.f32.mrb[0].mxu0
        %v682 = vpop.f32.mrb[0].mxu0
        %v683 = vadd.f32 %v511, %v682
        %v684 = vpop.f32.mrb[0].mxu0
        %685 = vdwg.mxu0
        %s686 = scalar_lea.vmem %s2, 48
        %v687 = vld [vmem:[%s686] sm:$0xf]
        %v688 = vld [vmem:[%s686 + $0x4] sm:$0xf]
        %v689 = vld [vmem:[%s686 + $0x8] sm:$0xf]
        %v690 = vld [vmem:[%s686 + $0xc] sm:$0xf]
        %v695 = vunpack.c.l.b16 %v687
        %v696 = vunpack.c.l.b16 %v688
        %v697 = vunpack.c.l.b16 %v689
        %v698 = vunpack.c.l.b16 %v690
        %v699 = vpack.c.b16 %v696, %v695
        %v700 = vpack.c.b16 %v698, %v697
        %703 = vmatprep.subr.bf16.mxu0 0
        %704 = vmatpush1.bf16.msra.mxu0 %v699
        %705 = vmatprep.subr.bf16.mxu0 0
        %706 = vmatpush1.bf16.msra.mxu0 %v700
        %707 = vmatprep.subr.bf16.mxu0 0
        %708 = vmatpush1.bf16.msra.mxu0 0
        %709 = vmatprep.subr.bf16.mxu0 0
        %710 = vmatpush1.bf16.msra.mxu0 0
        %711 = vmatprep.subr.bf16.mxu0 0
        %712 = vmatpush1.bf16.msra.mxu0 0
        %713 = vmatprep.subr.bf16.mxu0 0
        %714 = vmatpush1.bf16.msra.mxu0 0
        %715 = vmatprep.subr.bf16.mxu0 0
        %716 = vmatpush1.bf16.msra.mxu0 0
        %717 = vmatprep.subr.bf16.mxu0 0
        %718 = vmatpush1.bf16.msra.mxu0 0
        %719 = vmatprep.subr.bf16.mxu0 0
        %720 = vmatpush1.bf16.msra.mxu0 0
        %721 = vmatprep.subr.bf16.mxu0 0
        %722 = vmatpush1.bf16.msra.mxu0 0
        %723 = vmatprep.subr.bf16.mxu0 0
        %724 = vmatpush1.bf16.msra.mxu0 0
        %725 = vmatprep.subr.bf16.mxu0 0
        %726 = vmatpush1.bf16.msra.mxu0 0
        %727 = vmatprep.subr.bf16.mxu0 0
        %728 = vmatpush1.bf16.msra.mxu0 0
        %729 = vmatprep.subr.bf16.mxu0 0
        %730 = vmatpush1.bf16.msra.mxu0 0
        %731 = vmatprep.subr.bf16.mxu0 0
        %732 = vmatpush1.bf16.msra.mxu0 0
        %733 = vmatprep.subr.bf16.mxu0 0
        %734 = vmatpush1.bf16.msra.mxu0 0
        %735 = vmatprep.mubr.bf16.mxu0 0
        %736 = vmatmul.mubr.bf16.gmra.mrb[0].mxu0 %v527
        %v737 = vpop.f32.mrb[0].mxu0
        %v738 = vadd.f32 %v511, %v737
        %v739 = vpop.f32.mrb[0].mxu0
        %v740 = vpop.f32.mrb[0].mxu0
        %v741 = vadd.f32 %v511, %v740
        %v742 = vpop.f32.mrb[0].mxu0
        %743 = vdwg.mxu0
        %v746 = vcombine.high %v564, %v564
        %v748 = vunpack.c.l.s4 1966171168
        %v749 = vunpack.c.0.s8 %v748
        %v750 = vlaneseq
        %v751 = vshrl.u32 %v750, 7
        %v752 = vsub.s32 %v749, %v751
        %v753 = vrot.slane %v564, %v752
        %v755 = vunpack.c.l.s4 1966171168
        %v756 = vunpack.c.0.s8 %v755
        %v757 = vlaneseq
        %v758 = vshrl.u32 %v757, 7
        %v759 = vsub.s32 %v756, %v758
        %v760 = vrot.slane %v746, %v759
        %v761 = vcombine.high %v753, %v753
        %v762 = vcombine.high %v760, %v760
        %v764 = vunpack.c.l.s4 1966171168
        %v765 = vunpack.c.0.s8 %v764
        %v766 = vlaneseq
        %v767 = vshrl.u32 %v766, 7
        %v768 = vsub.s32 %v765, %v767
        %v769 = vrot.slane %v753, %v768
        %v771 = vunpack.c.l.s4 1966171168
        %v772 = vunpack.c.0.s8 %v771
        %v773 = vlaneseq
        %v774 = vshrl.u32 %v773, 7
        %v775 = vsub.s32 %v772, %v774
        %v776 = vrot.slane %v760, %v775
        %v778 = vunpack.c.l.s4 1966171168
        %v779 = vunpack.c.0.s8 %v778
        %v780 = vlaneseq
        %v781 = vshrl.u32 %v780, 7
        %v782 = vsub.s32 %v779, %v781
        %v783 = vrot.slane %v761, %v782
        %v785 = vunpack.c.l.s4 1966171168
        %v786 = vunpack.c.0.s8 %v785
        %v787 = vlaneseq
        %v788 = vshrl.u32 %v787, 7
        %v789 = vsub.s32 %v786, %v788
        %v790 = vrot.slane %v762, %v789
        %v791 = vcombine.high %v769, %v769
        %v792 = vcombine.high %v776, %v776
        %v793 = vcombine.high %v783, %v783
        %v794 = vcombine.high %v790, %v790
        %v795 = vcombine.high %v567, %v567
        %v797 = vunpack.c.l.s4 1966171168
        %v798 = vunpack.c.0.s8 %v797
        %v799 = vlaneseq
        %v800 = vshrl.u32 %v799, 7
        %v801 = vsub.s32 %v798, %v800
        %v802 = vrot.slane %v567, %v801
        %v804 = vunpack.c.l.s4 1966171168
        %v805 = vunpack.c.0.s8 %v804
        %v806 = vlaneseq
        %v807 = vshrl.u32 %v806, 7
        %v808 = vsub.s32 %v805, %v807
        %v809 = vrot.slane %v795, %v808
        %v810 = vcombine.high %v802, %v802
        %v811 = vcombine.high %v809, %v809
        %v813 = vunpack.c.l.s4 1966171168
        %v814 = vunpack.c.0.s8 %v813
        %v815 = vlaneseq
        %v816 = vshrl.u32 %v815, 7
        %v817 = vsub.s32 %v814, %v816
        %v818 = vrot.slane %v802, %v817
        %v820 = vunpack.c.l.s4 1966171168
        %v821 = vunpack.c.0.s8 %v820
        %v822 = vlaneseq
        %v823 = vshrl.u32 %v822, 7
        %v824 = vsub.s32 %v821, %v823
        %v825 = vrot.slane %v809, %v824
        %v827 = vunpack.c.l.s4 1966171168
        %v828 = vunpack.c.0.s8 %v827
        %v829 = vlaneseq
        %v830 = vshrl.u32 %v829, 7
        %v831 = vsub.s32 %v828, %v830
        %v832 = vrot.slane %v810, %v831
        %v834 = vunpack.c.l.s4 1966171168
        %v835 = vunpack.c.0.s8 %v834
        %v836 = vlaneseq
        %v837 = vshrl.u32 %v836, 7
        %v838 = vsub.s32 %v835, %v837
        %v839 = vrot.slane %v811, %v838
        %v840 = vcombine.high %v818, %v818
        %v841 = vcombine.high %v825, %v825
        %v842 = vcombine.high %v832, %v832
        %v843 = vcombine.high %v839, %v839
        %v862 = vcombine.high %v622, %v622
        %v864 = vunpack.c.l.s4 1966171168
        %v865 = vunpack.c.0.s8 %v864
        %v866 = vlaneseq
        %v867 = vshrl.u32 %v866, 7
        %v868 = vsub.s32 %v865, %v867
        %v869 = vrot.slane %v622, %v868
        %v871 = vunpack.c.l.s4 1966171168
        %v872 = vunpack.c.0.s8 %v871
        %v873 = vlaneseq
        %v874 = vshrl.u32 %v873, 7
        %v875 = vsub.s32 %v872, %v874
        %v876 = vrot.slane %v862, %v875
        %v877 = vcombine.high %v869, %v869
        %v878 = vcombine.high %v876, %v876
        %v880 = vunpack.c.l.s4 1966171168
        %v881 = vunpack.c.0.s8 %v880
        %v882 = vlaneseq
        %v883 = vshrl.u32 %v882, 7
        %v884 = vsub.s32 %v881, %v883
        %v885 = vrot.slane %v869, %v884
        %v887 = vunpack.c.l.s4 1966171168
        %v888 = vunpack.c.0.s8 %v887
        %v889 = vlaneseq
        %v890 = vshrl.u32 %v889, 7
        %v891 = vsub.s32 %v888, %v890
        %v892 = vrot.slane %v876, %v891
        %v894 = vunpack.c.l.s4 1966171168
        %v895 = vunpack.c.0.s8 %v894
        %v896 = vlaneseq
        %v897 = vshrl.u32 %v896, 7
        %v898 = vsub.s32 %v895, %v897
        %v899 = vrot.slane %v877, %v898
        %v901 = vunpack.c.l.s4 1966171168
        %v902 = vunpack.c.0.s8 %v901
        %v903 = vlaneseq
        %v904 = vshrl.u32 %v903, 7
        %v905 = vsub.s32 %v902, %v904
        %v906 = vrot.slane %v878, %v905
        %v907 = vcombine.high %v885, %v885
        %v908 = vcombine.high %v892, %v892
        %v909 = vcombine.high %v899, %v899
        %v910 = vcombine.high %v906, %v906
        %v911 = vcombine.high %v625, %v625
        %v913 = vunpack.c.l.s4 1966171168
        %v914 = vunpack.c.0.s8 %v913
        %v915 = vlaneseq
        %v916 = vshrl.u32 %v915, 7
        %v917 = vsub.s32 %v914, %v916
        %v918 = vrot.slane %v625, %v917
        %v920 = vunpack.c.l.s4 1966171168
        %v921 = vunpack.c.0.s8 %v920
        %v922 = vlaneseq
        %v923 = vshrl.u32 %v922, 7
        %v924 = vsub.s32 %v921, %v923
        %v925 = vrot.slane %v911, %v924
        %v926 = vcombine.high %v918, %v918
        %v927 = vcombine.high %v925, %v925
        %v929 = vunpack.c.l.s4 1966171168
        %v930 = vunpack.c.0.s8 %v929
        %v931 = vlaneseq
        %v932 = vshrl.u32 %v931, 7
        %v933 = vsub.s32 %v930, %v932
        %v934 = vrot.slane %v918, %v933
        %v936 = vunpack.c.l.s4 1966171168
        %v937 = vunpack.c.0.s8 %v936
        %v938 = vlaneseq
        %v939 = vshrl.u32 %v938, 7
        %v940 = vsub.s32 %v937, %v939
        %v941 = vrot.slane %v925, %v940
        %v943 = vunpack.c.l.s4 1966171168
        %v944 = vunpack.c.0.s8 %v943
        %v945 = vlaneseq
        %v946 = vshrl.u32 %v945, 7
        %v947 = vsub.s32 %v944, %v946
        %v948 = vrot.slane %v926, %v947
        %v950 = vunpack.c.l.s4 1966171168
        %v951 = vunpack.c.0.s8 %v950
        %v952 = vlaneseq
        %v953 = vshrl.u32 %v952, 7
        %v954 = vsub.s32 %v951, %v953
        %v955 = vrot.slane %v927, %v954
        %v956 = vcombine.high %v934, %v934
        %v957 = vcombine.high %v941, %v941
        %v958 = vcombine.high %v948, %v948
        %v959 = vcombine.high %v955, %v955
        %v978 = vcombine.high %v680, %v680
        %v980 = vunpack.c.l.s4 1966171168
        %v981 = vunpack.c.0.s8 %v980
        %v982 = vlaneseq
        %v983 = vshrl.u32 %v982, 7
        %v984 = vsub.s32 %v981, %v983
        %v985 = vrot.slane %v680, %v984
        %v987 = vunpack.c.l.s4 1966171168
        %v988 = vunpack.c.0.s8 %v987
        %v989 = vlaneseq
        %v990 = vshrl.u32 %v989, 7
        %v991 = vsub.s32 %v988, %v990
        %v992 = vrot.slane %v978, %v991
        %v993 = vcombine.high %v985, %v985
        %v994 = vcombine.high %v992, %v992
        %v996 = vunpack.c.l.s4 1966171168
        %v997 = vunpack.c.0.s8 %v996
        %v998 = vlaneseq
        %v999 = vshrl.u32 %v998, 7
        %v1000 = vsub.s32 %v997, %v999
        %v1001 = vrot.slane %v985, %v1000
        %v1003 = vunpack.c.l.s4 1966171168
        %v1004 = vunpack.c.0.s8 %v1003
        %v1005 = vlaneseq
        %v1006 = vshrl.u32 %v1005, 7
        %v1007 = vsub.s32 %v1004, %v1006
        %v1008 = vrot.slane %v992, %v1007
        %v1010 = vunpack.c.l.s4 1966171168
        %v1011 = vunpack.c.0.s8 %v1010
        %v1012 = vlaneseq
        %v1013 = vshrl.u32 %v1012, 7
        %v1014 = vsub.s32 %v1011, %v1013
        %v1015 = vrot.slane %v993, %v1014
        %v1017 = vunpack.c.l.s4 1966171168
        %v1018 = vunpack.c.0.s8 %v1017
        %v1019 = vlaneseq
        %v1020 = vshrl.u32 %v1019, 7
        %v1021 = vsub.s32 %v1018, %v1020
        %v1022 = vrot.slane %v994, %v1021
        %v1023 = vcombine.high %v1001, %v1001
        %v1024 = vcombine.high %v1008, %v1008
        %v1025 = vcombine.high %v1015, %v1015
        %v1026 = vcombine.high %v1022, %v1022
        %v1027 = vcombine.high %v683, %v683
        %v1029 = vunpack.c.l.s4 1966171168
        %v1030 = vunpack.c.0.s8 %v1029
        %v1031 = vlaneseq
        %v1032 = vshrl.u32 %v1031, 7
        %v1033 = vsub.s32 %v1030, %v1032
        %v1034 = vrot.slane %v683, %v1033
        %v1036 = vunpack.c.l.s4 1966171168
        %v1037 = vunpack.c.0.s8 %v1036
        %v1038 = vlaneseq
        %v1039 = vshrl.u32 %v1038, 7
        %v1040 = vsub.s32 %v1037, %v1039
        %v1041 = vrot.slane %v1027, %v1040
        %v1042 = vcombine.high %v1034, %v1034
        %v1043 = vcombine.high %v1041, %v1041
        %v1045 = vunpack.c.l.s4 1966171168
        %v1046 = vunpack.c.0.s8 %v1045
        %v1047 = vlaneseq
        %v1048 = vshrl.u32 %v1047, 7
        %v1049 = vsub.s32 %v1046, %v1048
        %v1050 = vrot.slane %v1034, %v1049
        %v1052 = vunpack.c.l.s4 1966171168
        %v1053 = vunpack.c.0.s8 %v1052
        %v1054 = vlaneseq
        %v1055 = vshrl.u32 %v1054, 7
        %v1056 = vsub.s32 %v1053, %v1055
        %v1057 = vrot.slane %v1041, %v1056
        %v1059 = vunpack.c.l.s4 1966171168
        %v1060 = vunpack.c.0.s8 %v1059
        %v1061 = vlaneseq
        %v1062 = vshrl.u32 %v1061, 7
        %v1063 = vsub.s32 %v1060, %v1062
        %v1064 = vrot.slane %v1042, %v1063
        %v1066 = vunpack.c.l.s4 1966171168
        %v1067 = vunpack.c.0.s8 %v1066
        %v1068 = vlaneseq
        %v1069 = vshrl.u32 %v1068, 7
        %v1070 = vsub.s32 %v1067, %v1069
        %v1071 = vrot.slane %v1043, %v1070
        %v1072 = vcombine.high %v1050, %v1050
        %v1073 = vcombine.high %v1057, %v1057
        %v1074 = vcombine.high %v1064, %v1064
        %v1075 = vcombine.high %v1071, %v1071
        %v1094 = vcombine.high %v738, %v738
        %v1096 = vunpack.c.l.s4 1966171168
        %v1097 = vunpack.c.0.s8 %v1096
        %v1098 = vlaneseq
        %v1099 = vshrl.u32 %v1098, 7
        %v1100 = vsub.s32 %v1097, %v1099
        %v1101 = vrot.slane %v738, %v1100
        %v1103 = vunpack.c.l.s4 1966171168
        %v1104 = vunpack.c.0.s8 %v1103
        %v1105 = vlaneseq
        %v1106 = vshrl.u32 %v1105, 7
        %v1107 = vsub.s32 %v1104, %v1106
        %v1108 = vrot.slane %v1094, %v1107
        %v1109 = vcombine.high %v1101, %v1101
        %v1110 = vcombine.high %v1108, %v1108
        %v1112 = vunpack.c.l.s4 1966171168
        %v1113 = vunpack.c.0.s8 %v1112
        %v1114 = vlaneseq
        %v1115 = vshrl.u32 %v1114, 7
        %v1116 = vsub.s32 %v1113, %v1115
        %v1117 = vrot.slane %v1101, %v1116
        %v1119 = vunpack.c.l.s4 1966171168
        %v1120 = vunpack.c.0.s8 %v1119
        %v1121 = vlaneseq
        %v1122 = vshrl.u32 %v1121, 7
        %v1123 = vsub.s32 %v1120, %v1122
        %v1124 = vrot.slane %v1108, %v1123
        %v1126 = vunpack.c.l.s4 1966171168
        %v1127 = vunpack.c.0.s8 %v1126
        %v1128 = vlaneseq
        %v1129 = vshrl.u32 %v1128, 7
        %v1130 = vsub.s32 %v1127, %v1129
        %v1131 = vrot.slane %v1109, %v1130
        %v1133 = vunpack.c.l.s4 1966171168
        %v1134 = vunpack.c.0.s8 %v1133
        %v1135 = vlaneseq
        %v1136 = vshrl.u32 %v1135, 7
        %v1137 = vsub.s32 %v1134, %v1136
        %v1138 = vrot.slane %v1110, %v1137
        %v1139 = vcombine.high %v1117, %v1117
        %v1140 = vcombine.high %v1124, %v1124
        %v1141 = vcombine.high %v1131, %v1131
        %v1142 = vcombine.high %v1138, %v1138
        %v1143 = vcombine.high %v741, %v741
        %v1145 = vunpack.c.l.s4 1966171168
        %v1146 = vunpack.c.0.s8 %v1145
        %v1147 = vlaneseq
        %v1148 = vshrl.u32 %v1147, 7
        %v1149 = vsub.s32 %v1146, %v1148
        %v1150 = vrot.slane %v741, %v1149
        %v1152 = vunpack.c.l.s4 1966171168
        %v1153 = vunpack.c.0.s8 %v1152
        %v1154 = vlaneseq
        %v1155 = vshrl.u32 %v1154, 7
        %v1156 = vsub.s32 %v1153, %v1155
        %v1157 = vrot.slane %v1143, %v1156
        %v1158 = vcombine.high %v1150, %v1150
        %v1159 = vcombine.high %v1157, %v1157
        %v1161 = vunpack.c.l.s4 1966171168
        %v1162 = vunpack.c.0.s8 %v1161
        %v1163 = vlaneseq
        %v1164 = vshrl.u32 %v1163, 7
        %v1165 = vsub.s32 %v1162, %v1164
        %v1166 = vrot.slane %v1150, %v1165
        %v1168 = vunpack.c.l.s4 1966171168
        %v1169 = vunpack.c.0.s8 %v1168
        %v1170 = vlaneseq
        %v1171 = vshrl.u32 %v1170, 7
        %v1172 = vsub.s32 %v1169, %v1171
        %v1173 = vrot.slane %v1157, %v1172
        %v1175 = vunpack.c.l.s4 1966171168
        %v1176 = vunpack.c.0.s8 %v1175
        %v1177 = vlaneseq
        %v1178 = vshrl.u32 %v1177, 7
        %v1179 = vsub.s32 %v1176, %v1178
        %v1180 = vrot.slane %v1158, %v1179
        %v1182 = vunpack.c.l.s4 1966171168
        %v1183 = vunpack.c.0.s8 %v1182
        %v1184 = vlaneseq
        %v1185 = vshrl.u32 %v1184, 7
        %v1186 = vsub.s32 %v1183, %v1185
        %v1187 = vrot.slane %v1159, %v1186
        %v1188 = vcombine.high %v1166, %v1166
        %v1189 = vcombine.high %v1173, %v1173
        %v1190 = vcombine.high %v1180, %v1180
        %v1191 = vcombine.high %v1187, %v1187
        %v1208 = vld [vmem:[%s458] sm:$0xff]
        %v1209 = vld [vmem:[%s458 + $0x8] sm:$0xff]
        %v1210 = vld [vmem:[%s458 + $0x10] sm:$0xff]
        %v1211 = vld [vmem:[%s458 + $0x18] sm:$0xff]
        %v1212 = vld [vmem:[%s458 + $0x20] sm:$0xff]
        %v1213 = vld [vmem:[%s458 + $0x28] sm:$0xff]
        %v1214 = vld [vmem:[%s458 + $0x30] sm:$0xff]
        %v1215 = vld [vmem:[%s458 + $0x38] sm:$0xff]
        %v1216 = vpack.c.bf16 %v1208, %v1208
        %v1217 = vpack.c.bf16 %v1209, %v1209
        %v1218 = vpack.c.bf16 %v1210, %v1210
        %v1219 = vpack.c.bf16 %v1211, %v1211
        %v1220 = vpack.c.bf16 %v1212, %v1212
        %v1221 = vpack.c.bf16 %v1213, %v1213
        %v1222 = vpack.c.bf16 %v1214, %v1214
        %v1223 = vpack.c.bf16 %v1215, %v1215
        %v1224 = vpack.c.bf16 %v769, %v769
        %v1225 = vpack.c.bf16 %v885, %v885
        %v1226 = vpack.c.bf16 %v783, %v783
        %v1227 = vpack.c.bf16 %v899, %v899
        %v1228 = vpack.c.bf16 %v791, %v791
        %v1229 = vpack.c.bf16 %v907, %v907
        %v1230 = vpack.c.bf16 %v793, %v793
        %v1231 = vpack.c.bf16 %v909, %v909
        %v1232 = vpack.c.bf16 %v1001, %v1001
        %v1233 = vpack.c.bf16 %v1117, %v1117
        %v1234 = vpack.c.bf16 %v1015, %v1015
        %v1235 = vpack.c.bf16 %v1131, %v1131
        %v1236 = vpack.c.bf16 %v1023, %v1023
        %v1237 = vpack.c.bf16 %v1139, %v1139
        %v1238 = vpack.c.bf16 %v1025, %v1025
        %v1239 = vpack.c.bf16 %v1141, %v1141
        %v1240 = vpack.c.bf16 %v776, %v776
        %v1241 = vpack.c.bf16 %v892, %v892
        %v1242 = vpack.c.bf16 %v790, %v790
        %v1243 = vpack.c.bf16 %v906, %v906
        %v1244 = vpack.c.bf16 %v792, %v792
        %v1245 = vpack.c.bf16 %v908, %v908
        %v1246 = vpack.c.bf16 %v794, %v794
        %v1247 = vpack.c.bf16 %v910, %v910
        %v1248 = vpack.c.bf16 %v1008, %v1008
        %v1249 = vpack.c.bf16 %v1124, %v1124
        %v1250 = vpack.c.bf16 %v1022, %v1022
        %v1251 = vpack.c.bf16 %v1138, %v1138
        %v1252 = vpack.c.bf16 %v1024, %v1024
        %v1253 = vpack.c.bf16 %v1140, %v1140
        %v1254 = vpack.c.bf16 %v1026, %v1026
        %v1255 = vpack.c.bf16 %v1142, %v1142
        %v1256 = vpack.c.bf16 %v818, %v818
        %v1257 = vpack.c.bf16 %v934, %v934
        %v1258 = vpack.c.bf16 %v832, %v832
        %v1259 = vpack.c.bf16 %v948, %v948
        %v1260 = vpack.c.bf16 %v840, %v840
        %v1261 = vpack.c.bf16 %v956, %v956
        %v1262 = vpack.c.bf16 %v842, %v842
        %v1263 = vpack.c.bf16 %v958, %v958
        %v1264 = vpack.c.bf16 %v1050, %v1050
        %v1265 = vpack.c.bf16 %v1166, %v1166
        %v1266 = vpack.c.bf16 %v1064, %v1064
        %v1267 = vpack.c.bf16 %v1180, %v1180
        %v1268 = vpack.c.bf16 %v1072, %v1072
        %v1269 = vpack.c.bf16 %v1188, %v1188
        %v1270 = vpack.c.bf16 %v1074, %v1074
        %v1271 = vpack.c.bf16 %v1190, %v1190
        %v1272 = vpack.c.bf16 %v825, %v825
        %v1273 = vpack.c.bf16 %v941, %v941
        %v1274 = vpack.c.bf16 %v839, %v839
        %v1275 = vpack.c.bf16 %v955, %v955
        %v1276 = vpack.c.bf16 %v841, %v841
        %v1277 = vpack.c.bf16 %v957, %v957
        %v1278 = vpack.c.bf16 %v843, %v843
        %v1279 = vpack.c.bf16 %v959, %v959
        %v1280 = vpack.c.bf16 %v1057, %v1057
        %v1281 = vpack.c.bf16 %v1173, %v1173
        %v1282 = vpack.c.bf16 %v1071, %v1071
        %v1283 = vpack.c.bf16 %v1187, %v1187
        %v1284 = vpack.c.bf16 %v1073, %v1073
        %v1285 = vpack.c.bf16 %v1189, %v1189
        %v1286 = vpack.c.bf16 %v1075, %v1075
        %v1287 = vpack.c.bf16 %v1191, %v1191
        %v1352 = vunpack.c.l.b16 %v1224
        %v1353 = vunpack.c.l.b16 %v1225
        %v1354 = vunpack.c.l.b16 %v1226
        %v1355 = vunpack.c.l.b16 %v1227
        %v1356 = vunpack.c.l.b16 %v1228
        %v1357 = vunpack.c.l.b16 %v1229
        %v1358 = vunpack.c.l.b16 %v1230
        %v1359 = vunpack.c.l.b16 %v1231
        %v1360 = vunpack.c.l.b16 %v1232
        %v1361 = vunpack.c.l.b16 %v1233
        %v1362 = vunpack.c.l.b16 %v1234
        %v1363 = vunpack.c.l.b16 %v1235
        %v1364 = vunpack.c.l.b16 %v1236
        %v1365 = vunpack.c.l.b16 %v1237
        %v1366 = vunpack.c.l.b16 %v1238
        %v1367 = vunpack.c.l.b16 %v1239
        %v1368 = vunpack.c.l.b16 %v1240
        %v1369 = vunpack.c.l.b16 %v1241
        %v1370 = vunpack.c.l.b16 %v1242
        %v1371 = vunpack.c.l.b16 %v1243
        %v1372 = vunpack.c.l.b16 %v1244
        %v1373 = vunpack.c.l.b16 %v1245
        %v1374 = vunpack.c.l.b16 %v1246
        %v1375 = vunpack.c.l.b16 %v1247
        %v1376 = vunpack.c.l.b16 %v1248
        %v1377 = vunpack.c.l.b16 %v1249
        %v1378 = vunpack.c.l.b16 %v1250
        %v1379 = vunpack.c.l.b16 %v1251
        %v1380 = vunpack.c.l.b16 %v1252
        %v1381 = vunpack.c.l.b16 %v1253
        %v1382 = vunpack.c.l.b16 %v1254
        %v1383 = vunpack.c.l.b16 %v1255
        %v1384 = vunpack.c.l.b16 %v1256
        %v1385 = vunpack.c.l.b16 %v1257
        %v1386 = vunpack.c.l.b16 %v1258
        %v1387 = vunpack.c.l.b16 %v1259
        %v1388 = vunpack.c.l.b16 %v1260
        %v1389 = vunpack.c.l.b16 %v1261
        %v1390 = vunpack.c.l.b16 %v1262
        %v1391 = vunpack.c.l.b16 %v1263
        %v1392 = vunpack.c.l.b16 %v1264
        %v1393 = vunpack.c.l.b16 %v1265
        %v1394 = vunpack.c.l.b16 %v1266
        %v1395 = vunpack.c.l.b16 %v1267
        %v1396 = vunpack.c.l.b16 %v1268
        %v1397 = vunpack.c.l.b16 %v1269
        %v1398 = vunpack.c.l.b16 %v1270
        %v1399 = vunpack.c.l.b16 %v1271
        %v1400 = vunpack.c.l.b16 %v1272
        %v1401 = vunpack.c.l.b16 %v1273
        %v1402 = vunpack.c.l.b16 %v1274
        %v1403 = vunpack.c.l.b16 %v1275
        %v1404 = vunpack.c.l.b16 %v1276
        %v1405 = vunpack.c.l.b16 %v1277
        %v1406 = vunpack.c.l.b16 %v1278
        %v1407 = vunpack.c.l.b16 %v1279
        %v1408 = vunpack.c.l.b16 %v1280
        %v1409 = vunpack.c.l.b16 %v1281
        %v1410 = vunpack.c.l.b16 %v1282
        %v1411 = vunpack.c.l.b16 %v1283
        %v1412 = vunpack.c.l.b16 %v1284
        %v1413 = vunpack.c.l.b16 %v1285
        %v1414 = vunpack.c.l.b16 %v1286
        %v1415 = vunpack.c.l.b16 %v1287
        %v1416 = vrot.slane %v1353, 7
        %vm1417 = vcmask 1041409
        %v1418 = vsel %vm1417, %v1416, %v1352
        %v1419 = vrot.slane %v1354, 6
        %vm1420 = vcmask 1042434
        %v1421 = vsel %vm1420, %v1419, %v1418
        %v1422 = vrot.slane %v1355, 5
        %vm1423 = vcmask 1043459
        %v1424 = vsel %vm1423, %v1422, %v1421
        %v1425 = vrot.slane %v1356, 4
        %vm1426 = vcmask 1044484
        %v1427 = vsel %vm1426, %v1425, %v1424
        %v1428 = vrot.slane %v1357, 3
        %vm1429 = vcmask 1045509
        %v1430 = vsel %vm1429, %v1428, %v1427
        %v1431 = vrot.slane %v1358, 2
        %vm1432 = vcmask 1046534
        %v1433 = vsel %vm1432, %v1431, %v1430
        %v1434 = vrot.slane %v1359, 1
        %vm1435 = vcmask 1047559
        %v1436 = vsel %vm1435, %v1434, %v1433
        %v1437 = vrot.slane %v1361, 7
        %v1438 = vsel %vm1417, %v1437, %v1360
        %v1439 = vrot.slane %v1362, 6
        %v1440 = vsel %vm1420, %v1439, %v1438
        %v1441 = vrot.slane %v1363, 5
        %v1442 = vsel %vm1423, %v1441, %v1440
        %v1443 = vrot.slane %v1364, 4
        %v1444 = vsel %vm1426, %v1443, %v1442
        %v1445 = vrot.slane %v1365, 3
        %v1446 = vsel %vm1429, %v1445, %v1444
        %v1447 = vrot.slane %v1366, 2
        %v1448 = vsel %vm1432, %v1447, %v1446
        %v1449 = vrot.slane %v1367, 1
        %v1450 = vsel %vm1435, %v1449, %v1448
        %v1451 = vrot.slane %v1369, 7
        %v1452 = vsel %vm1417, %v1451, %v1368
        %v1453 = vrot.slane %v1370, 6
        %v1454 = vsel %vm1420, %v1453, %v1452
        %v1455 = vrot.slane %v1371, 5
        %v1456 = vsel %vm1423, %v1455, %v1454
        %v1457 = vrot.slane %v1372, 4
        %v1458 = vsel %vm1426, %v1457, %v1456
        %v1459 = vrot.slane %v1373, 3
        %v1460 = vsel %vm1429, %v1459, %v1458
        %v1461 = vrot.slane %v1374, 2
        %v1462 = vsel %vm1432, %v1461, %v1460
        %v1463 = vrot.slane %v1375, 1
        %v1464 = vsel %vm1435, %v1463, %v1462
        %v1465 = vrot.slane %v1377, 7
        %v1466 = vsel %vm1417, %v1465, %v1376
        %v1467 = vrot.slane %v1378, 6
        %v1468 = vsel %vm1420, %v1467, %v1466
        %v1469 = vrot.slane %v1379, 5
        %v1470 = vsel %vm1423, %v1469, %v1468
        %v1471 = vrot.slane %v1380, 4
        %v1472 = vsel %vm1426, %v1471, %v1470
        %v1473 = vrot.slane %v1381, 3
        %v1474 = vsel %vm1429, %v1473, %v1472
        %v1475 = vrot.slane %v1382, 2
        %v1476 = vsel %vm1432, %v1475, %v1474
        %v1477 = vrot.slane %v1383, 1
        %v1478 = vsel %vm1435, %v1477, %v1476
        %v1479 = vrot.slane %v1385, 7
        %v1480 = vsel %vm1417, %v1479, %v1384
        %v1481 = vrot.slane %v1386, 6
        %v1482 = vsel %vm1420, %v1481, %v1480
        %v1483 = vrot.slane %v1387, 5
        %v1484 = vsel %vm1423, %v1483, %v1482
        %v1485 = vrot.slane %v1388, 4
        %v1486 = vsel %vm1426, %v1485, %v1484
        %v1487 = vrot.slane %v1389, 3
        %v1488 = vsel %vm1429, %v1487, %v1486
        %v1489 = vrot.slane %v1390, 2
        %v1490 = vsel %vm1432, %v1489, %v1488
        %v1491 = vrot.slane %v1391, 1
        %v1492 = vsel %vm1435, %v1491, %v1490
        %v1493 = vrot.slane %v1393, 7
        %v1494 = vsel %vm1417, %v1493, %v1392
        %v1495 = vrot.slane %v1394, 6
        %v1496 = vsel %vm1420, %v1495, %v1494
        %v1497 = vrot.slane %v1395, 5
        %v1498 = vsel %vm1423, %v1497, %v1496
        %v1499 = vrot.slane %v1396, 4
        %v1500 = vsel %vm1426, %v1499, %v1498
        %v1501 = vrot.slane %v1397, 3
        %v1502 = vsel %vm1429, %v1501, %v1500
        %v1503 = vrot.slane %v1398, 2
        %v1504 = vsel %vm1432, %v1503, %v1502
        %v1505 = vrot.slane %v1399, 1
        %v1506 = vsel %vm1435, %v1505, %v1504
        %v1507 = vrot.slane %v1401, 7
        %v1508 = vsel %vm1417, %v1507, %v1400
        %v1509 = vrot.slane %v1402, 6
        %v1510 = vsel %vm1420, %v1509, %v1508
        %v1511 = vrot.slane %v1403, 5
        %v1512 = vsel %vm1423, %v1511, %v1510
        %v1513 = vrot.slane %v1404, 4
        %v1514 = vsel %vm1426, %v1513, %v1512
        %v1515 = vrot.slane %v1405, 3
        %v1516 = vsel %vm1429, %v1515, %v1514
        %v1517 = vrot.slane %v1406, 2
        %v1518 = vsel %vm1432, %v1517, %v1516
        %v1519 = vrot.slane %v1407, 1
        %v1520 = vsel %vm1435, %v1519, %v1518
        %v1521 = vrot.slane %v1409, 7
        %v1522 = vsel %vm1417, %v1521, %v1408
        %v1523 = vrot.slane %v1410, 6
        %v1524 = vsel %vm1420, %v1523, %v1522
        %v1525 = vrot.slane %v1411, 5
        %v1526 = vsel %vm1423, %v1525, %v1524
        %v1527 = vrot.slane %v1412, 4
        %v1528 = vsel %vm1426, %v1527, %v1526
        %v1529 = vrot.slane %v1413, 3
        %v1530 = vsel %vm1429, %v1529, %v1528
        %v1531 = vrot.slane %v1414, 2
        %v1532 = vsel %vm1432, %v1531, %v1530
        %v1533 = vrot.slane %v1415, 1
        %v1534 = vsel %vm1435, %v1533, %v1532
        %v1535 = vpack.c.b16 %v1436, %v1436
        %v1536 = vpack.c.b16 %v1450, %v1450
        %v1537 = vpack.c.b16 %v1464, %v1464
        %v1538 = vpack.c.b16 %v1478, %v1478
        %v1539 = vpack.c.b16 %v1492, %v1492
        %v1540 = vpack.c.b16 %v1506, %v1506
        %v1541 = vpack.c.b16 %v1520, %v1520
        %v1542 = vpack.c.b16 %v1534, %v1534
        %1543 = vrot.lane.b32.xlu0 %v1535, 16
        %v1544 = vpop.permute.xlu0 %1543
        %1545 = vrot.lane.b32.xlu0 %v1536, 16
        %v1546 = vpop.permute.xlu0 %1545
        %1547 = vrot.lane.b32.xlu0 %v1537, 16
        %v1548 = vpop.permute.xlu0 %1547
        %1549 = vrot.lane.b32.xlu0 %v1538, 16
        %v1550 = vpop.permute.xlu0 %1549
        %1551 = vrot.lane.b32.xlu0 %v1539, 16
        %v1552 = vpop.permute.xlu0 %1551
        %1553 = vrot.lane.b32.xlu0 %v1540, 16
        %v1554 = vpop.permute.xlu0 %1553
        %1555 = vrot.lane.b32.xlu0 %v1541, 16
        %v1556 = vpop.permute.xlu0 %1555
        %1557 = vrot.lane.b32.xlu0 %v1542, 16
        %v1558 = vpop.permute.xlu0 %1557
        %vm1559 = vcmask 130048
        %v1562 = vsel %vm1559, %v1216, %v1544
        %v1565 = vsel %vm1559, %v1217, %v1546
        %v1568 = vsel %vm1559, %v1218, %v1548
        %v1571 = vsel %vm1559, %v1219, %v1550
        %v1574 = vsel %vm1559, %v1220, %v1552
        %v1577 = vsel %vm1559, %v1221, %v1554
        %v1580 = vsel %vm1559, %v1222, %v1556
        %v1583 = vsel %vm1559, %v1223, %v1558
        %v1592 = vunpack.c.l.b16 %v1562
        %v1593 = vunpack.c.l.b16 %v1565
        %v1594 = vunpack.c.l.b16 %v1568
        %v1595 = vunpack.c.l.b16 %v1571
        %v1596 = vunpack.c.l.b16 %v1574
        %v1597 = vunpack.c.l.b16 %v1577
        %v1598 = vunpack.c.l.b16 %v1580
        %v1599 = vunpack.c.l.b16 %v1583
        %v1600 = vpack.c.b16 %v1592, %v1592
        %v1601 = vpack.c.b16 %v1593, %v1593
        %v1602 = vpack.c.b16 %v1594, %v1594
        %v1603 = vpack.c.b16 %v1595, %v1595
        %v1604 = vpack.c.b16 %v1596, %v1596
        %v1605 = vpack.c.b16 %v1597, %v1597
        %v1606 = vpack.c.b16 %v1598, %v1598
        %v1607 = vpack.c.b16 %v1599, %v1599
        %v1608 = vrot.slane %v1600, 7
        %v1609 = vrot.slane %v1608, 4
        %v1610 = vrot.slane %v1601, 7
        %v1611 = vrot.slane %v1610, 4
        %v1612 = vrot.slane %v1602, 7
        %v1613 = vrot.slane %v1612, 4
        %v1614 = vrot.slane %v1603, 7
        %v1615 = vrot.slane %v1614, 4
        %v1616 = vrot.slane %v1604, 7
        %v1617 = vrot.slane %v1616, 4
        %v1618 = vrot.slane %v1605, 7
        %v1619 = vrot.slane %v1618, 4
        %v1620 = vrot.slane %v1606, 7
        %v1621 = vrot.slane %v1620, 4
        %v1622 = vrot.slane %v1607, 7
        %v1623 = vrot.slane %v1622, 4
        %s1640 = scalar_lea.vmem [#allocation2], 8
        %vm1641 = vcmask 257025
        %1642 = vst.msk [vmem:[%s1640] sm:$0xe] %vm1641, %v1608
        %1643 = vst.msk [vmem:[%s1640 + $0x4] sm:$0x1] %vm467, %v1609
        %1644 = vst.msk [vmem:[%s1640 + $0x8] sm:$0xe] %vm1641, %v1610
        %1645 = vst.msk [vmem:[%s1640 + $0xc] sm:$0x1] %vm467, %v1611
        %1646 = vst.msk [vmem:[%s1640 + $0x10] sm:$0xe] %vm1641, %v1612
        %1647 = vst.msk [vmem:[%s1640 + $0x14] sm:$0x1] %vm467, %v1613
        %1648 = vst.msk [vmem:[%s1640 + $0x18] sm:$0xe] %vm1641, %v1614
        %1649 = vst.msk [vmem:[%s1640 + $0x1c] sm:$0x1] %vm467, %v1615
        %1650 = vst.msk [vmem:[%s1640 + $0x20] sm:$0xe] %vm1641, %v1616
        %1651 = vst.msk [vmem:[%s1640 + $0x24] sm:$0x1] %vm467, %v1617
        %1652 = vst.msk [vmem:[%s1640 + $0x28] sm:$0xe] %vm1641, %v1618
        %1653 = vst.msk [vmem:[%s1640 + $0x2c] sm:$0x1] %vm467, %v1619
        %1654 = vst.msk [vmem:[%s1640 + $0x30] sm:$0xe] %vm1641, %v1620
        %1655 = vst.msk [vmem:[%s1640 + $0x34] sm:$0x1] %vm467, %v1621
        %1656 = vst.msk [vmem:[%s1640 + $0x38] sm:$0xe] %vm1641, %v1622
        %1657 = vst.msk [vmem:[%s1640 + $0x3c] sm:$0x1] %vm467, %v1623
        %v1658 = vld [vmem:[#allocation2] sm:$0xf]
        %v1659 = vld [vmem:[#allocation2 + $0x4] sm:$0x1]
        %v1660 = vld [vmem:[#allocation2 + $0x8] sm:$0xf]
        %v1661 = vld [vmem:[#allocation2 + $0xc] sm:$0x1]
        %v1662 = vld [vmem:[#allocation2 + $0x10] sm:$0xf]
        %v1663 = vld [vmem:[#allocation2 + $0x14] sm:$0x1]
        %v1664 = vld [vmem:[#allocation2 + $0x18] sm:$0xf]
        %v1665 = vld [vmem:[#allocation2 + $0x1c] sm:$0x1]
        %v1666 = vld [vmem:[#allocation2 + $0x20] sm:$0xf]
        %v1667 = vld [vmem:[#allocation2 + $0x24] sm:$0x1]
        %v1668 = vld [vmem:[#allocation2 + $0x28] sm:$0xf]
        %v1669 = vld [vmem:[#allocation2 + $0x2c] sm:$0x1]
        %v1670 = vld [vmem:[#allocation2 + $0x30] sm:$0xf]
        %v1671 = vld [vmem:[#allocation2 + $0x34] sm:$0x1]
        %v1672 = vld [vmem:[#allocation2 + $0x38] sm:$0xf]
        %v1673 = vld [vmem:[#allocation2 + $0x3c] sm:$0x1]
        %vm1674 = vsmask.f32 3328
        %vm1675 = vsmask.f32 7440
        %vm1676 = vmor %vm1674, %vm1675
        %v1678 = vshrl.u32 %v1658, 16
        %v1680 = vrot.slane %v1678, 4
        %v1681 = vshll.u32 %v1658, 16
        %v1683 = vrot.slane %v1681, 5
        %v1684 = vor.u32 %v1680, %v1683
        %v1685 = vrot.slane %v1684, 4
        %v1687 = vshll.u32 %v1659, 16
        %v1689 = vrot.slane %v1687, 5
        %v1690 = vsel %vm1676, %v1685, %v1689
        %v1692 = vshrl.u32 %v1660, 16
        %v1694 = vrot.slane %v1692, 4
        %v1695 = vshll.u32 %v1660, 16
        %v1697 = vrot.slane %v1695, 5
        %v1698 = vor.u32 %v1694, %v1697
        %v1699 = vrot.slane %v1698, 4
        %v1701 = vshll.u32 %v1661, 16
        %v1703 = vrot.slane %v1701, 5
        %v1704 = vsel %vm1676, %v1699, %v1703
        %v1706 = vshrl.u32 %v1662, 16
        %v1708 = vrot.slane %v1706, 4
        %v1709 = vshll.u32 %v1662, 16
        %v1711 = vrot.slane %v1709, 5
        %v1712 = vor.u32 %v1708, %v1711
        %v1713 = vrot.slane %v1712, 4
        %v1715 = vshll.u32 %v1663, 16
        %v1717 = vrot.slane %v1715, 5
        %v1718 = vsel %vm1676, %v1713, %v1717
        %v1720 = vshrl.u32 %v1664, 16
        %v1722 = vrot.slane %v1720, 4
        %v1723 = vshll.u32 %v1664, 16
        %v1725 = vrot.slane %v1723, 5
        %v1726 = vor.u32 %v1722, %v1725
        %v1727 = vrot.slane %v1726, 4
        %v1729 = vshll.u32 %v1665, 16
        %v1731 = vrot.slane %v1729, 5
        %v1732 = vsel %vm1676, %v1727, %v1731
        %v1734 = vshrl.u32 %v1666, 16
        %v1736 = vrot.slane %v1734, 4
        %v1737 = vshll.u32 %v1666, 16
        %v1739 = vrot.slane %v1737, 5
        %v1740 = vor.u32 %v1736, %v1739
        %v1741 = vrot.slane %v1740, 4
        %v1743 = vshll.u32 %v1667, 16
        %v1745 = vrot.slane %v1743, 5
        %v1746 = vsel %vm1676, %v1741, %v1745
        %v1748 = vshrl.u32 %v1668, 16
        %v1750 = vrot.slane %v1748, 4
        %v1751 = vshll.u32 %v1668, 16
        %v1753 = vrot.slane %v1751, 5
        %v1754 = vor.u32 %v1750, %v1753
        %v1755 = vrot.slane %v1754, 4
        %v1757 = vshll.u32 %v1669, 16
        %v1759 = vrot.slane %v1757, 5
        %v1760 = vsel %vm1676, %v1755, %v1759
        %v1762 = vshrl.u32 %v1670, 16
        %v1764 = vrot.slane %v1762, 4
        %v1765 = vshll.u32 %v1670, 16
        %v1767 = vrot.slane %v1765, 5
        %v1768 = vor.u32 %v1764, %v1767
        %v1769 = vrot.slane %v1768, 4
        %v1771 = vshll.u32 %v1671, 16
        %v1773 = vrot.slane %v1771, 5
        %v1774 = vsel %vm1676, %v1769, %v1773
        %v1776 = vshrl.u32 %v1672, 16
        %v1778 = vrot.slane %v1776, 4
        %v1779 = vshll.u32 %v1672, 16
        %v1781 = vrot.slane %v1779, 5
        %v1782 = vor.u32 %v1778, %v1781
        %v1783 = vrot.slane %v1782, 4
        %v1785 = vshll.u32 %v1673, 16
        %v1787 = vrot.slane %v1785, 5
        %v1788 = vsel %vm1676, %v1783, %v1787
        %v1789 = vld [vmem:[#allocation2] sm:$0xe]
        %v1790 = vld [vmem:[#allocation2 + $0x8] sm:$0xe]
        %v1791 = vld [vmem:[#allocation2 + $0x10] sm:$0xe]
        %v1792 = vld [vmem:[#allocation2 + $0x18] sm:$0xe]
        %v1793 = vld [vmem:[#allocation2 + $0x20] sm:$0xe]
        %v1794 = vld [vmem:[#allocation2 + $0x28] sm:$0xe]
        %v1795 = vld [vmem:[#allocation2 + $0x30] sm:$0xe]
        %v1796 = vld [vmem:[#allocation2 + $0x38] sm:$0xe]
        %vm1813 = vcmask 1042432
        %vm1814 = vcmask 1046532
        %vm1815 = vmor %vm1813, %vm1814
        %v1816 = vrot.slane %v1789, 5
        %v1817 = vrot.slane %v1816, 4
        %v1818 = vrot.slane %v1659, 5
        %v1819 = vsel %vm1815, %v1817, %v1818
        %v1820 = vrot.slane %v1790, 5
        %v1821 = vrot.slane %v1820, 4
        %v1822 = vrot.slane %v1661, 5
        %v1823 = vsel %vm1815, %v1821, %v1822
        %v1824 = vrot.slane %v1791, 5
        %v1825 = vrot.slane %v1824, 4
        %v1826 = vrot.slane %v1663, 5
        %v1827 = vsel %vm1815, %v1825, %v1826
        %v1828 = vrot.slane %v1792, 5
        %v1829 = vrot.slane %v1828, 4
        %v1830 = vrot.slane %v1665, 5
        %v1831 = vsel %vm1815, %v1829, %v1830
        %v1832 = vrot.slane %v1793, 5
        %v1833 = vrot.slane %v1832, 4
        %v1834 = vrot.slane %v1667, 5
        %v1835 = vsel %vm1815, %v1833, %v1834
        %v1836 = vrot.slane %v1794, 5
        %v1837 = vrot.slane %v1836, 4
        %v1838 = vrot.slane %v1669, 5
        %v1839 = vsel %vm1815, %v1837, %v1838
        %v1840 = vrot.slane %v1795, 5
        %v1841 = vrot.slane %v1840, 4
        %v1842 = vrot.slane %v1671, 5
        %v1843 = vsel %vm1815, %v1841, %v1842
        %v1844 = vrot.slane %v1796, 5
        %v1845 = vrot.slane %v1844, 4
        %v1846 = vrot.slane %v1673, 5
        %v1847 = vsel %vm1815, %v1845, %v1846
        %v1848 = vld [vmem:[#allocation2 + $0x4] sm:$0x3]
        %v1849 = vld [vmem:[#allocation2 + $0xc] sm:$0x3]
        %v1850 = vld [vmem:[#allocation2 + $0x14] sm:$0x3]
        %v1851 = vld [vmem:[#allocation2 + $0x1c] sm:$0x3]
        %v1852 = vld [vmem:[#allocation2 + $0x24] sm:$0x3]
        %v1853 = vld [vmem:[#allocation2 + $0x2c] sm:$0x3]
        %v1854 = vld [vmem:[#allocation2 + $0x34] sm:$0x3]
        %v1855 = vld [vmem:[#allocation2 + $0x3c] sm:$0x3]
        %vm1856 = vsmask.f32 2304
        %vm1857 = vsmask.f32 6416
        %vm1858 = vmor %vm1856, %vm1857
        %v1860 = vshrl.u32 %v1789, 16
        %v1862 = vrot.slane %v1860, 5
        %v1863 = vshll.u32 %v1789, 16
        %v1865 = vrot.slane %v1863, 6
        %v1866 = vor.u32 %v1862, %v1865
        %v1867 = vrot.slane %v1866, 4
        %v1869 = vshrl.u32 %v1848, 16
        %v1871 = vrot.slane %v1869, 5
        %v1872 = vshll.u32 %v1848, 16
        %v1874 = vrot.slane %v1872, 6
        %v1875 = vor.u32 %v1871, %v1874
        %v1876 = vsel %vm1858, %v1867, %v1875
        %v1878 = vshrl.u32 %v1790, 16
        %v1880 = vrot.slane %v1878, 5
        %v1881 = vshll.u32 %v1790, 16
        %v1883 = vrot.slane %v1881, 6
        %v1884 = vor.u32 %v1880, %v1883
        %v1885 = vrot.slane %v1884, 4
        %v1887 = vshrl.u32 %v1849, 16
        %v1889 = vrot.slane %v1887, 5
        %v1890 = vshll.u32 %v1849, 16
        %v1892 = vrot.slane %v1890, 6
        %v1893 = vor.u32 %v1889, %v1892
        %v1894 = vsel %vm1858, %v1885, %v1893
        %v1896 = vshrl.u32 %v1791, 16
        %v1898 = vrot.slane %v1896, 5
        %v1899 = vshll.u32 %v1791, 16
        %v1901 = vrot.slane %v1899, 6
        %v1902 = vor.u32 %v1898, %v1901
        %v1903 = vrot.slane %v1902, 4
        %v1905 = vshrl.u32 %v1850, 16
        %v1907 = vrot.slane %v1905, 5
        %v1908 = vshll.u32 %v1850, 16
        %v1910 = vrot.slane %v1908, 6
        %v1911 = vor.u32 %v1907, %v1910
        %v1912 = vsel %vm1858, %v1903, %v1911
        %v1914 = vshrl.u32 %v1792, 16
        %v1916 = vrot.slane %v1914, 5
        %v1917 = vshll.u32 %v1792, 16
        %v1919 = vrot.slane %v1917, 6
        %v1920 = vor.u32 %v1916, %v1919
        %v1921 = vrot.slane %v1920, 4
        %v1923 = vshrl.u32 %v1851, 16
        %v1925 = vrot.slane %v1923, 5
        %v1926 = vshll.u32 %v1851, 16
        %v1928 = vrot.slane %v1926, 6
        %v1929 = vor.u32 %v1925, %v1928
        %v1930 = vsel %vm1858, %v1921, %v1929
        %v1932 = vshrl.u32 %v1793, 16
        %v1934 = vrot.slane %v1932, 5
        %v1935 = vshll.u32 %v1793, 16
        %v1937 = vrot.slane %v1935, 6
        %v1938 = vor.u32 %v1934, %v1937
        %v1939 = vrot.slane %v1938, 4
        %v1941 = vshrl.u32 %v1852, 16
        %v1943 = vrot.slane %v1941, 5
        %v1944 = vshll.u32 %v1852, 16
        %v1946 = vrot.slane %v1944, 6
        %v1947 = vor.u32 %v1943, %v1946
        %v1948 = vsel %vm1858, %v1939, %v1947
        %v1950 = vshrl.u32 %v1794, 16
        %v1952 = vrot.slane %v1950, 5
        %v1953 = vshll.u32 %v1794, 16
        %v1955 = vrot.slane %v1953, 6
        %v1956 = vor.u32 %v1952, %v1955
        %v1957 = vrot.slane %v1956, 4
        %v1959 = vshrl.u32 %v1853, 16
        %v1961 = vrot.slane %v1959, 5
        %v1962 = vshll.u32 %v1853, 16
        %v1964 = vrot.slane %v1962, 6
        %v1965 = vor.u32 %v1961, %v1964
        %v1966 = vsel %vm1858, %v1957, %v1965
        %v1968 = vshrl.u32 %v1795, 16
        %v1970 = vrot.slane %v1968, 5
        %v1971 = vshll.u32 %v1795, 16
        %v1973 = vrot.slane %v1971, 6
        %v1974 = vor.u32 %v1970, %v1973
        %v1975 = vrot.slane %v1974, 4
        %v1977 = vshrl.u32 %v1854, 16
        %v1979 = vrot.slane %v1977, 5
        %v1980 = vshll.u32 %v1854, 16
        %v1982 = vrot.slane %v1980, 6
        %v1983 = vor.u32 %v1979, %v1982
        %v1984 = vsel %vm1858, %v1975, %v1983
        %v1986 = vshrl.u32 %v1796, 16
        %v1988 = vrot.slane %v1986, 5
        %v1989 = vshll.u32 %v1796, 16
        %v1991 = vrot.slane %v1989, 6
        %v1992 = vor.u32 %v1988, %v1991
        %v1993 = vrot.slane %v1992, 4
        %v1995 = vshrl.u32 %v1855, 16
        %v1997 = vrot.slane %v1995, 5
        %v1998 = vshll.u32 %v1855, 16
        %v2000 = vrot.slane %v1998, 6
        %v2001 = vor.u32 %v1997, %v2000
        %v2002 = vsel %vm1858, %v1993, %v2001
        %v2003 = vld [vmem:[%s1640] sm:$0xf]
        %v2004 = vld [vmem:[%s1640 + $0x4] sm:$0x1]
        %v2005 = vld [vmem:[%s1640 + $0x8] sm:$0xf]
        %v2006 = vld [vmem:[%s1640 + $0xc] sm:$0x1]
        %v2007 = vld [vmem:[%s1640 + $0x10] sm:$0xf]
        %v2008 = vld [vmem:[%s1640 + $0x14] sm:$0x1]
        %v2009 = vld [vmem:[%s1640 + $0x18] sm:$0xf]
        %v2010 = vld [vmem:[%s1640 + $0x1c] sm:$0x1]
        %v2011 = vld [vmem:[%s1640 + $0x20] sm:$0xf]
        %v2012 = vld [vmem:[%s1640 + $0x24] sm:$0x1]
        %v2013 = vld [vmem:[%s1640 + $0x28] sm:$0xf]
        %v2014 = vld [vmem:[%s1640 + $0x2c] sm:$0x1]
        %v2015 = vld [vmem:[%s1640 + $0x30] sm:$0xf]
        %v2016 = vld [vmem:[%s1640 + $0x34] sm:$0x1]
        %v2017 = vld [vmem:[%s1640 + $0x38] sm:$0xf]
        %v2018 = vld [vmem:[%s1640 + $0x3c] sm:$0x1]
        %v2020 = vshrl.u32 %v2003, 16
        %v2022 = vrot.slane %v2020, 4
        %v2023 = vshll.u32 %v2003, 16
        %v2025 = vrot.slane %v2023, 5
        %v2026 = vor.u32 %v2022, %v2025
        %v2027 = vrot.slane %v2026, 4
        %v2029 = vshll.u32 %v2004, 16
        %v2031 = vrot.slane %v2029, 5
        %v2032 = vsel %vm1676, %v2027, %v2031
        %v2034 = vshrl.u32 %v2005, 16
        %v2036 = vrot.slane %v2034, 4
        %v2037 = vshll.u32 %v2005, 16
        %v2039 = vrot.slane %v2037, 5
        %v2040 = vor.u32 %v2036, %v2039
        %v2041 = vrot.slane %v2040, 4
        %v2043 = vshll.u32 %v2006, 16
        %v2045 = vrot.slane %v2043, 5
        %v2046 = vsel %vm1676, %v2041, %v2045
        %v2048 = vshrl.u32 %v2007, 16
        %v2050 = vrot.slane %v2048, 4
        %v2051 = vshll.u32 %v2007, 16
        %v2053 = vrot.slane %v2051, 5
        %v2054 = vor.u32 %v2050, %v2053
        %v2055 = vrot.slane %v2054, 4
        %v2057 = vshll.u32 %v2008, 16
        %v2059 = vrot.slane %v2057, 5
        %v2060 = vsel %vm1676, %v2055, %v2059
        %v2062 = vshrl.u32 %v2009, 16
        %v2064 = vrot.slane %v2062, 4
        %v2065 = vshll.u32 %v2009, 16
        %v2067 = vrot.slane %v2065, 5
        %v2068 = vor.u32 %v2064, %v2067
        %v2069 = vrot.slane %v2068, 4
        %v2071 = vshll.u32 %v2010, 16
        %v2073 = vrot.slane %v2071, 5
        %v2074 = vsel %vm1676, %v2069, %v2073
        %v2076 = vshrl.u32 %v2011, 16
        %v2078 = vrot.slane %v2076, 4
        %v2079 = vshll.u32 %v2011, 16
        %v2081 = vrot.slane %v2079, 5
        %v2082 = vor.u32 %v2078, %v2081
        %v2083 = vrot.slane %v2082, 4
        %v2085 = vshll.u32 %v2012, 16
        %v2087 = vrot.slane %v2085, 5
        %v2088 = vsel %vm1676, %v2083, %v2087
        %v2090 = vshrl.u32 %v2013, 16
        %v2092 = vrot.slane %v2090, 4
        %v2093 = vshll.u32 %v2013, 16
        %v2095 = vrot.slane %v2093, 5
        %v2096 = vor.u32 %v2092, %v2095
        %v2097 = vrot.slane %v2096, 4
        %v2099 = vshll.u32 %v2014, 16
        %v2101 = vrot.slane %v2099, 5
        %v2102 = vsel %vm1676, %v2097, %v2101
        %v2104 = vshrl.u32 %v2015, 16
        %v2106 = vrot.slane %v2104, 4
        %v2107 = vshll.u32 %v2015, 16
        %v2109 = vrot.slane %v2107, 5
        %v2110 = vor.u32 %v2106, %v2109
        %v2111 = vrot.slane %v2110, 4
        %v2113 = vshll.u32 %v2016, 16
        %v2115 = vrot.slane %v2113, 5
        %v2116 = vsel %vm1676, %v2111, %v2115
        %v2118 = vshrl.u32 %v2017, 16
        %v2120 = vrot.slane %v2118, 4
        %v2121 = vshll.u32 %v2017, 16
        %v2123 = vrot.slane %v2121, 5
        %v2124 = vor.u32 %v2120, %v2123
        %v2125 = vrot.slane %v2124, 4
        %v2127 = vshll.u32 %v2018, 16
        %v2129 = vrot.slane %v2127, 5
        %v2130 = vsel %vm1676, %v2125, %v2129
        %v2131 = vld [vmem:[%s1640] sm:$0xe]
        %v2132 = vld [vmem:[%s1640 + $0x8] sm:$0xe]
        %v2133 = vld [vmem:[%s1640 + $0x10] sm:$0xe]
        %v2134 = vld [vmem:[%s1640 + $0x18] sm:$0xe]
        %v2135 = vld [vmem:[%s1640 + $0x20] sm:$0xe]
        %v2136 = vld [vmem:[%s1640 + $0x28] sm:$0xe]
        %v2137 = vld [vmem:[%s1640 + $0x30] sm:$0xe]
        %v2138 = vld [vmem:[%s1640 + $0x38] sm:$0xe]
        %v2155 = vrot.slane %v2131, 5
        %v2156 = vrot.slane %v2155, 4
        %v2157 = vrot.slane %v2004, 5
        %v2158 = vsel %vm1815, %v2156, %v2157
        %v2159 = vrot.slane %v2132, 5
        %v2160 = vrot.slane %v2159, 4
        %v2161 = vrot.slane %v2006, 5
        %v2162 = vsel %vm1815, %v2160, %v2161
        %v2163 = vrot.slane %v2133, 5
        %v2164 = vrot.slane %v2163, 4
        %v2165 = vrot.slane %v2008, 5
        %v2166 = vsel %vm1815, %v2164, %v2165
        %v2167 = vrot.slane %v2134, 5
        %v2168 = vrot.slane %v2167, 4
        %v2169 = vrot.slane %v2010, 5
        %v2170 = vsel %vm1815, %v2168, %v2169
        %v2171 = vrot.slane %v2135, 5
        %v2172 = vrot.slane %v2171, 4
        %v2173 = vrot.slane %v2012, 5
        %v2174 = vsel %vm1815, %v2172, %v2173
        %v2175 = vrot.slane %v2136, 5
        %v2176 = vrot.slane %v2175, 4
        %v2177 = vrot.slane %v2014, 5
        %v2178 = vsel %vm1815, %v2176, %v2177
        %v2179 = vrot.slane %v2137, 5
        %v2180 = vrot.slane %v2179, 4
        %v2181 = vrot.slane %v2016, 5
        %v2182 = vsel %vm1815, %v2180, %v2181
        %v2183 = vrot.slane %v2138, 5
        %v2184 = vrot.slane %v2183, 4
        %v2185 = vrot.slane %v2018, 5
        %v2186 = vsel %vm1815, %v2184, %v2185
        %v2187 = vld [vmem:[%s1640 + $0x4] sm:$0x3]
        %v2188 = vld [vmem:[%s1640 + $0xc] sm:$0x3]
        %v2189 = vld [vmem:[%s1640 + $0x14] sm:$0x3]
        %v2190 = vld [vmem:[%s1640 + $0x1c] sm:$0x3]
        %v2191 = vld [vmem:[%s1640 + $0x24] sm:$0x3]
        %v2192 = vld [vmem:[%s1640 + $0x2c] sm:$0x3]
        %v2193 = vld [vmem:[%s1640 + $0x34] sm:$0x3]
        %v2194 = vld [vmem:[%s1640 + $0x3c] sm:$0x3]
        %v2196 = vshrl.u32 %v2131, 16
        %v2198 = vrot.slane %v2196, 5
        %v2199 = vshll.u32 %v2131, 16
        %v2201 = vrot.slane %v2199, 6
        %v2202 = vor.u32 %v2198, %v2201
        %v2203 = vrot.slane %v2202, 4
        %v2205 = vshrl.u32 %v2187, 16
        %v2207 = vrot.slane %v2205, 5
        %v2208 = vshll.u32 %v2187, 16
        %v2210 = vrot.slane %v2208, 6
        %v2211 = vor.u32 %v2207, %v2210
        %v2212 = vsel %vm1858, %v2203, %v2211
        %v2214 = vshrl.u32 %v2132, 16
        %v2216 = vrot.slane %v2214, 5
        %v2217 = vshll.u32 %v2132, 16
        %v2219 = vrot.slane %v2217, 6
        %v2220 = vor.u32 %v2216, %v2219
        %v2221 = vrot.slane %v2220, 4
        %v2223 = vshrl.u32 %v2188, 16
        %v2225 = vrot.slane %v2223, 5
        %v2226 = vshll.u32 %v2188, 16
        %v2228 = vrot.slane %v2226, 6
        %v2229 = vor.u32 %v2225, %v2228
        %v2230 = vsel %vm1858, %v2221, %v2229
        %v2232 = vshrl.u32 %v2133, 16
        %v2234 = vrot.slane %v2232, 5
        %v2235 = vshll.u32 %v2133, 16
        %v2237 = vrot.slane %v2235, 6
        %v2238 = vor.u32 %v2234, %v2237
        %v2239 = vrot.slane %v2238, 4
        %v2241 = vshrl.u32 %v2189, 16
        %v2243 = vrot.slane %v2241, 5
        %v2244 = vshll.u32 %v2189, 16
        %v2246 = vrot.slane %v2244, 6
        %v2247 = vor.u32 %v2243, %v2246
        %v2248 = vsel %vm1858, %v2239, %v2247
        %v2250 = vshrl.u32 %v2134, 16
        %v2252 = vrot.slane %v2250, 5
        %v2253 = vshll.u32 %v2134, 16
        %v2255 = vrot.slane %v2253, 6
        %v2256 = vor.u32 %v2252, %v2255
        %v2257 = vrot.slane %v2256, 4
        %v2259 = vshrl.u32 %v2190, 16
        %v2261 = vrot.slane %v2259, 5
        %v2262 = vshll.u32 %v2190, 16
        %v2264 = vrot.slane %v2262, 6
        %v2265 = vor.u32 %v2261, %v2264
        %v2266 = vsel %vm1858, %v2257, %v2265
        %v2268 = vshrl.u32 %v2135, 16
        %v2270 = vrot.slane %v2268, 5
        %v2271 = vshll.u32 %v2135, 16
        %v2273 = vrot.slane %v2271, 6
        %v2274 = vor.u32 %v2270, %v2273
        %v2275 = vrot.slane %v2274, 4
        %v2277 = vshrl.u32 %v2191, 16
        %v2279 = vrot.slane %v2277, 5
        %v2280 = vshll.u32 %v2191, 16
        %v2282 = vrot.slane %v2280, 6
        %v2283 = vor.u32 %v2279, %v2282
        %v2284 = vsel %vm1858, %v2275, %v2283
        %v2286 = vshrl.u32 %v2136, 16
        %v2288 = vrot.slane %v2286, 5
        %v2289 = vshll.u32 %v2136, 16
        %v2291 = vrot.slane %v2289, 6
        %v2292 = vor.u32 %v2288, %v2291
        %v2293 = vrot.slane %v2292, 4
        %v2295 = vshrl.u32 %v2192, 16
        %v2297 = vrot.slane %v2295, 5
        %v2298 = vshll.u32 %v2192, 16
        %v2300 = vrot.slane %v2298, 6
        %v2301 = vor.u32 %v2297, %v2300
        %v2302 = vsel %vm1858, %v2293, %v2301
        %v2304 = vshrl.u32 %v2137, 16
        %v2306 = vrot.slane %v2304, 5
        %v2307 = vshll.u32 %v2137, 16
        %v2309 = vrot.slane %v2307, 6
        %v2310 = vor.u32 %v2306, %v2309
        %v2311 = vrot.slane %v2310, 4
        %v2313 = vshrl.u32 %v2193, 16
        %v2315 = vrot.slane %v2313, 5
        %v2316 = vshll.u32 %v2193, 16
        %v2318 = vrot.slane %v2316, 6
        %v2319 = vor.u32 %v2315, %v2318
        %v2320 = vsel %vm1858, %v2311, %v2319
        %v2322 = vshrl.u32 %v2138, 16
        %v2324 = vrot.slane %v2322, 5
        %v2325 = vshll.u32 %v2138, 16
        %v2327 = vrot.slane %v2325, 6
        %v2328 = vor.u32 %v2324, %v2327
        %v2329 = vrot.slane %v2328, 4
        %v2331 = vshrl.u32 %v2194, 16
        %v2333 = vrot.slane %v2331, 5
        %v2334 = vshll.u32 %v2194, 16
        %v2336 = vrot.slane %v2334, 6
        %v2337 = vor.u32 %v2333, %v2336
        %v2338 = vsel %vm1858, %v2329, %v2337
        %s2339 = scalar_lea.vmem [#allocation2], 16
        %v2340 = vld [vmem:[%s2339] sm:$0xf]
        %v2341 = vld [vmem:[%s2339 + $0x4] sm:$0x1]
        %v2342 = vld [vmem:[%s2339 + $0x8] sm:$0xf]
        %v2343 = vld [vmem:[%s2339 + $0xc] sm:$0x1]
        %v2344 = vld [vmem:[%s2339 + $0x10] sm:$0xf]
        %v2345 = vld [vmem:[%s2339 + $0x14] sm:$0x1]
        %v2346 = vld [vmem:[%s2339 + $0x18] sm:$0xf]
        %v2347 = vld [vmem:[%s2339 + $0x1c] sm:$0x1]
        %v2348 = vld [vmem:[%s2339 + $0x20] sm:$0xf]
        %v2349 = vld [vmem:[%s2339 + $0x24] sm:$0x1]
        %v2350 = vld [vmem:[%s2339 + $0x28] sm:$0xf]
        %v2351 = vld [vmem:[%s2339 + $0x2c] sm:$0x1]
        %v2352 = vld [vmem:[%s2339 + $0x30] sm:$0xf]
        %v2353 = vld [vmem:[%s2339 + $0x34] sm:$0x1]
        %v2354 = vld [vmem:[%s2339 + $0x38] sm:$0xf]
        %v2355 = vld [vmem:[%s2339 + $0x3c] sm:$0x1]
        %v2357 = vshrl.u32 %v2340, 16
        %v2359 = vrot.slane %v2357, 4
        %v2360 = vshll.u32 %v2340, 16
        %v2362 = vrot.slane %v2360, 5
        %v2363 = vor.u32 %v2359, %v2362
        %v2364 = vrot.slane %v2363, 4
        %v2366 = vshll.u32 %v2341, 16
        %v2368 = vrot.slane %v2366, 5
        %v2369 = vsel %vm1676, %v2364, %v2368
        %v2371 = vshrl.u32 %v2342, 16
        %v2373 = vrot.slane %v2371, 4
        %v2374 = vshll.u32 %v2342, 16
        %v2376 = vrot.slane %v2374, 5
        %v2377 = vor.u32 %v2373, %v2376
        %v2378 = vrot.slane %v2377, 4
        %v2380 = vshll.u32 %v2343, 16
        %v2382 = vrot.slane %v2380, 5
        %v2383 = vsel %vm1676, %v2378, %v2382
        %v2385 = vshrl.u32 %v2344, 16
        %v2387 = vrot.slane %v2385, 4
        %v2388 = vshll.u32 %v2344, 16
        %v2390 = vrot.slane %v2388, 5
        %v2391 = vor.u32 %v2387, %v2390
        %v2392 = vrot.slane %v2391, 4
        %v2394 = vshll.u32 %v2345, 16
        %v2396 = vrot.slane %v2394, 5
        %v2397 = vsel %vm1676, %v2392, %v2396
        %v2399 = vshrl.u32 %v2346, 16
        %v2401 = vrot.slane %v2399, 4
        %v2402 = vshll.u32 %v2346, 16
        %v2404 = vrot.slane %v2402, 5
        %v2405 = vor.u32 %v2401, %v2404
        %v2406 = vrot.slane %v2405, 4
        %v2408 = vshll.u32 %v2347, 16
        %v2410 = vrot.slane %v2408, 5
        %v2411 = vsel %vm1676, %v2406, %v2410
        %v2413 = vshrl.u32 %v2348, 16
        %v2415 = vrot.slane %v2413, 4
        %v2416 = vshll.u32 %v2348, 16
        %v2418 = vrot.slane %v2416, 5
        %v2419 = vor.u32 %v2415, %v2418
        %v2420 = vrot.slane %v2419, 4
        %v2422 = vshll.u32 %v2349, 16
        %v2424 = vrot.slane %v2422, 5
        %v2425 = vsel %vm1676, %v2420, %v2424
        %v2427 = vshrl.u32 %v2350, 16
        %v2429 = vrot.slane %v2427, 4
        %v2430 = vshll.u32 %v2350, 16
        %v2432 = vrot.slane %v2430, 5
        %v2433 = vor.u32 %v2429, %v2432
        %v2434 = vrot.slane %v2433, 4
        %v2436 = vshll.u32 %v2351, 16
        %v2438 = vrot.slane %v2436, 5
        %v2439 = vsel %vm1676, %v2434, %v2438
        %v2441 = vshrl.u32 %v2352, 16
        %v2443 = vrot.slane %v2441, 4
        %v2444 = vshll.u32 %v2352, 16
        %v2446 = vrot.slane %v2444, 5
        %v2447 = vor.u32 %v2443, %v2446
        %v2448 = vrot.slane %v2447, 4
        %v2450 = vshll.u32 %v2353, 16
        %v2452 = vrot.slane %v2450, 5
        %v2453 = vsel %vm1676, %v2448, %v2452
        %v2455 = vshrl.u32 %v2354, 16
        %v2457 = vrot.slane %v2455, 4
        %v2458 = vshll.u32 %v2354, 16
        %v2460 = vrot.slane %v2458, 5
        %v2461 = vor.u32 %v2457, %v2460
        %v2462 = vrot.slane %v2461, 4
        %v2464 = vshll.u32 %v2355, 16
        %v2466 = vrot.slane %v2464, 5
        %v2467 = vsel %vm1676, %v2462, %v2466
        %v2468 = vld [vmem:[%s2339] sm:$0xe]
        %v2469 = vld [vmem:[%s2339 + $0x8] sm:$0xe]
        %v2470 = vld [vmem:[%s2339 + $0x10] sm:$0xe]
        %v2471 = vld [vmem:[%s2339 + $0x18] sm:$0xe]
        %v2472 = vld [vmem:[%s2339 + $0x20] sm:$0xe]
        %v2473 = vld [vmem:[%s2339 + $0x28] sm:$0xe]
        %v2474 = vld [vmem:[%s2339 + $0x30] sm:$0xe]
        %v2475 = vld [vmem:[%s2339 + $0x38] sm:$0xe]
        %v2492 = vrot.slane %v2468, 5
        %v2493 = vrot.slane %v2492, 4
        %v2494 = vrot.slane %v2341, 5
        %v2495 = vsel %vm1815, %v2493, %v2494
        %v2496 = vrot.slane %v2469, 5
        %v2497 = vrot.slane %v2496, 4
        %v2498 = vrot.slane %v2343, 5
        %v2499 = vsel %vm1815, %v2497, %v2498
        %v2500 = vrot.slane %v2470, 5
        %v2501 = vrot.slane %v2500, 4
        %v2502 = vrot.slane %v2345, 5
        %v2503 = vsel %vm1815, %v2501, %v2502
        %v2504 = vrot.slane %v2471, 5
        %v2505 = vrot.slane %v2504, 4
        %v2506 = vrot.slane %v2347, 5
        %v2507 = vsel %vm1815, %v2505, %v2506
        %v2508 = vrot.slane %v2472, 5
        %v2509 = vrot.slane %v2508, 4
        %v2510 = vrot.slane %v2349, 5
        %v2511 = vsel %vm1815, %v2509, %v2510
        %v2512 = vrot.slane %v2473, 5
        %v2513 = vrot.slane %v2512, 4
        %v2514 = vrot.slane %v2351, 5
        %v2515 = vsel %vm1815, %v2513, %v2514
        %v2516 = vrot.slane %v2474, 5
        %v2517 = vrot.slane %v2516, 4
        %v2518 = vrot.slane %v2353, 5
        %v2519 = vsel %vm1815, %v2517, %v2518
        %v2520 = vrot.slane %v2475, 5
        %v2521 = vrot.slane %v2520, 4
        %v2522 = vrot.slane %v2355, 5
        %v2523 = vsel %vm1815, %v2521, %v2522
        %v2524 = vld [vmem:[%s2339 + $0x4] sm:$0x3]
        %v2525 = vld [vmem:[%s2339 + $0xc] sm:$0x3]
        %v2526 = vld [vmem:[%s2339 + $0x14] sm:$0x3]
        %v2527 = vld [vmem:[%s2339 + $0x1c] sm:$0x3]
        %v2528 = vld [vmem:[%s2339 + $0x24] sm:$0x3]
        %v2529 = vld [vmem:[%s2339 + $0x2c] sm:$0x3]
        %v2530 = vld [vmem:[%s2339 + $0x34] sm:$0x3]
        %v2531 = vld [vmem:[%s2339 + $0x3c] sm:$0x3]
        %v2533 = vshrl.u32 %v2468, 16
        %v2535 = vrot.slane %v2533, 5
        %v2536 = vshll.u32 %v2468, 16
        %v2538 = vrot.slane %v2536, 6
        %v2539 = vor.u32 %v2535, %v2538
        %v2540 = vrot.slane %v2539, 4
        %v2542 = vshrl.u32 %v2524, 16
        %v2544 = vrot.slane %v2542, 5
        %v2545 = vshll.u32 %v2524, 16
        %v2547 = vrot.slane %v2545, 6
        %v2548 = vor.u32 %v2544, %v2547
        %v2549 = vsel %vm1858, %v2540, %v2548
        %v2551 = vshrl.u32 %v2469, 16
        %v2553 = vrot.slane %v2551, 5
        %v2554 = vshll.u32 %v2469, 16
        %v2556 = vrot.slane %v2554, 6
        %v2557 = vor.u32 %v2553, %v2556
        %v2558 = vrot.slane %v2557, 4
        %v2560 = vshrl.u32 %v2525, 16
        %v2562 = vrot.slane %v2560, 5
        %v2563 = vshll.u32 %v2525, 16
        %v2565 = vrot.slane %v2563, 6
        %v2566 = vor.u32 %v2562, %v2565
        %v2567 = vsel %vm1858, %v2558, %v2566
        %v2569 = vshrl.u32 %v2470, 16
        %v2571 = vrot.slane %v2569, 5
        %v2572 = vshll.u32 %v2470, 16
        %v2574 = vrot.slane %v2572, 6
        %v2575 = vor.u32 %v2571, %v2574
        %v2576 = vrot.slane %v2575, 4
        %v2578 = vshrl.u32 %v2526, 16
        %v2580 = vrot.slane %v2578, 5
        %v2581 = vshll.u32 %v2526, 16
        %v2583 = vrot.slane %v2581, 6
        %v2584 = vor.u32 %v2580, %v2583
        %v2585 = vsel %vm1858, %v2576, %v2584
        %v2587 = vshrl.u32 %v2471, 16
        %v2589 = vrot.slane %v2587, 5
        %v2590 = vshll.u32 %v2471, 16
        %v2592 = vrot.slane %v2590, 6
        %v2593 = vor.u32 %v2589, %v2592
        %v2594 = vrot.slane %v2593, 4
        %v2596 = vshrl.u32 %v2527, 16
        %v2598 = vrot.slane %v2596, 5
        %v2599 = vshll.u32 %v2527, 16
        %v2601 = vrot.slane %v2599, 6
        %v2602 = vor.u32 %v2598, %v2601
        %v2603 = vsel %vm1858, %v2594, %v2602
        %v2605 = vshrl.u32 %v2472, 16
        %v2607 = vrot.slane %v2605, 5
        %v2608 = vshll.u32 %v2472, 16
        %v2610 = vrot.slane %v2608, 6
        %v2611 = vor.u32 %v2607, %v2610
        %v2612 = vrot.slane %v2611, 4
        %v2614 = vshrl.u32 %v2528, 16
        %v2616 = vrot.slane %v2614, 5
        %v2617 = vshll.u32 %v2528, 16
        %v2619 = vrot.slane %v2617, 6
        %v2620 = vor.u32 %v2616, %v2619
        %v2621 = vsel %vm1858, %v2612, %v2620
        %v2623 = vshrl.u32 %v2473, 16
        %v2625 = vrot.slane %v2623, 5
        %v2626 = vshll.u32 %v2473, 16
        %v2628 = vrot.slane %v2626, 6
        %v2629 = vor.u32 %v2625, %v2628
        %v2630 = vrot.slane %v2629, 4
        %v2632 = vshrl.u32 %v2529, 16
        %v2634 = vrot.slane %v2632, 5
        %v2635 = vshll.u32 %v2529, 16
        %v2637 = vrot.slane %v2635, 6
        %v2638 = vor.u32 %v2634, %v2637
        %v2639 = vsel %vm1858, %v2630, %v2638
        %v2641 = vshrl.u32 %v2474, 16
        %v2643 = vrot.slane %v2641, 5
        %v2644 = vshll.u32 %v2474, 16
        %v2646 = vrot.slane %v2644, 6
        %v2647 = vor.u32 %v2643, %v2646
        %v2648 = vrot.slane %v2647, 4
        %v2650 = vshrl.u32 %v2530, 16
        %v2652 = vrot.slane %v2650, 5
        %v2653 = vshll.u32 %v2530, 16
        %v2655 = vrot.slane %v2653, 6
        %v2656 = vor.u32 %v2652, %v2655
        %v2657 = vsel %vm1858, %v2648, %v2656
        %v2659 = vshrl.u32 %v2475, 16
        %v2661 = vrot.slane %v2659, 5
        %v2662 = vshll.u32 %v2475, 16
        %v2664 = vrot.slane %v2662, 6
        %v2665 = vor.u32 %v2661, %v2664
        %v2666 = vrot.slane %v2665, 4
        %v2668 = vshrl.u32 %v2531, 16
        %v2670 = vrot.slane %v2668, 5
        %v2671 = vshll.u32 %v2531, 16
        %v2673 = vrot.slane %v2671, 6
        %v2674 = vor.u32 %v2670, %v2673
        %v2675 = vsel %vm1858, %v2666, %v2674
        %v2676 = vunpack.c.l.b16 %v1690
        %v2677 = vunpack.c.l.b16 %v1704
        %v2678 = vunpack.c.l.b16 %v1718
        %v2679 = vunpack.c.l.b16 %v1732
        %v2680 = vunpack.c.l.b16 %v1746
        %v2681 = vunpack.c.l.b16 %v1760
        %v2682 = vunpack.c.l.b16 %v1774
        %v2683 = vunpack.c.l.b16 %v1788
        %v2684 = vpack.c.b16 %v2677, %v2676
        %v2685 = vpack.c.b16 %v2679, %v2678
        %v2686 = vpack.c.b16 %v2681, %v2680
        %v2687 = vpack.c.b16 %v2683, %v2682
        %v2688 = vunpack.c.l.b16 %v1819
        %v2689 = vunpack.c.l.b16 %v1823
        %v2690 = vunpack.c.l.b16 %v1827
        %v2691 = vunpack.c.l.b16 %v1831
        %v2692 = vunpack.c.l.b16 %v1835
        %v2693 = vunpack.c.l.b16 %v1839
        %v2694 = vunpack.c.l.b16 %v1843
        %v2695 = vunpack.c.l.b16 %v1847
        %v2696 = vpack.c.b16 %v2689, %v2688
        %v2697 = vpack.c.b16 %v2691, %v2690
        %v2698 = vpack.c.b16 %v2693, %v2692
        %v2699 = vpack.c.b16 %v2695, %v2694
        %2700 = vrot.lane.b32.xlu0 %v2696, 32
        %v2701 = vpop.permute.xlu0 %2700
        %2702 = vrot.lane.b32.xlu0 %v2697, 32
        %v2703 = vpop.permute.xlu0 %2702
        %2704 = vrot.lane.b32.xlu0 %v2698, 32
        %v2705 = vpop.permute.xlu0 %2704
        %2706 = vrot.lane.b32.xlu0 %v2699, 32
        %v2707 = vpop.permute.xlu0 %2706
        %v2708 = vunpack.c.l.b16 %v1876
        %v2709 = vunpack.c.l.b16 %v1894
        %v2710 = vunpack.c.l.b16 %v1912
        %v2711 = vunpack.c.l.b16 %v1930
        %v2712 = vunpack.c.l.b16 %v1948
        %v2713 = vunpack.c.l.b16 %v1966
        %v2714 = vunpack.c.l.b16 %v1984
        %v2715 = vunpack.c.l.b16 %v2002
        %v2716 = vpack.c.b16 %v2709, %v2708
        %v2717 = vpack.c.b16 %v2711, %v2710
        %v2718 = vpack.c.b16 %v2713, %v2712
        %v2719 = vpack.c.b16 %v2715, %v2714
        %2720 = vrot.lane.b32.xlu0 %v2716, 64
        %v2721 = vpop.permute.xlu0 %2720
        %2722 = vrot.lane.b32.xlu0 %v2717, 64
        %v2723 = vpop.permute.xlu0 %2722
        %2724 = vrot.lane.b32.xlu0 %v2718, 64
        %v2725 = vpop.permute.xlu0 %2724
        %2726 = vrot.lane.b32.xlu0 %v2719, 64
        %v2727 = vpop.permute.xlu0 %2726
        %v2728 = vunpack.c.l.b16 %v2032
        %v2729 = vunpack.c.l.b16 %v2046
        %v2730 = vunpack.c.l.b16 %v2060
        %v2731 = vunpack.c.l.b16 %v2074
        %v2732 = vunpack.c.l.b16 %v2088
        %v2733 = vunpack.c.l.b16 %v2102
        %v2734 = vunpack.c.l.b16 %v2116
        %v2735 = vunpack.c.l.b16 %v2130
        %v2736 = vpack.c.b16 %v2729, %v2728
        %v2737 = vpack.c.b16 %v2731, %v2730
        %v2738 = vpack.c.b16 %v2733, %v2732
        %v2739 = vpack.c.b16 %v2735, %v2734
        %2740 = vrot.lane.b32.xlu0 %v2736, 96
        %v2741 = vpop.permute.xlu0 %2740
        %2742 = vrot.lane.b32.xlu0 %v2737, 96
        %v2743 = vpop.permute.xlu0 %2742
        %2744 = vrot.lane.b32.xlu0 %v2738, 96
        %v2745 = vpop.permute.xlu0 %2744
        %2746 = vrot.lane.b32.xlu0 %v2739, 96
        %v2747 = vpop.permute.xlu0 %2746
        %v2748 = vunpack.c.l.b16 %v2158
        %v2749 = vunpack.c.l.b16 %v2162
        %v2750 = vunpack.c.l.b16 %v2166
        %v2751 = vunpack.c.l.b16 %v2170
        %v2752 = vunpack.c.l.b16 %v2174
        %v2753 = vunpack.c.l.b16 %v2178
        %v2754 = vunpack.c.l.b16 %v2182
        %v2755 = vunpack.c.l.b16 %v2186
        %v2756 = vpack.c.b16 %v2749, %v2748
        %v2757 = vpack.c.b16 %v2751, %v2750
        %v2758 = vpack.c.b16 %v2753, %v2752
        %v2759 = vpack.c.b16 %v2755, %v2754
        %v2760 = vunpack.c.l.b16 %v2212
        %v2761 = vunpack.c.l.b16 %v2230
        %v2762 = vunpack.c.l.b16 %v2248
        %v2763 = vunpack.c.l.b16 %v2266
        %v2764 = vunpack.c.l.b16 %v2284
        %v2765 = vunpack.c.l.b16 %v2302
        %v2766 = vunpack.c.l.b16 %v2320
        %v2767 = vunpack.c.l.b16 %v2338
        %v2768 = vpack.c.b16 %v2761, %v2760
        %v2769 = vpack.c.b16 %v2763, %v2762
        %v2770 = vpack.c.b16 %v2765, %v2764
        %v2771 = vpack.c.b16 %v2767, %v2766
        %2772 = vrot.lane.b32.xlu0 %v2768, 32
        %v2773 = vpop.permute.xlu0 %2772
        %2774 = vrot.lane.b32.xlu0 %v2769, 32
        %v2775 = vpop.permute.xlu0 %2774
        %2776 = vrot.lane.b32.xlu0 %v2770, 32
        %v2777 = vpop.permute.xlu0 %2776
        %2778 = vrot.lane.b32.xlu0 %v2771, 32
        %v2779 = vpop.permute.xlu0 %2778
        %v2780 = vunpack.c.l.b16 %v2369
        %v2781 = vunpack.c.l.b16 %v2383
        %v2782 = vunpack.c.l.b16 %v2397
        %v2783 = vunpack.c.l.b16 %v2411
        %v2784 = vunpack.c.l.b16 %v2425
        %v2785 = vunpack.c.l.b16 %v2439
        %v2786 = vunpack.c.l.b16 %v2453
        %v2787 = vunpack.c.l.b16 %v2467
        %v2788 = vpack.c.b16 %v2781, %v2780
        %v2789 = vpack.c.b16 %v2783, %v2782
        %v2790 = vpack.c.b16 %v2785, %v2784
        %v2791 = vpack.c.b16 %v2787, %v2786
        %2792 = vrot.lane.b32.xlu0 %v2788, 64
        %v2793 = vpop.permute.xlu0 %2792
        %2794 = vrot.lane.b32.xlu0 %v2789, 64
        %v2795 = vpop.permute.xlu0 %2794
        %2796 = vrot.lane.b32.xlu0 %v2790, 64
        %v2797 = vpop.permute.xlu0 %2796
        %2798 = vrot.lane.b32.xlu0 %v2791, 64
        %v2799 = vpop.permute.xlu0 %2798
        %v2800 = vunpack.c.l.b16 %v2495
        %v2801 = vunpack.c.l.b16 %v2499
        %v2802 = vunpack.c.l.b16 %v2503
        %v2803 = vunpack.c.l.b16 %v2507
        %v2804 = vunpack.c.l.b16 %v2511
        %v2805 = vunpack.c.l.b16 %v2515
        %v2806 = vunpack.c.l.b16 %v2519
        %v2807 = vunpack.c.l.b16 %v2523
        %v2808 = vpack.c.b16 %v2801, %v2800
        %v2809 = vpack.c.b16 %v2803, %v2802
        %v2810 = vpack.c.b16 %v2805, %v2804
        %v2811 = vpack.c.b16 %v2807, %v2806
        %2812 = vrot.lane.b32.xlu0 %v2808, 96
        %v2813 = vpop.permute.xlu0 %2812
        %2814 = vrot.lane.b32.xlu0 %v2809, 96
        %v2815 = vpop.permute.xlu0 %2814
        %2816 = vrot.lane.b32.xlu0 %v2810, 96
        %v2817 = vpop.permute.xlu0 %2816
        %2818 = vrot.lane.b32.xlu0 %v2811, 96
        %v2819 = vpop.permute.xlu0 %2818
        %v2820 = vunpack.c.l.b16 %v2549
        %v2821 = vunpack.c.l.b16 %v2567
        %v2822 = vunpack.c.l.b16 %v2585
        %v2823 = vunpack.c.l.b16 %v2603
        %v2824 = vunpack.c.l.b16 %v2621
        %v2825 = vunpack.c.l.b16 %v2639
        %v2826 = vunpack.c.l.b16 %v2657
        %v2827 = vunpack.c.l.b16 %v2675
        %v2828 = vpack.c.b16 %v2821, %v2820
        %v2829 = vpack.c.b16 %v2823, %v2822
        %v2830 = vpack.c.b16 %v2825, %v2824
        %v2831 = vpack.c.b16 %v2827, %v2826
        %v2834 = vsel %vm525, %v2684, %v2701
        %v2837 = vsel %vm525, %v2685, %v2703
        %v2840 = vsel %vm525, %v2686, %v2705
        %v2843 = vsel %vm525, %v2687, %v2707
        %vm2844 = vcmask 523264
        %v2846 = vsel %vm2844, %v2834, %v2721
        %v2848 = vsel %vm2844, %v2837, %v2723
        %v2850 = vsel %vm2844, %v2840, %v2725
        %v2852 = vsel %vm2844, %v2843, %v2727
        %vm2853 = vcmask 785408
        %v2855 = vsel %vm2853, %v2846, %v2741
        %v2858 = vsel %vm2853, %v2848, %v2743
        %v2861 = vsel %vm2853, %v2850, %v2745
        %v2864 = vsel %vm2853, %v2852, %v2747
        %v2868 = vsel %vm525, %v2756, %v2773
        %v2871 = vsel %vm525, %v2757, %v2775
        %v2874 = vsel %vm525, %v2758, %v2777
        %v2877 = vsel %vm525, %v2759, %v2779
        %v2879 = vsel %vm2844, %v2868, %v2793
        %v2881 = vsel %vm2844, %v2871, %v2795
        %v2883 = vsel %vm2844, %v2874, %v2797
        %v2885 = vsel %vm2844, %v2877, %v2799
        %v2887 = vsel %vm2853, %v2879, %v2813
        %v2890 = vsel %vm2853, %v2881, %v2815
        %v2893 = vsel %vm2853, %v2883, %v2817
        %v2896 = vsel %vm2853, %v2885, %v2819
        %v2898 = vld [vmem:[%s5] sm:$0xf]
        %v2899 = vld [vmem:[%s5 + $0x4] sm:$0xf]
        %v2900 = vld [vmem:[%s5 + $0x8] sm:$0xf]
        %v2901 = vld [vmem:[%s5 + $0xc] sm:$0xf]
        %v2902 = vld [vmem:[%s5 + $0x10] sm:$0xf]
        %v2903 = vld [vmem:[%s5 + $0x14] sm:$0xf]
        %v2904 = vld [vmem:[%s5 + $0x18] sm:$0xf]
        %v2905 = vld [vmem:[%s5 + $0x1c] sm:$0xf]
        %v2906 = vld [vmem:[%s5 + $0x20] sm:$0xf]
        %v2907 = vld [vmem:[%s5 + $0x24] sm:$0xf]
        %v2908 = vld [vmem:[%s5 + $0x28] sm:$0xf]
        %v2909 = vld [vmem:[%s5 + $0x2c] sm:$0xf]
        %v2910 = vld [vmem:[%s5 + $0x30] sm:$0xf]
        %v2911 = vld [vmem:[%s5 + $0x34] sm:$0xf]
        %v2912 = vld [vmem:[%s5 + $0x38] sm:$0xf]
        %v2913 = vld [vmem:[%s5 + $0x3c] sm:$0xf]
        %v2914 = vld [vmem:[%s5 + $0x40] sm:$0xf]
        %v2915 = vld [vmem:[%s5 + $0x44] sm:$0xf]
        %v2916 = vld [vmem:[%s5 + $0x48] sm:$0xf]
        %v2917 = vld [vmem:[%s5 + $0x4c] sm:$0xf]
        %v2918 = vld [vmem:[%s5 + $0x50] sm:$0xf]
        %v2919 = vld [vmem:[%s5 + $0x54] sm:$0xf]
        %v2920 = vld [vmem:[%s5 + $0x58] sm:$0xf]
        %v2921 = vld [vmem:[%s5 + $0x5c] sm:$0xf]
        %v2922 = vld [vmem:[%s5 + $0x60] sm:$0xf]
        %v2923 = vld [vmem:[%s5 + $0x64] sm:$0xf]
        %v2924 = vld [vmem:[%s5 + $0x68] sm:$0xf]
        %v2925 = vld [vmem:[%s5 + $0x6c] sm:$0xf]
        %v2926 = vld [vmem:[%s5 + $0x70] sm:$0xf]
        %v2927 = vld [vmem:[%s5 + $0x74] sm:$0xf]
        %v2928 = vld [vmem:[%s5 + $0x78] sm:$0xf]
        %v2929 = vld [vmem:[%s5 + $0x7c] sm:$0xf]
        %v2930 = vld [vmem:[%s5 + $0x80] sm:$0xf]
        %v2931 = vld [vmem:[%s5 + $0x84] sm:$0xf]
        %v2932 = vld [vmem:[%s5 + $0x88] sm:$0xf]
        %v2933 = vld [vmem:[%s5 + $0x8c] sm:$0xf]
        %v2934 = vld [vmem:[%s6] sm:$0x1]
        %v2936 = vlaneseq
        %v2937 = vshrl.u32 %v2936, 7
        %v2938 = vsub.s32 0, %v2937
        %v2939 = vrot.slane %v2934, %v2938
        %v2977 = vunpack.c.l.b16 %v2898
        %v2978 = vunpack.c.l.b16 %v2899
        %v2979 = vunpack.c.l.b16 %v2900
        %v2980 = vunpack.c.l.b16 %v2901
        %v2981 = vunpack.c.l.b16 %v2902
        %v2982 = vunpack.c.l.b16 %v2903
        %v2983 = vunpack.c.l.b16 %v2904
        %v2984 = vunpack.c.l.b16 %v2905
        %v2985 = vunpack.c.l.b16 %v2906
        %v2986 = vunpack.c.l.b16 %v2907
        %v2987 = vunpack.c.l.b16 %v2908
        %v2988 = vunpack.c.l.b16 %v2909
        %v2989 = vunpack.c.l.b16 %v2910
        %v2990 = vunpack.c.l.b16 %v2911
        %v2991 = vunpack.c.l.b16 %v2912
        %v2992 = vunpack.c.l.b16 %v2913
        %v2993 = vunpack.c.l.b16 %v2914
        %v2994 = vunpack.c.l.b16 %v2915
        %v2995 = vunpack.c.l.b16 %v2916
        %v2996 = vunpack.c.l.b16 %v2917
        %v2997 = vunpack.c.l.b16 %v2918
        %v2998 = vunpack.c.l.b16 %v2919
        %v2999 = vunpack.c.l.b16 %v2920
        %v3000 = vunpack.c.l.b16 %v2921
        %v3001 = vunpack.c.l.b16 %v2922
        %v3002 = vunpack.c.l.b16 %v2923
        %v3003 = vunpack.c.l.b16 %v2924
        %v3004 = vunpack.c.l.b16 %v2925
        %v3005 = vunpack.c.l.b16 %v2926
        %v3006 = vunpack.c.l.b16 %v2927
        %v3007 = vunpack.c.l.b16 %v2928
        %v3008 = vunpack.c.l.b16 %v2929
        %v3009 = vunpack.c.l.b16 %v2930
        %v3010 = vunpack.c.l.b16 %v2931
        %v3011 = vunpack.c.l.b16 %v2932
        %v3012 = vunpack.c.l.b16 %v2933
        %v3013 = vpack.c.b16 %v2978, %v2977
        %v3014 = vpack.c.b16 %v2980, %v2979
        %v3015 = vpack.c.b16 %v2982, %v2981
        %v3016 = vpack.c.b16 %v2984, %v2983
        %v3017 = vpack.c.b16 %v2986, %v2985
        %v3018 = vpack.c.b16 %v2988, %v2987
        %v3019 = vpack.c.b16 %v2990, %v2989
        %v3020 = vpack.c.b16 %v2992, %v2991
        %v3021 = vpack.c.b16 %v2994, %v2993
        %v3022 = vpack.c.b16 %v2996, %v2995
        %v3023 = vpack.c.b16 %v2998, %v2997
        %v3024 = vpack.c.b16 %v3000, %v2999
        %v3025 = vpack.c.b16 %v3002, %v3001
        %v3026 = vpack.c.b16 %v3004, %v3003
        %v3027 = vpack.c.b16 %v3006, %v3005
        %v3028 = vpack.c.b16 %v3008, %v3007
        %v3029 = vpack.c.b16 %v3010, %v3009
        %v3030 = vpack.c.b16 %v3012, %v3011
        %v3050 = vsel %vm525, %v2828, 0
        %v3053 = vsel %vm525, %v2829, 0
        %v3056 = vsel %vm525, %v2830, 0
        %v3059 = vsel %vm525, %v2831, 0
        %3061 = vmatprep.subr.bf16.mxu0 0
        %3062 = vmatpush1.bf16.msra.mxu0 %v3013
        %3063 = vmatprep.subr.bf16.mxu0 0
        %3064 = vmatpush1.bf16.msra.mxu0 %v3014
        %3065 = vmatprep.subr.bf16.mxu0 0
        %3066 = vmatpush1.bf16.msra.mxu0 %v3015
        %3067 = vmatprep.subr.bf16.mxu0 0
        %3068 = vmatpush1.bf16.msra.mxu0 %v3016
        %3069 = vmatprep.subr.bf16.mxu0 0
        %3070 = vmatpush1.bf16.msra.mxu0 %v3017
        %3071 = vmatprep.subr.bf16.mxu0 0
        %3072 = vmatpush1.bf16.msra.mxu0 %v3018
        %3073 = vmatprep.subr.bf16.mxu0 0
        %3074 = vmatpush1.bf16.msra.mxu0 %v3019
        %3075 = vmatprep.subr.bf16.mxu0 0
        %3076 = vmatpush1.bf16.msra.mxu0 %v3020
        %3077 = vmatprep.subr.bf16.mxu0 0
        %3078 = vmatpush1.bf16.msra.mxu0 %v3021
        %3079 = vmatprep.subr.bf16.mxu0 0
        %3080 = vmatpush1.bf16.msra.mxu0 %v3022
        %3081 = vmatprep.subr.bf16.mxu0 0
        %3082 = vmatpush1.bf16.msra.mxu0 %v3023
        %3083 = vmatprep.subr.bf16.mxu0 0
        %3084 = vmatpush1.bf16.msra.mxu0 %v3024
        %3085 = vmatprep.subr.bf16.mxu0 0
        %3086 = vmatpush1.bf16.msra.mxu0 %v3025
        %3087 = vmatprep.subr.bf16.mxu0 0
        %3088 = vmatpush1.bf16.msra.mxu0 %v3026
        %3089 = vmatprep.subr.bf16.mxu0 0
        %3090 = vmatpush1.bf16.msra.mxu0 %v3027
        %3091 = vmatprep.subr.bf16.mxu0 0
        %3092 = vmatpush1.bf16.msra.mxu0 %v3028
        %3093 = vmatprep.mubr.bf16.mxu0 %v2887
        %3094 = vmatmul.mubr.bf16.gmra.mrb[0].mxu0 %v2855
        %v3095 = vpop.f32.mrb[0].mxu0
        %v3096 = vadd.f32 %v2939, %v3095
        %v3097 = vpop.f32.mrb[0].mxu0
        %v3098 = vpop.f32.mrb[0].mxu0
        %v3099 = vadd.f32 %v2939, %v3098
        %v3100 = vpop.f32.mrb[0].mxu0
        %3101 = vmatprep.mubr.bf16.mxu0 %v2890
        %3102 = vmatmul.mubr.bf16.gmra.mrb[0].mxu0 %v2858
        %v3103 = vpop.f32.mrb[0].mxu0
        %v3104 = vadd.f32 %v2939, %v3103
        %v3105 = vpop.f32.mrb[0].mxu0
        %v3106 = vpop.f32.mrb[0].mxu0
        %v3107 = vadd.f32 %v2939, %v3106
        %v3108 = vpop.f32.mrb[0].mxu0
        %3109 = vmatprep.mubr.bf16.mxu0 %v2893
        %3110 = vmatmul.mubr.bf16.gmra.mrb[0].mxu0 %v2861
        %v3111 = vpop.f32.mrb[0].mxu0
        %v3112 = vadd.f32 %v2939, %v3111
        %v3113 = vpop.f32.mrb[0].mxu0
        %v3114 = vpop.f32.mrb[0].mxu0
        %v3115 = vadd.f32 %v2939, %v3114
        %v3116 = vpop.f32.mrb[0].mxu0
        %3117 = vmatprep.mubr.bf16.mxu0 %v2896
        %3118 = vmatmul.mubr.bf16.gmra.mrb[0].mxu0 %v2864
        %v3119 = vpop.f32.mrb[0].mxu0
        %v3120 = vadd.f32 %v2939, %v3119
        %v3121 = vpop.f32.mrb[0].mxu0
        %v3122 = vpop.f32.mrb[0].mxu0
        %v3123 = vadd.f32 %v2939, %v3122
        %v3124 = vpop.f32.mrb[0].mxu0
        %3125 = vdwg.mxu0
        %3126 = vmatprep.subr.bf16.mxu0 0
        %3127 = vmatpush1.bf16.msra.mxu0 %v3029
        %3128 = vmatprep.subr.bf16.mxu0 0
        %3129 = vmatpush1.bf16.msra.mxu0 %v3030
        %3130 = vmatprep.subr.bf16.mxu0 0
        %3131 = vmatpush1.bf16.msra.mxu0 0
        %3132 = vmatprep.subr.bf16.mxu0 0
        %3133 = vmatpush1.bf16.msra.mxu0 0
        %3134 = vmatprep.subr.bf16.mxu0 0
        %3135 = vmatpush1.bf16.msra.mxu0 0
        %3136 = vmatprep.subr.bf16.mxu0 0
        %3137 = vmatpush1.bf16.msra.mxu0 0
        %3138 = vmatprep.subr.bf16.mxu0 0
        %3139 = vmatpush1.bf16.msra.mxu0 0
        %3140 = vmatprep.subr.bf16.mxu0 0
        %3141 = vmatpush1.bf16.msra.mxu0 0
        %3142 = vmatprep.subr.bf16.mxu0 0
        %3143 = vmatpush1.bf16.msra.mxu0 0
        %3144 = vmatprep.subr.bf16.mxu0 0
        %3145 = vmatpush1.bf16.msra.mxu0 0
        %3146 = vmatprep.subr.bf16.mxu0 0
        %3147 = vmatpush1.bf16.msra.mxu0 0
        %3148 = vmatprep.subr.bf16.mxu0 0
        %3149 = vmatpush1.bf16.msra.mxu0 0
        %3150 = vmatprep.subr.bf16.mxu0 0
        %3151 = vmatpush1.bf16.msra.mxu0 0
        %3152 = vmatprep.subr.bf16.mxu0 0
        %3153 = vmatpush1.bf16.msra.mxu0 0
        %3154 = vmatprep.subr.bf16.mxu0 0
        %3155 = vmatpush1.bf16.msra.mxu0 0
        %3156 = vmatprep.subr.bf16.mxu0 0
        %3157 = vmatpush1.bf16.msra.mxu0 0
        %3158 = vmatprep.mubr.bf16.mxu0 0
        %3159 = vmatmul.mubr.bf16.gmra.mrb[0].mxu0 %v3050
        %v3160 = vpop.f32.mrb[0].mxu0
        %v3161 = vadd.f32 %v3096, %v3160
        %v3162 = vpop.f32.mrb[0].mxu0
        %v3163 = vpop.f32.mrb[0].mxu0
        %v3164 = vadd.f32 %v3099, %v3163
        %v3165 = vpop.f32.mrb[0].mxu0
        %3166 = vmatprep.mubr.bf16.mxu0 0
        %3167 = vmatmul.mubr.bf16.gmra.mrb[0].mxu0 %v3053
        %v3168 = vpop.f32.mrb[0].mxu0
        %v3169 = vadd.f32 %v3104, %v3168
        %v3170 = vpop.f32.mrb[0].mxu0
        %v3171 = vpop.f32.mrb[0].mxu0
        %v3172 = vadd.f32 %v3107, %v3171
        %v3173 = vpop.f32.mrb[0].mxu0
        %3174 = vmatprep.mubr.bf16.mxu0 0
        %3175 = vmatmul.mubr.bf16.gmra.mrb[0].mxu0 %v3056
        %v3176 = vpop.f32.mrb[0].mxu0
        %v3177 = vadd.f32 %v3112, %v3176
        %v3178 = vpop.f32.mrb[0].mxu0
        %v3179 = vpop.f32.mrb[0].mxu0
        %v3180 = vadd.f32 %v3115, %v3179
        %v3181 = vpop.f32.mrb[0].mxu0
        %3182 = vmatprep.mubr.bf16.mxu0 0
        %3183 = vmatmul.mubr.bf16.gmra.mrb[0].mxu0 %v3059
        %v3184 = vpop.f32.mrb[0].mxu0
        %v3185 = vadd.f32 %v3120, %v3184
        %v3186 = vpop.f32.mrb[0].mxu0
        %v3187 = vpop.f32.mrb[0].mxu0
        %v3188 = vadd.f32 %v3123, %v3187
        %v3189 = vpop.f32.mrb[0].mxu0
        %3190 = vdwg.mxu0
        %v3191 = vld [vmem:[%s7] sm:$0x1]
        %v3192 = vld [vmem:[%s8] sm:$0x1]
        %v3193 = vsel %vm1559, %v3161, 0.0
        %v3194 = vsel %vm1559, %v3164, 0.0
        %v3195 = vadd.f32 %v3193, %v3194
        %v3196 = vsel %vm1559, %v3169, 0.0
        %v3197 = vadd.f32 %v3195, %v3196
        %v3198 = vsel %vm1559, %v3172, 0.0
        %v3199 = vadd.f32 %v3197, %v3198
        %v3200 = vsel %vm1559, %v3177, 0.0
        %v3201 = vadd.f32 %v3199, %v3200
        %v3202 = vsel %vm1559, %v3180, 0.0
        %v3203 = vadd.f32 %v3201, %v3202
        %v3204 = vsel %vm1559, %v3185, 0.0
        %v3205 = vadd.f32 %v3203, %v3204
        %v3206 = vsel %vm1559, %v3188, 0.0
        %v3207 = vadd.f32 %v3205, %v3206
        %v3208 = vrot.slane %v3207, 4
        %v3209 = vadd.f32 %v3207, %v3208
        %v3210 = vrot.slane %v3209, 2
        %v3211 = vadd.f32 %v3209, %v3210
        %v3212 = vrot.slane %v3211, 1
        %v3213 = vadd.f32 %v3211, %v3212
        %v3214 = vld [vmem:[%s4] sm:$0xff]
        %v3215 = vld [vmem:[%s4 + $0x8] sm:$0xff]
        %v3217 = vsel %vm1559, %v3213, 0
        %3219 = vmatprep.subr.mxu0 0.0
        %3220 = vmatpush1.msra.mxu0 %v3214
        %3221 = vmatprep.subr.mxu0 0.0
        %3222 = vmatpush1.msra.mxu0 %v3215
        %3223 = vmatprep.subr.mxu0 0.0
        %3224 = vmatpush1.msra.mxu0 0.0
        %3225 = vmatprep.subr.mxu0 0.0
        %3226 = vmatpush1.msra.mxu0 0.0
        %3227 = vmatprep.subr.mxu0 0.0
        %3228 = vmatpush1.msra.mxu0 0.0
        %3229 = vmatprep.subr.mxu0 0.0
        %3230 = vmatpush1.msra.mxu0 0.0
        %3231 = vmatprep.subr.mxu0 0.0
        %3232 = vmatpush1.msra.mxu0 0.0
        %3233 = vmatprep.subr.mxu0 0.0
        %3234 = vmatpush1.msra.mxu0 0.0
        %3235 = vmatprep.subr.mxu0 0.0
        %3236 = vmatpush1.msra.mxu0 0.0
        %3237 = vmatprep.subr.mxu0 0.0
        %3238 = vmatpush1.msra.mxu0 0.0
        %3239 = vmatprep.subr.mxu0 0.0
        %3240 = vmatpush1.msra.mxu0 0.0
        %3241 = vmatprep.subr.mxu0 0.0
        %3242 = vmatpush1.msra.mxu0 0.0
        %3243 = vmatprep.subr.mxu0 0.0
        %3244 = vmatpush1.msra.mxu0 0.0
        %3245 = vmatprep.subr.mxu0 0.0
        %3246 = vmatpush1.msra.mxu0 0.0
        %3247 = vmatprep.subr.mxu0 0.0
        %3248 = vmatpush1.msra.mxu0 0.0
        %3249 = vmatprep.subr.mxu0 0.0
        %3250 = vmatpush1.msra.mxu0 0.0
        %3251 = vmatprep.subr.mxu0 0.0
        %3252 = vmatpush1.msra.mxu0 0.0
        %3253 = vmatprep.subr.mxu0 0.0
        %3254 = vmatpush1.msra.mxu0 0.0
        %3255 = vmatprep.subr.mxu0 0.0
        %3256 = vmatpush1.msra.mxu0 0.0
        %3257 = vmatprep.subr.mxu0 0.0
        %3258 = vmatpush1.msra.mxu0 0.0
        %3259 = vmatprep.subr.mxu0 0.0
        %3260 = vmatpush1.msra.mxu0 0.0
        %3261 = vmatprep.subr.mxu0 0.0
        %3262 = vmatpush1.msra.mxu0 0.0
        %3263 = vmatprep.subr.mxu0 0.0
        %3264 = vmatpush1.msra.mxu0 0.0
        %3265 = vmatprep.subr.mxu0 0.0
        %3266 = vmatpush1.msra.mxu0 0.0
        %3267 = vmatprep.subr.mxu0 0.0
        %3268 = vmatpush1.msra.mxu0 0.0
        %3269 = vmatprep.subr.mxu0 0.0
        %3270 = vmatpush1.msra.mxu0 0.0
        %3271 = vmatprep.subr.mxu0 0.0
        %3272 = vmatpush1.msra.mxu0 0.0
        %3273 = vmatprep.subr.mxu0 0.0
        %3274 = vmatpush1.msra.mxu0 0.0
        %3275 = vmatprep.subr.mxu0 0.0
        %3276 = vmatpush1.msra.mxu0 0.0
        %3277 = vmatprep.subr.mxu0 0.0
        %3278 = vmatpush1.msra.mxu0 0.0
        %3279 = vmatprep.subr.mxu0 0.0
        %3280 = vmatpush1.msra.mxu0 0.0
        %3281 = vmatprep.subr.mxu0 0.0
        %3282 = vmatpush1.msra.mxu0 0.0
        %3283 = vmatprep.mubr.f32.mxu0 0.0
        %3284 = vmatmul.mubr.f32.gmra.mrb[0].mxu0 %v3217
        %v3285 = vpop.f32.mrb[0].mxu0
        %v3286 = vadd.f32 0.0, %v3285
        %v3287 = vpop.f32.mrb[0].mxu0
        %3288 = vdwg.mxu0
        %v3289 = vmul.f32 %v3286, 0.0078125
        %v3290 = vlaneseq
        %v3291 = vshrl.u32 %v3290, 7
        %v3292 = vsub.s32 0, %v3291
        %v3293 = vrot.slane %v3289, %v3292
        %v3294 = vsub.f32 %v3161, %v3293
        %v3295 = vsub.f32 %v3164, %v3293
        %v3296 = vsub.f32 %v3169, %v3293
        %v3297 = vsub.f32 %v3172, %v3293
        %v3298 = vsub.f32 %v3177, %v3293
        %v3299 = vsub.f32 %v3180, %v3293
        %v3300 = vsub.f32 %v3185, %v3293
        %v3301 = vsub.f32 %v3188, %v3293
        %v3302 = vmul.f32 %v3294, %v3294
        %v3303 = vmul.f32 %v3295, %v3295
        %v3304 = vmul.f32 %v3296, %v3296
        %v3305 = vmul.f32 %v3297, %v3297
        %v3306 = vmul.f32 %v3298, %v3298
        %v3307 = vmul.f32 %v3299, %v3299
        %v3308 = vmul.f32 %v3300, %v3300
        %v3309 = vmul.f32 %v3301, %v3301
        %v3310 = vsel %vm1559, %v3302, 0.0
        %v3311 = vsel %vm1559, %v3303, 0.0
        %v3312 = vadd.f32 %v3310, %v3311
        %v3313 = vsel %vm1559, %v3304, 0.0
        %v3314 = vadd.f32 %v3312, %v3313
        %v3315 = vsel %vm1559, %v3305, 0.0
        %v3316 = vadd.f32 %v3314, %v3315
        %v3317 = vsel %vm1559, %v3306, 0.0
        %v3318 = vadd.f32 %v3316, %v3317
        %v3319 = vsel %vm1559, %v3307, 0.0
        %v3320 = vadd.f32 %v3318, %v3319
        %v3321 = vsel %vm1559, %v3308, 0.0
        %v3322 = vadd.f32 %v3320, %v3321
        %v3323 = vsel %vm1559, %v3309, 0.0
        %v3324 = vadd.f32 %v3322, %v3323
        %v3325 = vrot.slane %v3324, 4
        %v3326 = vadd.f32 %v3324, %v3325
        %v3327 = vrot.slane %v3326, 2
        %v3328 = vadd.f32 %v3326, %v3327
        %v3329 = vrot.slane %v3328, 1
        %v3330 = vadd.f32 %v3328, %v3329
        %v3332 = vsel %vm1559, %v3330, 0
        %3334 = vmatprep.subr.mxu0 0.0
        %3335 = vmatpush1.msra.mxu0 %v3214
        %3336 = vmatprep.subr.mxu0 0.0
        %3337 = vmatpush1.msra.mxu0 %v3215
        %3338 = vmatprep.subr.mxu0 0.0
        %3339 = vmatpush1.msra.mxu0 0.0
        %3340 = vmatprep.subr.mxu0 0.0
        %3341 = vmatpush1.msra.mxu0 0.0
        %3342 = vmatprep.subr.mxu0 0.0
        %3343 = vmatpush1.msra.mxu0 0.0
        %3344 = vmatprep.subr.mxu0 0.0
        %3345 = vmatpush1.msra.mxu0 0.0
        %3346 = vmatprep.subr.mxu0 0.0
        %3347 = vmatpush1.msra.mxu0 0.0
        %3348 = vmatprep.subr.mxu0 0.0
        %3349 = vmatpush1.msra.mxu0 0.0
        %3350 = vmatprep.subr.mxu0 0.0
        %3351 = vmatpush1.msra.mxu0 0.0
        %3352 = vmatprep.subr.mxu0 0.0
        %3353 = vmatpush1.msra.mxu0 0.0
        %3354 = vmatprep.subr.mxu0 0.0
        %3355 = vmatpush1.msra.mxu0 0.0
        %3356 = vmatprep.subr.mxu0 0.0
        %3357 = vmatpush1.msra.mxu0 0.0
        %3358 = vmatprep.subr.mxu0 0.0
        %3359 = vmatpush1.msra.mxu0 0.0
        %3360 = vmatprep.subr.mxu0 0.0
        %3361 = vmatpush1.msra.mxu0 0.0
        %3362 = vmatprep.subr.mxu0 0.0
        %3363 = vmatpush1.msra.mxu0 0.0
        %3364 = vmatprep.subr.mxu0 0.0
        %3365 = vmatpush1.msra.mxu0 0.0
        %3366 = vmatprep.subr.mxu0 0.0
        %3367 = vmatpush1.msra.mxu0 0.0
        %3368 = vmatprep.subr.mxu0 0.0
        %3369 = vmatpush1.msra.mxu0 0.0
        %3370 = vmatprep.subr.mxu0 0.0
        %3371 = vmatpush1.msra.mxu0 0.0
        %3372 = vmatprep.subr.mxu0 0.0
        %3373 = vmatpush1.msra.mxu0 0.0
        %3374 = vmatprep.subr.mxu0 0.0
        %3375 = vmatpush1.msra.mxu0 0.0
        %3376 = vmatprep.subr.mxu0 0.0
        %3377 = vmatpush1.msra.mxu0 0.0
        %3378 = vmatprep.subr.mxu0 0.0
        %3379 = vmatpush1.msra.mxu0 0.0
        %3380 = vmatprep.subr.mxu0 0.0
        %3381 = vmatpush1.msra.mxu0 0.0
        %3382 = vmatprep.subr.mxu0 0.0
        %3383 = vmatpush1.msra.mxu0 0.0
        %3384 = vmatprep.subr.mxu0 0.0
        %3385 = vmatpush1.msra.mxu0 0.0
        %3386 = vmatprep.subr.mxu0 0.0
        %3387 = vmatpush1.msra.mxu0 0.0
        %3388 = vmatprep.subr.mxu0 0.0
        %3389 = vmatpush1.msra.mxu0 0.0
        %3390 = vmatprep.subr.mxu0 0.0
        %3391 = vmatpush1.msra.mxu0 0.0
        %3392 = vmatprep.subr.mxu0 0.0
        %3393 = vmatpush1.msra.mxu0 0.0
        %3394 = vmatprep.subr.mxu0 0.0
        %3395 = vmatpush1.msra.mxu0 0.0
        %3396 = vmatprep.subr.mxu0 0.0
        %3397 = vmatpush1.msra.mxu0 0.0
        %3398 = vmatprep.mubr.f32.mxu0 0.0
        %3399 = vmatmul.mubr.f32.gmra.mrb[0].mxu0 %v3332
        %v3400 = vpop.f32.mrb[0].mxu0
        %v3401 = vadd.f32 0.0, %v3400
        %v3402 = vpop.f32.mrb[0].mxu0
        %3403 = vdwg.mxu0
        %v3404 = vmul.f32 %v3401, 0.0078125
        %v3405 = vadd.f32 %v3404, 1e-05
        %v3406 = vrsqrt.pop %v3405
        %v3407 = vlaneseq
        %v3408 = vshrl.u32 %v3407, 7
        %v3409 = vsub.s32 0, %v3408
        %v3410 = vrot.slane %v3406, %v3409
        %v3411 = vmul.f32 %v3294, %v3410
        %v3412 = vmul.f32 %v3295, %v3410
        %v3413 = vmul.f32 %v3296, %v3410
        %v3414 = vmul.f32 %v3297, %v3410
        %v3415 = vmul.f32 %v3298, %v3410
        %v3416 = vmul.f32 %v3299, %v3410
        %v3417 = vmul.f32 %v3300, %v3410
        %v3418 = vmul.f32 %v3301, %v3410
        %v3420 = vlaneseq
        %v3421 = vshrl.u32 %v3420, 7
        %v3422 = vsub.s32 0, %v3421
        %v3423 = vrot.slane %v3191, %v3422
        %v3425 = vmul.f32 %v3411, %v3423
        %v3426 = vmul.f32 %v3412, %v3423
        %v3427 = vmul.f32 %v3413, %v3423
        %v3428 = vmul.f32 %v3414, %v3423
        %v3429 = vmul.f32 %v3415, %v3423
        %v3430 = vmul.f32 %v3416, %v3423
        %v3431 = vmul.f32 %v3417, %v3423
        %v3432 = vmul.f32 %v3418, %v3423
        %v3434 = vlaneseq
        %v3435 = vshrl.u32 %v3434, 7
        %v3436 = vsub.s32 0, %v3435
        %v3437 = vrot.slane %v3192, %v3436
        %v3439 = vadd.f32 %v3425, %v3437
        %v3440 = vadd.f32 %v3426, %v3437
        %v3441 = vadd.f32 %v3427, %v3437
        %v3442 = vadd.f32 %v3428, %v3437
        %v3443 = vadd.f32 %v3429, %v3437
        %v3444 = vadd.f32 %v3430, %v3437
        %v3445 = vadd.f32 %v3431, %v3437
        %v3446 = vadd.f32 %v3432, %v3437
        %v3447 = vmax.f32 %v3439, 0.0
        %v3448 = vmax.f32 %v3440, 0.0
        %v3449 = vmax.f32 %v3441, 0.0
        %v3450 = vmax.f32 %v3442, 0.0
        %v3451 = vmax.f32 %v3443, 0.0
        %v3452 = vmax.f32 %v3444, 0.0
        %v3453 = vmax.f32 %v3445, 0.0
        %v3454 = vmax.f32 %v3446, 0.0
        %v3455 = vpack.c.bf16 %v3447, %v3447
        %v3456 = vpack.c.bf16 %v3448, %v3448
        %v3457 = vpack.c.bf16 %v3449, %v3449
        %v3458 = vpack.c.bf16 %v3450, %v3450
        %v3459 = vpack.c.bf16 %v3451, %v3451
        %v3460 = vpack.c.bf16 %v3452, %v3452
        %v3461 = vpack.c.bf16 %v3453, %v3453
        %v3462 = vpack.c.bf16 %v3454, %v3454
        %v3471 = vunpack.c.l.b16 %v3455
        %v3472 = vunpack.c.l.b16 %v3456
        %v3473 = vunpack.c.l.b16 %v3457
        %v3474 = vunpack.c.l.b16 %v3458
        %v3475 = vunpack.c.l.b16 %v3459
        %v3476 = vunpack.c.l.b16 %v3460
        %v3477 = vunpack.c.l.b16 %v3461
        %v3478 = vunpack.c.l.b16 %v3462
        %v3479 = vpack.c.b16 %v3471, %v3471
        %v3480 = vpack.c.b16 %v3472, %v3472
        %v3481 = vpack.c.b16 %v3473, %v3473
        %v3482 = vpack.c.b16 %v3474, %v3474
        %v3483 = vpack.c.b16 %v3475, %v3475
        %v3484 = vpack.c.b16 %v3476, %v3476
        %v3485 = vpack.c.b16 %v3477, %v3477
        %v3486 = vpack.c.b16 %v3478, %v3478
        %v3487 = vrot.slane %v3479, 7
        %v3488 = vrot.slane %v3487, 4
        %v3489 = vrot.slane %v3480, 7
        %v3490 = vrot.slane %v3489, 4
        %v3491 = vrot.slane %v3481, 7
        %v3492 = vrot.slane %v3491, 4
        %v3493 = vrot.slane %v3482, 7
        %v3494 = vrot.slane %v3493, 4
        %v3495 = vrot.slane %v3483, 7
        %v3496 = vrot.slane %v3495, 4
        %v3497 = vrot.slane %v3484, 7
        %v3498 = vrot.slane %v3497, 4
        %v3499 = vrot.slane %v3485, 7
        %v3500 = vrot.slane %v3499, 4
        %v3501 = vrot.slane %v3486, 7
        %v3502 = vrot.slane %v3501, 4
        %vm3519 = vcmask 125953
        %3520 = vst.msk [vmem:[%s1640] sm:$0xe] %vm3519, %v3487
        %vm3521 = vcmask 122880
        %3522 = vst.msk [vmem:[%s1640 + $0x4] sm:$0x1] %vm3521, %v3488
        %3523 = vst.msk [vmem:[%s1640 + $0x8] sm:$0xe] %vm3519, %v3489
        %3524 = vst.msk [vmem:[%s1640 + $0xc] sm:$0x1] %vm3521, %v3490
        %3525 = vst.msk [vmem:[%s1640 + $0x10] sm:$0xe] %vm3519, %v3491
        %3526 = vst.msk [vmem:[%s1640 + $0x14] sm:$0x1] %vm3521, %v3492
        %3527 = vst.msk [vmem:[%s1640 + $0x18] sm:$0xe] %vm3519, %v3493
        %3528 = vst.msk [vmem:[%s1640 + $0x1c] sm:$0x1] %vm3521, %v3494
        %3529 = vst.msk [vmem:[%s1640 + $0x20] sm:$0xe] %vm3519, %v3495
        %3530 = vst.msk [vmem:[%s1640 + $0x24] sm:$0x1] %vm3521, %v3496
        %3531 = vst.msk [vmem:[%s1640 + $0x28] sm:$0xe] %vm3519, %v3497
        %3532 = vst.msk [vmem:[%s1640 + $0x2c] sm:$0x1] %vm3521, %v3498
        %3533 = vst.msk [vmem:[%s1640 + $0x30] sm:$0xe] %vm3519, %v3499
        %3534 = vst.msk [vmem:[%s1640 + $0x34] sm:$0x1] %vm3521, %v3500
        %3535 = vst.msk [vmem:[%s1640 + $0x38] sm:$0xe] %vm3519, %v3501
        %3536 = vst.msk [vmem:[%s1640 + $0x3c] sm:$0x1] %vm3521, %v3502
        %v3537 = vld [vmem:[#allocation2] sm:$0xf]
        %v3538 = vld [vmem:[#allocation2 + $0x4] sm:$0x1]
        %v3539 = vld [vmem:[#allocation2 + $0x8] sm:$0xf]
        %v3540 = vld [vmem:[#allocation2 + $0xc] sm:$0x1]
        %v3541 = vld [vmem:[#allocation2 + $0x10] sm:$0xf]
        %v3542 = vld [vmem:[#allocation2 + $0x14] sm:$0x1]
        %v3543 = vld [vmem:[#allocation2 + $0x18] sm:$0xf]
        %v3544 = vld [vmem:[#allocation2 + $0x1c] sm:$0x1]
        %v3545 = vld [vmem:[#allocation2 + $0x20] sm:$0xf]
        %v3546 = vld [vmem:[#allocation2 + $0x24] sm:$0x1]
        %v3547 = vld [vmem:[#allocation2 + $0x28] sm:$0xf]
        %v3548 = vld [vmem:[#allocation2 + $0x2c] sm:$0x1]
        %v3549 = vld [vmem:[#allocation2 + $0x30] sm:$0xf]
        %v3550 = vld [vmem:[#allocation2 + $0x34] sm:$0x1]
        %v3551 = vld [vmem:[#allocation2 + $0x38] sm:$0xf]
        %v3552 = vld [vmem:[#allocation2 + $0x3c] sm:$0x1]
        %v3554 = vshrl.u32 %v3537, 16
        %v3556 = vrot.slane %v3554, 4
        %v3557 = vshll.u32 %v3537, 16
        %v3559 = vrot.slane %v3557, 5
        %v3560 = vor.u32 %v3556, %v3559
        %v3561 = vrot.slane %v3560, 4
        %v3563 = vshll.u32 %v3538, 16
        %v3565 = vrot.slane %v3563, 5
        %v3566 = vsel %vm1676, %v3561, %v3565
        %v3568 = vshrl.u32 %v3539, 16
        %v3570 = vrot.slane %v3568, 4
        %v3571 = vshll.u32 %v3539, 16
        %v3573 = vrot.slane %v3571, 5
        %v3574 = vor.u32 %v3570, %v3573
        %v3575 = vrot.slane %v3574, 4
        %v3577 = vshll.u32 %v3540, 16
        %v3579 = vrot.slane %v3577, 5
        %v3580 = vsel %vm1676, %v3575, %v3579
        %v3582 = vshrl.u32 %v3541, 16
        %v3584 = vrot.slane %v3582, 4
        %v3585 = vshll.u32 %v3541, 16
        %v3587 = vrot.slane %v3585, 5
        %v3588 = vor.u32 %v3584, %v3587
        %v3589 = vrot.slane %v3588, 4
        %v3591 = vshll.u32 %v3542, 16
        %v3593 = vrot.slane %v3591, 5
        %v3594 = vsel %vm1676, %v3589, %v3593
        %v3596 = vshrl.u32 %v3543, 16
        %v3598 = vrot.slane %v3596, 4
        %v3599 = vshll.u32 %v3543, 16
        %v3601 = vrot.slane %v3599, 5
        %v3602 = vor.u32 %v3598, %v3601
        %v3603 = vrot.slane %v3602, 4
        %v3605 = vshll.u32 %v3544, 16
        %v3607 = vrot.slane %v3605, 5
        %v3608 = vsel %vm1676, %v3603, %v3607
        %v3610 = vshrl.u32 %v3545, 16
        %v3612 = vrot.slane %v3610, 4
        %v3613 = vshll.u32 %v3545, 16
        %v3615 = vrot.slane %v3613, 5
        %v3616 = vor.u32 %v3612, %v3615
        %v3617 = vrot.slane %v3616, 4
        %v3619 = vshll.u32 %v3546, 16
        %v3621 = vrot.slane %v3619, 5
        %v3622 = vsel %vm1676, %v3617, %v3621
        %v3624 = vshrl.u32 %v3547, 16
        %v3626 = vrot.slane %v3624, 4
        %v3627 = vshll.u32 %v3547, 16
        %v3629 = vrot.slane %v3627, 5
        %v3630 = vor.u32 %v3626, %v3629
        %v3631 = vrot.slane %v3630, 4
        %v3633 = vshll.u32 %v3548, 16
        %v3635 = vrot.slane %v3633, 5
        %v3636 = vsel %vm1676, %v3631, %v3635
        %v3638 = vshrl.u32 %v3549, 16
        %v3640 = vrot.slane %v3638, 4
        %v3641 = vshll.u32 %v3549, 16
        %v3643 = vrot.slane %v3641, 5
        %v3644 = vor.u32 %v3640, %v3643
        %v3645 = vrot.slane %v3644, 4
        %v3647 = vshll.u32 %v3550, 16
        %v3649 = vrot.slane %v3647, 5
        %v3650 = vsel %vm1676, %v3645, %v3649
        %v3652 = vshrl.u32 %v3551, 16
        %v3654 = vrot.slane %v3652, 4
        %v3655 = vshll.u32 %v3551, 16
        %v3657 = vrot.slane %v3655, 5
        %v3658 = vor.u32 %v3654, %v3657
        %v3659 = vrot.slane %v3658, 4
        %v3661 = vshll.u32 %v3552, 16
        %v3663 = vrot.slane %v3661, 5
        %v3664 = vsel %vm1676, %v3659, %v3663
        %v3665 = vld [vmem:[#allocation2] sm:$0xe]
        %v3666 = vld [vmem:[#allocation2 + $0x8] sm:$0xe]
        %v3667 = vld [vmem:[#allocation2 + $0x10] sm:$0xe]
        %v3668 = vld [vmem:[#allocation2 + $0x18] sm:$0xe]
        %v3669 = vld [vmem:[#allocation2 + $0x20] sm:$0xe]
        %v3670 = vld [vmem:[#allocation2 + $0x28] sm:$0xe]
        %v3671 = vld [vmem:[#allocation2 + $0x30] sm:$0xe]
        %v3672 = vld [vmem:[#allocation2 + $0x38] sm:$0xe]
        %v3689 = vrot.slane %v3665, 5
        %v3690 = vrot.slane %v3689, 4
        %v3691 = vrot.slane %v3538, 5
        %v3692 = vsel %vm1815, %v3690, %v3691
        %v3693 = vrot.slane %v3666, 5
        %v3694 = vrot.slane %v3693, 4
        %v3695 = vrot.slane %v3540, 5
        %v3696 = vsel %vm1815, %v3694, %v3695
        %v3697 = vrot.slane %v3667, 5
        %v3698 = vrot.slane %v3697, 4
        %v3699 = vrot.slane %v3542, 5
        %v3700 = vsel %vm1815, %v3698, %v3699
        %v3701 = vrot.slane %v3668, 5
        %v3702 = vrot.slane %v3701, 4
        %v3703 = vrot.slane %v3544, 5
        %v3704 = vsel %vm1815, %v3702, %v3703
        %v3705 = vrot.slane %v3669, 5
        %v3706 = vrot.slane %v3705, 4
        %v3707 = vrot.slane %v3546, 5
        %v3708 = vsel %vm1815, %v3706, %v3707
        %v3709 = vrot.slane %v3670, 5
        %v3710 = vrot.slane %v3709, 4
        %v3711 = vrot.slane %v3548, 5
        %v3712 = vsel %vm1815, %v3710, %v3711
        %v3713 = vrot.slane %v3671, 5
        %v3714 = vrot.slane %v3713, 4
        %v3715 = vrot.slane %v3550, 5
        %v3716 = vsel %vm1815, %v3714, %v3715
        %v3717 = vrot.slane %v3672, 5
        %v3718 = vrot.slane %v3717, 4
        %v3719 = vrot.slane %v3552, 5
        %v3720 = vsel %vm1815, %v3718, %v3719
        %v3721 = vld [vmem:[#allocation2 + $0x4] sm:$0x3]
        %v3722 = vld [vmem:[#allocation2 + $0xc] sm:$0x3]
        %v3723 = vld [vmem:[#allocation2 + $0x14] sm:$0x3]
        %v3724 = vld [vmem:[#allocation2 + $0x1c] sm:$0x3]
        %v3725 = vld [vmem:[#allocation2 + $0x24] sm:$0x3]
        %v3726 = vld [vmem:[#allocation2 + $0x2c] sm:$0x3]
        %v3727 = vld [vmem:[#allocation2 + $0x34] sm:$0x3]
        %v3728 = vld [vmem:[#allocation2 + $0x3c] sm:$0x3]
        %v3730 = vshrl.u32 %v3665, 16
        %v3732 = vrot.slane %v3730, 5
        %v3733 = vshll.u32 %v3665, 16
        %v3735 = vrot.slane %v3733, 6
        %v3736 = vor.u32 %v3732, %v3735
        %v3737 = vrot.slane %v3736, 4
        %v3739 = vshrl.u32 %v3721, 16
        %v3741 = vrot.slane %v3739, 5
        %v3742 = vshll.u32 %v3721, 16
        %v3744 = vrot.slane %v3742, 6
        %v3745 = vor.u32 %v3741, %v3744
        %v3746 = vsel %vm1858, %v3737, %v3745
        %v3748 = vshrl.u32 %v3666, 16
        %v3750 = vrot.slane %v3748, 5
        %v3751 = vshll.u32 %v3666, 16
        %v3753 = vrot.slane %v3751, 6
        %v3754 = vor.u32 %v3750, %v3753
        %v3755 = vrot.slane %v3754, 4
        %v3757 = vshrl.u32 %v3722, 16
        %v3759 = vrot.slane %v3757, 5
        %v3760 = vshll.u32 %v3722, 16
        %v3762 = vrot.slane %v3760, 6
        %v3763 = vor.u32 %v3759, %v3762
        %v3764 = vsel %vm1858, %v3755, %v3763
        %v3766 = vshrl.u32 %v3667, 16
        %v3768 = vrot.slane %v3766, 5
        %v3769 = vshll.u32 %v3667, 16
        %v3771 = vrot.slane %v3769, 6
        %v3772 = vor.u32 %v3768, %v3771
        %v3773 = vrot.slane %v3772, 4
        %v3775 = vshrl.u32 %v3723, 16
        %v3777 = vrot.slane %v3775, 5
        %v3778 = vshll.u32 %v3723, 16
        %v3780 = vrot.slane %v3778, 6
        %v3781 = vor.u32 %v3777, %v3780
        %v3782 = vsel %vm1858, %v3773, %v3781
        %v3784 = vshrl.u32 %v3668, 16
        %v3786 = vrot.slane %v3784, 5
        %v3787 = vshll.u32 %v3668, 16
        %v3789 = vrot.slane %v3787, 6
        %v3790 = vor.u32 %v3786, %v3789
        %v3791 = vrot.slane %v3790, 4
        %v3793 = vshrl.u32 %v3724, 16
        %v3795 = vrot.slane %v3793, 5
        %v3796 = vshll.u32 %v3724, 16
        %v3798 = vrot.slane %v3796, 6
        %v3799 = vor.u32 %v3795, %v3798
        %v3800 = vsel %vm1858, %v3791, %v3799
        %v3802 = vshrl.u32 %v3669, 16
        %v3804 = vrot.slane %v3802, 5
        %v3805 = vshll.u32 %v3669, 16
        %v3807 = vrot.slane %v3805, 6
        %v3808 = vor.u32 %v3804, %v3807
        %v3809 = vrot.slane %v3808, 4
        %v3811 = vshrl.u32 %v3725, 16
        %v3813 = vrot.slane %v3811, 5
        %v3814 = vshll.u32 %v3725, 16
        %v3816 = vrot.slane %v3814, 6
        %v3817 = vor.u32 %v3813, %v3816
        %v3818 = vsel %vm1858, %v3809, %v3817
        %v3820 = vshrl.u32 %v3670, 16
        %v3822 = vrot.slane %v3820, 5
        %v3823 = vshll.u32 %v3670, 16
        %v3825 = vrot.slane %v3823, 6
        %v3826 = vor.u32 %v3822, %v3825
        %v3827 = vrot.slane %v3826, 4
        %v3829 = vshrl.u32 %v3726, 16
        %v3831 = vrot.slane %v3829, 5
        %v3832 = vshll.u32 %v3726, 16
        %v3834 = vrot.slane %v3832, 6
        %v3835 = vor.u32 %v3831, %v3834
        %v3836 = vsel %vm1858, %v3827, %v3835
        %v3838 = vshrl.u32 %v3671, 16
        %v3840 = vrot.slane %v3838, 5
        %v3841 = vshll.u32 %v3671, 16
        %v3843 = vrot.slane %v3841, 6
        %v3844 = vor.u32 %v3840, %v3843
        %v3845 = vrot.slane %v3844, 4
        %v3847 = vshrl.u32 %v3727, 16
        %v3849 = vrot.slane %v3847, 5
        %v3850 = vshll.u32 %v3727, 16
        %v3852 = vrot.slane %v3850, 6
        %v3853 = vor.u32 %v3849, %v3852
        %v3854 = vsel %vm1858, %v3845, %v3853
        %v3856 = vshrl.u32 %v3672, 16
        %v3858 = vrot.slane %v3856, 5
        %v3859 = vshll.u32 %v3672, 16
        %v3861 = vrot.slane %v3859, 6
        %v3862 = vor.u32 %v3858, %v3861
        %v3863 = vrot.slane %v3862, 4
        %v3865 = vshrl.u32 %v3728, 16
        %v3867 = vrot.slane %v3865, 5
        %v3868 = vshll.u32 %v3728, 16
        %v3870 = vrot.slane %v3868, 6
        %v3871 = vor.u32 %v3867, %v3870
        %v3872 = vsel %vm1858, %v3863, %v3871
        %v3873 = vld [vmem:[%s1640] sm:$0xf]
        %v3874 = vld [vmem:[%s1640 + $0x4] sm:$0x1]
        %v3875 = vld [vmem:[%s1640 + $0x8] sm:$0xf]
        %v3876 = vld [vmem:[%s1640 + $0xc] sm:$0x1]
        %v3877 = vld [vmem:[%s1640 + $0x10] sm:$0xf]
        %v3878 = vld [vmem:[%s1640 + $0x14] sm:$0x1]
        %v3879 = vld [vmem:[%s1640 + $0x18] sm:$0xf]
        %v3880 = vld [vmem:[%s1640 + $0x1c] sm:$0x1]
        %v3881 = vld [vmem:[%s1640 + $0x20] sm:$0xf]
        %v3882 = vld [vmem:[%s1640 + $0x24] sm:$0x1]
        %v3883 = vld [vmem:[%s1640 + $0x28] sm:$0xf]
        %v3884 = vld [vmem:[%s1640 + $0x2c] sm:$0x1]
        %v3885 = vld [vmem:[%s1640 + $0x30] sm:$0xf]
        %v3886 = vld [vmem:[%s1640 + $0x34] sm:$0x1]
        %v3887 = vld [vmem:[%s1640 + $0x38] sm:$0xf]
        %v3888 = vld [vmem:[%s1640 + $0x3c] sm:$0x1]
        %v3890 = vshrl.u32 %v3873, 16
        %v3892 = vrot.slane %v3890, 4
        %v3893 = vshll.u32 %v3873, 16
        %v3895 = vrot.slane %v3893, 5
        %v3896 = vor.u32 %v3892, %v3895
        %v3897 = vrot.slane %v3896, 4
        %v3899 = vshll.u32 %v3874, 16
        %v3901 = vrot.slane %v3899, 5
        %v3902 = vsel %vm1676, %v3897, %v3901
        %v3904 = vshrl.u32 %v3875, 16
        %v3906 = vrot.slane %v3904, 4
        %v3907 = vshll.u32 %v3875, 16
        %v3909 = vrot.slane %v3907, 5
        %v3910 = vor.u32 %v3906, %v3909
        %v3911 = vrot.slane %v3910, 4
        %v3913 = vshll.u32 %v3876, 16
        %v3915 = vrot.slane %v3913, 5
        %v3916 = vsel %vm1676, %v3911, %v3915
        %v3918 = vshrl.u32 %v3877, 16
        %v3920 = vrot.slane %v3918, 4
        %v3921 = vshll.u32 %v3877, 16
        %v3923 = vrot.slane %v3921, 5
        %v3924 = vor.u32 %v3920, %v3923
        %v3925 = vrot.slane %v3924, 4
        %v3927 = vshll.u32 %v3878, 16
        %v3929 = vrot.slane %v3927, 5
        %v3930 = vsel %vm1676, %v3925, %v3929
        %v3932 = vshrl.u32 %v3879, 16
        %v3934 = vrot.slane %v3932, 4
        %v3935 = vshll.u32 %v3879, 16
        %v3937 = vrot.slane %v3935, 5
        %v3938 = vor.u32 %v3934, %v3937
        %v3939 = vrot.slane %v3938, 4
        %v3941 = vshll.u32 %v3880, 16
        %v3943 = vrot.slane %v3941, 5
        %v3944 = vsel %vm1676, %v3939, %v3943
        %v3946 = vshrl.u32 %v3881, 16
        %v3948 = vrot.slane %v3946, 4
        %v3949 = vshll.u32 %v3881, 16
        %v3951 = vrot.slane %v3949, 5
        %v3952 = vor.u32 %v3948, %v3951
        %v3953 = vrot.slane %v3952, 4
        %v3955 = vshll.u32 %v3882, 16
        %v3957 = vrot.slane %v3955, 5
        %v3958 = vsel %vm1676, %v3953, %v3957
        %v3960 = vshrl.u32 %v3883, 16
        %v3962 = vrot.slane %v3960, 4
        %v3963 = vshll.u32 %v3883, 16
        %v3965 = vrot.slane %v3963, 5
        %v3966 = vor.u32 %v3962, %v3965
        %v3967 = vrot.slane %v3966, 4
        %v3969 = vshll.u32 %v3884, 16
        %v3971 = vrot.slane %v3969, 5
        %v3972 = vsel %vm1676, %v3967, %v3971
        %v3974 = vshrl.u32 %v3885, 16
        %v3976 = vrot.slane %v3974, 4
        %v3977 = vshll.u32 %v3885, 16
        %v3979 = vrot.slane %v3977, 5
        %v3980 = vor.u32 %v3976, %v3979
        %v3981 = vrot.slane %v3980, 4
        %v3983 = vshll.u32 %v3886, 16
        %v3985 = vrot.slane %v3983, 5
        %v3986 = vsel %vm1676, %v3981, %v3985
        %v3988 = vshrl.u32 %v3887, 16
        %v3990 = vrot.slane %v3988, 4
        %v3991 = vshll.u32 %v3887, 16
        %v3993 = vrot.slane %v3991, 5
        %v3994 = vor.u32 %v3990, %v3993
        %v3995 = vrot.slane %v3994, 4
        %v3997 = vshll.u32 %v3888, 16
        %v3999 = vrot.slane %v3997, 5
        %v4000 = vsel %vm1676, %v3995, %v3999
        %v4001 = vld [vmem:[%s1640] sm:$0xe]
        %v4002 = vld [vmem:[%s1640 + $0x8] sm:$0xe]
        %v4003 = vld [vmem:[%s1640 + $0x10] sm:$0xe]
        %v4004 = vld [vmem:[%s1640 + $0x18] sm:$0xe]
        %v4005 = vld [vmem:[%s1640 + $0x20] sm:$0xe]
        %v4006 = vld [vmem:[%s1640 + $0x28] sm:$0xe]
        %v4007 = vld [vmem:[%s1640 + $0x30] sm:$0xe]
        %v4008 = vld [vmem:[%s1640 + $0x38] sm:$0xe]
        %v4025 = vrot.slane %v4001, 5
        %v4026 = vrot.slane %v4025, 4
        %v4027 = vrot.slane %v3874, 5
        %v4028 = vsel %vm1815, %v4026, %v4027
        %v4029 = vrot.slane %v4002, 5
        %v4030 = vrot.slane %v4029, 4
        %v4031 = vrot.slane %v3876, 5
        %v4032 = vsel %vm1815, %v4030, %v4031
        %v4033 = vrot.slane %v4003, 5
        %v4034 = vrot.slane %v4033, 4
        %v4035 = vrot.slane %v3878, 5
        %v4036 = vsel %vm1815, %v4034, %v4035
        %v4037 = vrot.slane %v4004, 5
        %v4038 = vrot.slane %v4037, 4
        %v4039 = vrot.slane %v3880, 5
        %v4040 = vsel %vm1815, %v4038, %v4039
        %v4041 = vrot.slane %v4005, 5
        %v4042 = vrot.slane %v4041, 4
        %v4043 = vrot.slane %v3882, 5
        %v4044 = vsel %vm1815, %v4042, %v4043
        %v4045 = vrot.slane %v4006, 5
        %v4046 = vrot.slane %v4045, 4
        %v4047 = vrot.slane %v3884, 5
        %v4048 = vsel %vm1815, %v4046, %v4047
        %v4049 = vrot.slane %v4007, 5
        %v4050 = vrot.slane %v4049, 4
        %v4051 = vrot.slane %v3886, 5
        %v4052 = vsel %vm1815, %v4050, %v4051
        %v4053 = vrot.slane %v4008, 5
        %v4054 = vrot.slane %v4053, 4
        %v4055 = vrot.slane %v3888, 5
        %v4056 = vsel %vm1815, %v4054, %v4055
        %v4057 = vld [vmem:[%s1640 + $0x4] sm:$0x3]
        %v4058 = vld [vmem:[%s1640 + $0xc] sm:$0x3]
        %v4059 = vld [vmem:[%s1640 + $0x14] sm:$0x3]
        %v4060 = vld [vmem:[%s1640 + $0x1c] sm:$0x3]
        %v4061 = vld [vmem:[%s1640 + $0x24] sm:$0x3]
        %v4062 = vld [vmem:[%s1640 + $0x2c] sm:$0x3]
        %v4063 = vld [vmem:[%s1640 + $0x34] sm:$0x3]
        %v4064 = vld [vmem:[%s1640 + $0x3c] sm:$0x3]
        %v4066 = vshrl.u32 %v4001, 16
        %v4068 = vrot.slane %v4066, 5
        %v4069 = vshll.u32 %v4001, 16
        %v4071 = vrot.slane %v4069, 6
        %v4072 = vor.u32 %v4068, %v4071
        %v4073 = vrot.slane %v4072, 4
        %v4075 = vshrl.u32 %v4057, 16
        %v4077 = vrot.slane %v4075, 5
        %v4078 = vshll.u32 %v4057, 16
        %v4080 = vrot.slane %v4078, 6
        %v4081 = vor.u32 %v4077, %v4080
        %v4082 = vsel %vm1858, %v4073, %v4081
        %v4084 = vshrl.u32 %v4002, 16
        %v4086 = vrot.slane %v4084, 5
        %v4087 = vshll.u32 %v4002, 16
        %v4089 = vrot.slane %v4087, 6
        %v4090 = vor.u32 %v4086, %v4089
        %v4091 = vrot.slane %v4090, 4
        %v4093 = vshrl.u32 %v4058, 16
        %v4095 = vrot.slane %v4093, 5
        %v4096 = vshll.u32 %v4058, 16
        %v4098 = vrot.slane %v4096, 6
        %v4099 = vor.u32 %v4095, %v4098
        %v4100 = vsel %vm1858, %v4091, %v4099
        %v4102 = vshrl.u32 %v4003, 16
        %v4104 = vrot.slane %v4102, 5
        %v4105 = vshll.u32 %v4003, 16
        %v4107 = vrot.slane %v4105, 6
        %v4108 = vor.u32 %v4104, %v4107
        %v4109 = vrot.slane %v4108, 4
        %v4111 = vshrl.u32 %v4059, 16
        %v4113 = vrot.slane %v4111, 5
        %v4114 = vshll.u32 %v4059, 16
        %v4116 = vrot.slane %v4114, 6
        %v4117 = vor.u32 %v4113, %v4116
        %v4118 = vsel %vm1858, %v4109, %v4117
        %v4120 = vshrl.u32 %v4004, 16
        %v4122 = vrot.slane %v4120, 5
        %v4123 = vshll.u32 %v4004, 16
        %v4125 = vrot.slane %v4123, 6
        %v4126 = vor.u32 %v4122, %v4125
        %v4127 = vrot.slane %v4126, 4
        %v4129 = vshrl.u32 %v4060, 16
        %v4131 = vrot.slane %v4129, 5
        %v4132 = vshll.u32 %v4060, 16
        %v4134 = vrot.slane %v4132, 6
        %v4135 = vor.u32 %v4131, %v4134
        %v4136 = vsel %vm1858, %v4127, %v4135
        %v4138 = vshrl.u32 %v4005, 16
        %v4140 = vrot.slane %v4138, 5
        %v4141 = vshll.u32 %v4005, 16
        %v4143 = vrot.slane %v4141, 6
        %v4144 = vor.u32 %v4140, %v4143
        %v4145 = vrot.slane %v4144, 4
        %v4147 = vshrl.u32 %v4061, 16
        %v4149 = vrot.slane %v4147, 5
        %v4150 = vshll.u32 %v4061, 16
        %v4152 = vrot.slane %v4150, 6
        %v4153 = vor.u32 %v4149, %v4152
        %v4154 = vsel %vm1858, %v4145, %v4153
        %v4156 = vshrl.u32 %v4006, 16
        %v4158 = vrot.slane %v4156, 5
        %v4159 = vshll.u32 %v4006, 16
        %v4161 = vrot.slane %v4159, 6
        %v4162 = vor.u32 %v4158, %v4161
        %v4163 = vrot.slane %v4162, 4
        %v4165 = vshrl.u32 %v4062, 16
        %v4167 = vrot.slane %v4165, 5
        %v4168 = vshll.u32 %v4062, 16
        %v4170 = vrot.slane %v4168, 6
        %v4171 = vor.u32 %v4167, %v4170
        %v4172 = vsel %vm1858, %v4163, %v4171
        %v4174 = vshrl.u32 %v4007, 16
        %v4176 = vrot.slane %v4174, 5
        %v4177 = vshll.u32 %v4007, 16
        %v4179 = vrot.slane %v4177, 6
        %v4180 = vor.u32 %v4176, %v4179
        %v4181 = vrot.slane %v4180, 4
        %v4183 = vshrl.u32 %v4063, 16
        %v4185 = vrot.slane %v4183, 5
        %v4186 = vshll.u32 %v4063, 16
        %v4188 = vrot.slane %v4186, 6
        %v4189 = vor.u32 %v4185, %v4188
        %v4190 = vsel %vm1858, %v4181, %v4189
        %v4192 = vshrl.u32 %v4008, 16
        %v4194 = vrot.slane %v4192, 5
        %v4195 = vshll.u32 %v4008, 16
        %v4197 = vrot.slane %v4195, 6
        %v4198 = vor.u32 %v4194, %v4197
        %v4199 = vrot.slane %v4198, 4
        %v4201 = vshrl.u32 %v4064, 16
        %v4203 = vrot.slane %v4201, 5
        %v4204 = vshll.u32 %v4064, 16
        %v4206 = vrot.slane %v4204, 6
        %v4207 = vor.u32 %v4203, %v4206
        %v4208 = vsel %vm1858, %v4199, %v4207
        %v4209 = vld [vmem:[%s2339] sm:$0xf]
        %v4210 = vld [vmem:[%s2339 + $0x4] sm:$0x1]
        %v4211 = vld [vmem:[%s2339 + $0x8] sm:$0xf]
        %v4212 = vld [vmem:[%s2339 + $0xc] sm:$0x1]
        %v4213 = vld [vmem:[%s2339 + $0x10] sm:$0xf]
        %v4214 = vld [vmem:[%s2339 + $0x14] sm:$0x1]
        %v4215 = vld [vmem:[%s2339 + $0x18] sm:$0xf]
        %v4216 = vld [vmem:[%s2339 + $0x1c] sm:$0x1]
        %v4217 = vld [vmem:[%s2339 + $0x20] sm:$0xf]
        %v4218 = vld [vmem:[%s2339 + $0x24] sm:$0x1]
        %v4219 = vld [vmem:[%s2339 + $0x28] sm:$0xf]
        %v4220 = vld [vmem:[%s2339 + $0x2c] sm:$0x1]
        %v4221 = vld [vmem:[%s2339 + $0x30] sm:$0xf]
        %v4222 = vld [vmem:[%s2339 + $0x34] sm:$0x1]
        %v4223 = vld [vmem:[%s2339 + $0x38] sm:$0xf]
        %v4224 = vld [vmem:[%s2339 + $0x3c] sm:$0x1]
        %v4226 = vshrl.u32 %v4209, 16
        %v4228 = vrot.slane %v4226, 4
        %v4229 = vshll.u32 %v4209, 16
        %v4231 = vrot.slane %v4229, 5
        %v4232 = vor.u32 %v4228, %v4231
        %v4233 = vrot.slane %v4232, 4
        %v4235 = vshll.u32 %v4210, 16
        %v4237 = vrot.slane %v4235, 5
        %v4238 = vsel %vm1676, %v4233, %v4237
        %v4240 = vshrl.u32 %v4211, 16
        %v4242 = vrot.slane %v4240, 4
        %v4243 = vshll.u32 %v4211, 16
        %v4245 = vrot.slane %v4243, 5
        %v4246 = vor.u32 %v4242, %v4245
        %v4247 = vrot.slane %v4246, 4
        %v4249 = vshll.u32 %v4212, 16
        %v4251 = vrot.slane %v4249, 5
        %v4252 = vsel %vm1676, %v4247, %v4251
        %v4254 = vshrl.u32 %v4213, 16
        %v4256 = vrot.slane %v4254, 4
        %v4257 = vshll.u32 %v4213, 16
        %v4259 = vrot.slane %v4257, 5
        %v4260 = vor.u32 %v4256, %v4259
        %v4261 = vrot.slane %v4260, 4
        %v4263 = vshll.u32 %v4214, 16
        %v4265 = vrot.slane %v4263, 5
        %v4266 = vsel %vm1676, %v4261, %v4265
        %v4268 = vshrl.u32 %v4215, 16
        %v4270 = vrot.slane %v4268, 4
        %v4271 = vshll.u32 %v4215, 16
        %v4273 = vrot.slane %v4271, 5
        %v4274 = vor.u32 %v4270, %v4273
        %v4275 = vrot.slane %v4274, 4
        %v4277 = vshll.u32 %v4216, 16
        %v4279 = vrot.slane %v4277, 5
        %v4280 = vsel %vm1676, %v4275, %v4279
        %v4282 = vshrl.u32 %v4217, 16
        %v4284 = vrot.slane %v4282, 4
        %v4285 = vshll.u32 %v4217, 16
        %v4287 = vrot.slane %v4285, 5
        %v4288 = vor.u32 %v4284, %v4287
        %v4289 = vrot.slane %v4288, 4
        %v4291 = vshll.u32 %v4218, 16
        %v4293 = vrot.slane %v4291, 5
        %v4294 = vsel %vm1676, %v4289, %v4293
        %v4296 = vshrl.u32 %v4219, 16
        %v4298 = vrot.slane %v4296, 4
        %v4299 = vshll.u32 %v4219, 16
        %v4301 = vrot.slane %v4299, 5
        %v4302 = vor.u32 %v4298, %v4301
        %v4303 = vrot.slane %v4302, 4
        %v4305 = vshll.u32 %v4220, 16
        %v4307 = vrot.slane %v4305, 5
        %v4308 = vsel %vm1676, %v4303, %v4307
        %v4310 = vshrl.u32 %v4221, 16
        %v4312 = vrot.slane %v4310, 4
        %v4313 = vshll.u32 %v4221, 16
        %v4315 = vrot.slane %v4313, 5
        %v4316 = vor.u32 %v4312, %v4315
        %v4317 = vrot.slane %v4316, 4
        %v4319 = vshll.u32 %v4222, 16
        %v4321 = vrot.slane %v4319, 5
        %v4322 = vsel %vm1676, %v4317, %v4321
        %v4324 = vshrl.u32 %v4223, 16
        %v4326 = vrot.slane %v4324, 4
        %v4327 = vshll.u32 %v4223, 16
        %v4329 = vrot.slane %v4327, 5
        %v4330 = vor.u32 %v4326, %v4329
        %v4331 = vrot.slane %v4330, 4
        %v4333 = vshll.u32 %v4224, 16
        %v4335 = vrot.slane %v4333, 5
        %v4336 = vsel %vm1676, %v4331, %v4335
        %v4337 = vld [vmem:[%s2339] sm:$0xe]
        %v4338 = vld [vmem:[%s2339 + $0x8] sm:$0xe]
        %v4339 = vld [vmem:[%s2339 + $0x10] sm:$0xe]
        %v4340 = vld [vmem:[%s2339 + $0x18] sm:$0xe]
        %v4341 = vld [vmem:[%s2339 + $0x20] sm:$0xe]
        %v4342 = vld [vmem:[%s2339 + $0x28] sm:$0xe]
        %v4343 = vld [vmem:[%s2339 + $0x30] sm:$0xe]
        %v4344 = vld [vmem:[%s2339 + $0x38] sm:$0xe]
        %v4361 = vrot.slane %v4337, 5
        %v4362 = vrot.slane %v4361, 4
        %v4363 = vrot.slane %v4210, 5
        %v4364 = vsel %vm1815, %v4362, %v4363
        %v4365 = vrot.slane %v4338, 5
        %v4366 = vrot.slane %v4365, 4
        %v4367 = vrot.slane %v4212, 5
        %v4368 = vsel %vm1815, %v4366, %v4367
        %v4369 = vrot.slane %v4339, 5
        %v4370 = vrot.slane %v4369, 4
        %v4371 = vrot.slane %v4214, 5
        %v4372 = vsel %vm1815, %v4370, %v4371
        %v4373 = vrot.slane %v4340, 5
        %v4374 = vrot.slane %v4373, 4
        %v4375 = vrot.slane %v4216, 5
        %v4376 = vsel %vm1815, %v4374, %v4375
        %v4377 = vrot.slane %v4341, 5
        %v4378 = vrot.slane %v4377, 4
        %v4379 = vrot.slane %v4218, 5
        %v4380 = vsel %vm1815, %v4378, %v4379
        %v4381 = vrot.slane %v4342, 5
        %v4382 = vrot.slane %v4381, 4
        %v4383 = vrot.slane %v4220, 5
        %v4384 = vsel %vm1815, %v4382, %v4383
        %v4385 = vrot.slane %v4343, 5
        %v4386 = vrot.slane %v4385, 4
        %v4387 = vrot.slane %v4222, 5
        %v4388 = vsel %vm1815, %v4386, %v4387
        %v4389 = vrot.slane %v4344, 5
        %v4390 = vrot.slane %v4389, 4
        %v4391 = vrot.slane %v4224, 5
        %v4392 = vsel %vm1815, %v4390, %v4391
        %v4393 = vld [vmem:[%s2339 + $0x4] sm:$0x3]
        %v4394 = vld [vmem:[%s2339 + $0xc] sm:$0x3]
        %v4395 = vld [vmem:[%s2339 + $0x14] sm:$0x3]
        %v4396 = vld [vmem:[%s2339 + $0x1c] sm:$0x3]
        %v4397 = vld [vmem:[%s2339 + $0x24] sm:$0x3]
        %v4398 = vld [vmem:[%s2339 + $0x2c] sm:$0x3]
        %v4399 = vld [vmem:[%s2339 + $0x34] sm:$0x3]
        %v4400 = vld [vmem:[%s2339 + $0x3c] sm:$0x3]
        %v4402 = vshrl.u32 %v4337, 16
        %v4404 = vrot.slane %v4402, 5
        %v4405 = vshll.u32 %v4337, 16
        %v4407 = vrot.slane %v4405, 6
        %v4408 = vor.u32 %v4404, %v4407
        %v4409 = vrot.slane %v4408, 4
        %v4411 = vshrl.u32 %v4393, 16
        %v4413 = vrot.slane %v4411, 5
        %v4414 = vshll.u32 %v4393, 16
        %v4416 = vrot.slane %v4414, 6
        %v4417 = vor.u32 %v4413, %v4416
        %v4418 = vsel %vm1858, %v4409, %v4417
        %v4420 = vshrl.u32 %v4338, 16
        %v4422 = vrot.slane %v4420, 5
        %v4423 = vshll.u32 %v4338, 16
        %v4425 = vrot.slane %v4423, 6
        %v4426 = vor.u32 %v4422, %v4425
        %v4427 = vrot.slane %v4426, 4
        %v4429 = vshrl.u32 %v4394, 16
        %v4431 = vrot.slane %v4429, 5
        %v4432 = vshll.u32 %v4394, 16
        %v4434 = vrot.slane %v4432, 6
        %v4435 = vor.u32 %v4431, %v4434
        %v4436 = vsel %vm1858, %v4427, %v4435
        %v4438 = vshrl.u32 %v4339, 16
        %v4440 = vrot.slane %v4438, 5
        %v4441 = vshll.u32 %v4339, 16
        %v4443 = vrot.slane %v4441, 6
        %v4444 = vor.u32 %v4440, %v4443
        %v4445 = vrot.slane %v4444, 4
        %v4447 = vshrl.u32 %v4395, 16
        %v4449 = vrot.slane %v4447, 5
        %v4450 = vshll.u32 %v4395, 16
        %v4452 = vrot.slane %v4450, 6
        %v4453 = vor.u32 %v4449, %v4452
        %v4454 = vsel %vm1858, %v4445, %v4453
        %v4456 = vshrl.u32 %v4340, 16
        %v4458 = vrot.slane %v4456, 5
        %v4459 = vshll.u32 %v4340, 16
        %v4461 = vrot.slane %v4459, 6
        %v4462 = vor.u32 %v4458, %v4461
        %v4463 = vrot.slane %v4462, 4
        %v4465 = vshrl.u32 %v4396, 16
        %v4467 = vrot.slane %v4465, 5
        %v4468 = vshll.u32 %v4396, 16
        %v4470 = vrot.slane %v4468, 6
        %v4471 = vor.u32 %v4467, %v4470
        %v4472 = vsel %vm1858, %v4463, %v4471
        %v4474 = vshrl.u32 %v4341, 16
        %v4476 = vrot.slane %v4474, 5
        %v4477 = vshll.u32 %v4341, 16
        %v4479 = vrot.slane %v4477, 6
        %v4480 = vor.u32 %v4476, %v4479
        %v4481 = vrot.slane %v4480, 4
        %v4483 = vshrl.u32 %v4397, 16
        %v4485 = vrot.slane %v4483, 5
        %v4486 = vshll.u32 %v4397, 16
        %v4488 = vrot.slane %v4486, 6
        %v4489 = vor.u32 %v4485, %v4488
        %v4490 = vsel %vm1858, %v4481, %v4489
        %v4492 = vshrl.u32 %v4342, 16
        %v4494 = vrot.slane %v4492, 5
        %v4495 = vshll.u32 %v4342, 16
        %v4497 = vrot.slane %v4495, 6
        %v4498 = vor.u32 %v4494, %v4497
        %v4499 = vrot.slane %v4498, 4
        %v4501 = vshrl.u32 %v4398, 16
        %v4503 = vrot.slane %v4501, 5
        %v4504 = vshll.u32 %v4398, 16
        %v4506 = vrot.slane %v4504, 6
        %v4507 = vor.u32 %v4503, %v4506
        %v4508 = vsel %vm1858, %v4499, %v4507
        %v4510 = vshrl.u32 %v4343, 16
        %v4512 = vrot.slane %v4510, 5
        %v4513 = vshll.u32 %v4343, 16
        %v4515 = vrot.slane %v4513, 6
        %v4516 = vor.u32 %v4512, %v4515
        %v4517 = vrot.slane %v4516, 4
        %v4519 = vshrl.u32 %v4399, 16
        %v4521 = vrot.slane %v4519, 5
        %v4522 = vshll.u32 %v4399, 16
        %v4524 = vrot.slane %v4522, 6
        %v4525 = vor.u32 %v4521, %v4524
        %v4526 = vsel %vm1858, %v4517, %v4525
        %v4528 = vshrl.u32 %v4344, 16
        %v4530 = vrot.slane %v4528, 5
        %v4531 = vshll.u32 %v4344, 16
        %v4533 = vrot.slane %v4531, 6
        %v4534 = vor.u32 %v4530, %v4533
        %v4535 = vrot.slane %v4534, 4
        %v4537 = vshrl.u32 %v4400, 16
        %v4539 = vrot.slane %v4537, 5
        %v4540 = vshll.u32 %v4400, 16
        %v4542 = vrot.slane %v4540, 6
        %v4543 = vor.u32 %v4539, %v4542
        %v4544 = vsel %vm1858, %v4535, %v4543
        %v4545 = vunpack.c.l.b16 %v3566
        %v4546 = vunpack.c.l.b16 %v3580
        %v4547 = vunpack.c.l.b16 %v3594
        %v4548 = vunpack.c.l.b16 %v3608
        %v4549 = vunpack.c.l.b16 %v3622
        %v4550 = vunpack.c.l.b16 %v3636
        %v4551 = vunpack.c.l.b16 %v3650
        %v4552 = vunpack.c.l.b16 %v3664
        %v4553 = vpack.c.b16 %v4546, %v4545
        %v4554 = vpack.c.b16 %v4548, %v4547
        %v4555 = vpack.c.b16 %v4550, %v4549
        %v4556 = vpack.c.b16 %v4552, %v4551
        %v4557 = vunpack.c.l.b16 %v3692
        %v4558 = vunpack.c.l.b16 %v3696
        %v4559 = vunpack.c.l.b16 %v3700
        %v4560 = vunpack.c.l.b16 %v3704
        %v4561 = vunpack.c.l.b16 %v3708
        %v4562 = vunpack.c.l.b16 %v3712
        %v4563 = vunpack.c.l.b16 %v3716
        %v4564 = vunpack.c.l.b16 %v3720
        %v4565 = vpack.c.b16 %v4558, %v4557
        %v4566 = vpack.c.b16 %v4560, %v4559
        %v4567 = vpack.c.b16 %v4562, %v4561
        %v4568 = vpack.c.b16 %v4564, %v4563
        %4569 = vrot.lane.b32.xlu0 %v4565, 16
        %v4570 = vpop.permute.xlu0 %4569
        %4571 = vrot.lane.b32.xlu0 %v4566, 16
        %v4572 = vpop.permute.xlu0 %4571
        %4573 = vrot.lane.b32.xlu0 %v4567, 16
        %v4574 = vpop.permute.xlu0 %4573
        %4575 = vrot.lane.b32.xlu0 %v4568, 16
        %v4576 = vpop.permute.xlu0 %4575
        %v4577 = vunpack.c.l.b16 %v3746
        %v4578 = vunpack.c.l.b16 %v3764
        %v4579 = vunpack.c.l.b16 %v3782
        %v4580 = vunpack.c.l.b16 %v3800
        %v4581 = vunpack.c.l.b16 %v3818
        %v4582 = vunpack.c.l.b16 %v3836
        %v4583 = vunpack.c.l.b16 %v3854
        %v4584 = vunpack.c.l.b16 %v3872
        %v4585 = vpack.c.b16 %v4578, %v4577
        %v4586 = vpack.c.b16 %v4580, %v4579
        %v4587 = vpack.c.b16 %v4582, %v4581
        %v4588 = vpack.c.b16 %v4584, %v4583
        %4589 = vrot.lane.b32.xlu0 %v4585, 32
        %v4590 = vpop.permute.xlu0 %4589
        %4591 = vrot.lane.b32.xlu0 %v4586, 32
        %v4592 = vpop.permute.xlu0 %4591
        %4593 = vrot.lane.b32.xlu0 %v4587, 32
        %v4594 = vpop.permute.xlu0 %4593
        %4595 = vrot.lane.b32.xlu0 %v4588, 32
        %v4596 = vpop.permute.xlu0 %4595
        %v4597 = vunpack.c.l.b16 %v3902
        %v4598 = vunpack.c.l.b16 %v3916
        %v4599 = vunpack.c.l.b16 %v3930
        %v4600 = vunpack.c.l.b16 %v3944
        %v4601 = vunpack.c.l.b16 %v3958
        %v4602 = vunpack.c.l.b16 %v3972
        %v4603 = vunpack.c.l.b16 %v3986
        %v4604 = vunpack.c.l.b16 %v4000
        %v4605 = vpack.c.b16 %v4598, %v4597
        %v4606 = vpack.c.b16 %v4600, %v4599
        %v4607 = vpack.c.b16 %v4602, %v4601
        %v4608 = vpack.c.b16 %v4604, %v4603
        %4609 = vrot.lane.b32.xlu0 %v4605, 48
        %v4610 = vpop.permute.xlu0 %4609
        %4611 = vrot.lane.b32.xlu0 %v4606, 48
        %v4612 = vpop.permute.xlu0 %4611
        %4613 = vrot.lane.b32.xlu0 %v4607, 48
        %v4614 = vpop.permute.xlu0 %4613
        %4615 = vrot.lane.b32.xlu0 %v4608, 48
        %v4616 = vpop.permute.xlu0 %4615
        %v4617 = vunpack.c.l.b16 %v4028
        %v4618 = vunpack.c.l.b16 %v4032
        %v4619 = vunpack.c.l.b16 %v4036
        %v4620 = vunpack.c.l.b16 %v4040
        %v4621 = vunpack.c.l.b16 %v4044
        %v4622 = vunpack.c.l.b16 %v4048
        %v4623 = vunpack.c.l.b16 %v4052
        %v4624 = vunpack.c.l.b16 %v4056
        %v4625 = vpack.c.b16 %v4618, %v4617
        %v4626 = vpack.c.b16 %v4620, %v4619
        %v4627 = vpack.c.b16 %v4622, %v4621
        %v4628 = vpack.c.b16 %v4624, %v4623
        %4629 = vrot.lane.b32.xlu0 %v4625, 64
        %v4630 = vpop.permute.xlu0 %4629
        %4631 = vrot.lane.b32.xlu0 %v4626, 64
        %v4632 = vpop.permute.xlu0 %4631
        %4633 = vrot.lane.b32.xlu0 %v4627, 64
        %v4634 = vpop.permute.xlu0 %4633
        %4635 = vrot.lane.b32.xlu0 %v4628, 64
        %v4636 = vpop.permute.xlu0 %4635
        %v4637 = vunpack.c.l.b16 %v4082
        %v4638 = vunpack.c.l.b16 %v4100
        %v4639 = vunpack.c.l.b16 %v4118
        %v4640 = vunpack.c.l.b16 %v4136
        %v4641 = vunpack.c.l.b16 %v4154
        %v4642 = vunpack.c.l.b16 %v4172
        %v4643 = vunpack.c.l.b16 %v4190
        %v4644 = vunpack.c.l.b16 %v4208
        %v4645 = vpack.c.b16 %v4638, %v4637
        %v4646 = vpack.c.b16 %v4640, %v4639
        %v4647 = vpack.c.b16 %v4642, %v4641
        %v4648 = vpack.c.b16 %v4644, %v4643
        %4649 = vrot.lane.b32.xlu0 %v4645, 80
        %v4650 = vpop.permute.xlu0 %4649
        %4651 = vrot.lane.b32.xlu0 %v4646, 80
        %v4652 = vpop.permute.xlu0 %4651
        %4653 = vrot.lane.b32.xlu0 %v4647, 80
        %v4654 = vpop.permute.xlu0 %4653
        %4655 = vrot.lane.b32.xlu0 %v4648, 80
        %v4656 = vpop.permute.xlu0 %4655
        %v4657 = vunpack.c.l.b16 %v4238
        %v4658 = vunpack.c.l.b16 %v4252
        %v4659 = vunpack.c.l.b16 %v4266
        %v4660 = vunpack.c.l.b16 %v4280
        %v4661 = vunpack.c.l.b16 %v4294
        %v4662 = vunpack.c.l.b16 %v4308
        %v4663 = vunpack.c.l.b16 %v4322
        %v4664 = vunpack.c.l.b16 %v4336
        %v4665 = vpack.c.b16 %v4658, %v4657
        %v4666 = vpack.c.b16 %v4660, %v4659
        %v4667 = vpack.c.b16 %v4662, %v4661
        %v4668 = vpack.c.b16 %v4664, %v4663
        %4669 = vrot.lane.b32.xlu0 %v4665, 96
        %v4670 = vpop.permute.xlu0 %4669
        %4671 = vrot.lane.b32.xlu0 %v4666, 96
        %v4672 = vpop.permute.xlu0 %4671
        %4673 = vrot.lane.b32.xlu0 %v4667, 96
        %v4674 = vpop.permute.xlu0 %4673
        %4675 = vrot.lane.b32.xlu0 %v4668, 96
        %v4676 = vpop.permute.xlu0 %4675
        %v4677 = vunpack.c.l.b16 %v4364
        %v4678 = vunpack.c.l.b16 %v4368
        %v4679 = vunpack.c.l.b16 %v4372
        %v4680 = vunpack.c.l.b16 %v4376
        %v4681 = vunpack.c.l.b16 %v4380
        %v4682 = vunpack.c.l.b16 %v4384
        %v4683 = vunpack.c.l.b16 %v4388
        %v4684 = vunpack.c.l.b16 %v4392
        %v4685 = vpack.c.b16 %v4678, %v4677
        %v4686 = vpack.c.b16 %v4680, %v4679
        %v4687 = vpack.c.b16 %v4682, %v4681
        %v4688 = vpack.c.b16 %v4684, %v4683
        %4689 = vrot.lane.b32.xlu0 %v4685, 112
        %v4690 = vpop.permute.xlu0 %4689
        %4691 = vrot.lane.b32.xlu0 %v4686, 112
        %v4692 = vpop.permute.xlu0 %4691
        %4693 = vrot.lane.b32.xlu0 %v4687, 112
        %v4694 = vpop.permute.xlu0 %4693
        %4695 = vrot.lane.b32.xlu0 %v4688, 112
        %v4696 = vpop.permute.xlu0 %4695
        %v4697 = vunpack.c.l.b16 %v4418
        %v4698 = vunpack.c.l.b16 %v4436
        %v4699 = vunpack.c.l.b16 %v4454
        %v4700 = vunpack.c.l.b16 %v4472
        %v4701 = vunpack.c.l.b16 %v4490
        %v4702 = vunpack.c.l.b16 %v4508
        %v4703 = vunpack.c.l.b16 %v4526
        %v4704 = vunpack.c.l.b16 %v4544
        %v4705 = vpack.c.b16 %v4698, %v4697
        %v4706 = vpack.c.b16 %v4700, %v4699
        %v4707 = vpack.c.b16 %v4702, %v4701
        %v4708 = vpack.c.b16 %v4704, %v4703
        %v4711 = vsel %vm1559, %v4553, %v4570
        %v4714 = vsel %vm1559, %v4554, %v4572
        %v4717 = vsel %vm1559, %v4555, %v4574
        %v4720 = vsel %vm1559, %v4556, %v4576
        %v4722 = vsel %vm525, %v4711, %v4590
        %v4724 = vsel %vm525, %v4714, %v4592
        %v4726 = vsel %vm525, %v4717, %v4594
        %v4728 = vsel %vm525, %v4720, %v4596
        %vm4729 = vcmask 392192
        %v4731 = vsel %vm4729, %v4722, %v4610
        %v4733 = vsel %vm4729, %v4724, %v4612
        %v4735 = vsel %vm4729, %v4726, %v4614
        %v4737 = vsel %vm4729, %v4728, %v4616
        %v4739 = vsel %vm2844, %v4731, %v4630
        %v4741 = vsel %vm2844, %v4733, %v4632
        %v4743 = vsel %vm2844, %v4735, %v4634
        %v4745 = vsel %vm2844, %v4737, %v4636
        %vm4746 = vcmask 654336
        %v4748 = vsel %vm4746, %v4739, %v4650
        %v4750 = vsel %vm4746, %v4741, %v4652
        %v4752 = vsel %vm4746, %v4743, %v4654
        %v4754 = vsel %vm4746, %v4745, %v4656
        %v4756 = vsel %vm2853, %v4748, %v4670
        %v4758 = vsel %vm2853, %v4750, %v4672
        %v4760 = vsel %vm2853, %v4752, %v4674
        %v4762 = vsel %vm2853, %v4754, %v4676
        %vm4763 = vcmask 916480
        %v4765 = vsel %vm4763, %v4756, %v4690
        %v4768 = vsel %vm4763, %v4758, %v4692
        %v4771 = vsel %vm4763, %v4760, %v4694
        %v4774 = vsel %vm4763, %v4762, %v4696
        %v4776 = vld [vmem:[%s9] sm:$0xf]
        %v4777 = vld [vmem:[%s9 + $0x4] sm:$0xf]
        %v4778 = vld [vmem:[%s9 + $0x8] sm:$0xf]
        %v4779 = vld [vmem:[%s9 + $0xc] sm:$0xf]
        %v4780 = vld [vmem:[%s9 + $0x10] sm:$0xf]
        %v4781 = vld [vmem:[%s9 + $0x14] sm:$0xf]
        %v4782 = vld [vmem:[%s9 + $0x18] sm:$0xf]
        %v4783 = vld [vmem:[%s9 + $0x1c] sm:$0xf]
        %v4784 = vld [vmem:[%s9 + $0x20] sm:$0xf]
        %v4785 = vld [vmem:[%s9 + $0x24] sm:$0xf]
        %v4786 = vld [vmem:[%s9 + $0x28] sm:$0xf]
        %v4787 = vld [vmem:[%s9 + $0x2c] sm:$0xf]
        %v4788 = vld [vmem:[%s9 + $0x30] sm:$0xf]
        %v4789 = vld [vmem:[%s9 + $0x34] sm:$0xf]
        %v4790 = vld [vmem:[%s9 + $0x38] sm:$0xf]
        %v4791 = vld [vmem:[%s9 + $0x3c] sm:$0xf]
        %v4792 = vld [vmem:[%s9 + $0x40] sm:$0xf]
        %v4793 = vld [vmem:[%s9 + $0x44] sm:$0xf]
        %v4794 = vld [vmem:[%s10] sm:$0x1]
        %v4796 = vlaneseq
        %v4797 = vshrl.u32 %v4796, 7
        %v4798 = vsub.s32 0, %v4797
        %v4799 = vrot.slane %v4794, %v4798
        %v4819 = vunpack.c.l.b16 %v4776
        %v4820 = vunpack.c.l.b16 %v4777
        %v4821 = vunpack.c.l.b16 %v4778
        %v4822 = vunpack.c.l.b16 %v4779
        %v4823 = vunpack.c.l.b16 %v4780
        %v4824 = vunpack.c.l.b16 %v4781
        %v4825 = vunpack.c.l.b16 %v4782
        %v4826 = vunpack.c.l.b16 %v4783
        %v4827 = vunpack.c.l.b16 %v4784
        %v4828 = vunpack.c.l.b16 %v4785
        %v4829 = vunpack.c.l.b16 %v4786
        %v4830 = vunpack.c.l.b16 %v4787
        %v4831 = vunpack.c.l.b16 %v4788
        %v4832 = vunpack.c.l.b16 %v4789
        %v4833 = vunpack.c.l.b16 %v4790
        %v4834 = vunpack.c.l.b16 %v4791
        %v4835 = vunpack.c.l.b16 %v4792
        %v4836 = vunpack.c.l.b16 %v4793
        %v4837 = vpack.c.b16 %v4820, %v4819
        %v4838 = vpack.c.b16 %v4822, %v4821
        %v4839 = vpack.c.b16 %v4824, %v4823
        %v4840 = vpack.c.b16 %v4826, %v4825
        %v4841 = vpack.c.b16 %v4828, %v4827
        %v4842 = vpack.c.b16 %v4830, %v4829
        %v4843 = vpack.c.b16 %v4832, %v4831
        %v4844 = vpack.c.b16 %v4834, %v4833
        %v4845 = vpack.c.b16 %v4836, %v4835
        %v4856 = vsel %vm1559, %v4705, 0
        %v4859 = vsel %vm1559, %v4706, 0
        %v4862 = vsel %vm1559, %v4707, 0
        %v4865 = vsel %vm1559, %v4708, 0
        %4867 = vmatprep.subr.bf16.mxu0 0
        %4868 = vmatpush1.bf16.msra.mxu0 %v4837
        %4869 = vmatprep.subr.bf16.mxu0 0
        %4870 = vmatpush1.bf16.msra.mxu0 %v4838
        %4871 = vmatprep.subr.bf16.mxu0 0
        %4872 = vmatpush1.bf16.msra.mxu0 %v4839
        %4873 = vmatprep.subr.bf16.mxu0 0
        %4874 = vmatpush1.bf16.msra.mxu0 %v4840
        %4875 = vmatprep.subr.bf16.mxu0 0
        %4876 = vmatpush1.bf16.msra.mxu0 %v4841
        %4877 = vmatprep.subr.bf16.mxu0 0
        %4878 = vmatpush1.bf16.msra.mxu0 %v4842
        %4879 = vmatprep.subr.bf16.mxu0 0
        %4880 = vmatpush1.bf16.msra.mxu0 %v4843
        %4881 = vmatprep.subr.bf16.mxu0 0
        %4882 = vmatpush1.bf16.msra.mxu0 %v4844
        %4883 = vmatprep.subr.bf16.mxu0 0
        %4884 = vmatpush1.bf16.msra.mxu0 %v4845
        %4885 = vmatprep.subr.bf16.mxu0 0
        %4886 = vmatpush1.bf16.msra.mxu0 0
        %4887 = vmatprep.subr.bf16.mxu0 0
        %4888 = vmatpush1.bf16.msra.mxu0 0
        %4889 = vmatprep.subr.bf16.mxu0 0
        %4890 = vmatpush1.bf16.msra.mxu0 0
        %4891 = vmatprep.subr.bf16.mxu0 0
        %4892 = vmatpush1.bf16.msra.mxu0 0
        %4893 = vmatprep.subr.bf16.mxu0 0
        %4894 = vmatpush1.bf16.msra.mxu0 0
        %4895 = vmatprep.subr.bf16.mxu0 0
        %4896 = vmatpush1.bf16.msra.mxu0 0
        %4897 = vmatprep.subr.bf16.mxu0 0
        %4898 = vmatpush1.bf16.msra.mxu0 0
        %4899 = vmatprep.mubr.bf16.mxu0 %v4856
        %4900 = vmatmul.mubr.bf16.gmra.mrb[0].mxu0 %v4765
        %v4901 = vpop.f32.mrb[0].mxu0
        %v4902 = vadd.f32 %v4799, %v4901
        %v4903 = vpop.f32.mrb[0].mxu0
        %v4904 = vpop.f32.mrb[0].mxu0
        %v4905 = vadd.f32 %v4799, %v4904
        %v4906 = vpop.f32.mrb[0].mxu0
        %4907 = vmatprep.mubr.bf16.mxu0 %v4859
        %4908 = vmatmul.mubr.bf16.gmra.mrb[0].mxu0 %v4768
        %v4909 = vpop.f32.mrb[0].mxu0
        %v4910 = vadd.f32 %v4799, %v4909
        %v4911 = vpop.f32.mrb[0].mxu0
        %v4912 = vpop.f32.mrb[0].mxu0
        %v4913 = vadd.f32 %v4799, %v4912
        %v4914 = vpop.f32.mrb[0].mxu0
        %4915 = vmatprep.mubr.bf16.mxu0 %v4862
        %4916 = vmatmul.mubr.bf16.gmra.mrb[0].mxu0 %v4771
        %v4917 = vpop.f32.mrb[0].mxu0
        %v4918 = vadd.f32 %v4799, %v4917
        %v4919 = vpop.f32.mrb[0].mxu0
        %v4920 = vpop.f32.mrb[0].mxu0
        %v4921 = vadd.f32 %v4799, %v4920
        %v4922 = vpop.f32.mrb[0].mxu0
        %4923 = vmatprep.mubr.bf16.mxu0 %v4865
        %4924 = vmatmul.mubr.bf16.gmra.mrb[0].mxu0 %v4774
        %v4925 = vpop.f32.mrb[0].mxu0
        %v4926 = vadd.f32 %v4799, %v4925
        %v4927 = vpop.f32.mrb[0].mxu0
        %v4928 = vpop.f32.mrb[0].mxu0
        %v4929 = vadd.f32 %v4799, %v4928
        %v4930 = vpop.f32.mrb[0].mxu0
        %4931 = vdwg.mxu0
        %v4932 = vld [vmem:[%s11] sm:$0x1]
        %v4933 = vld [vmem:[%s12] sm:$0x1]
        %v4934 = vsel %vm1559, %v4902, 0.0
        %v4935 = vsel %vm1559, %v4905, 0.0
        %v4936 = vadd.f32 %v4934, %v4935
        %v4937 = vsel %vm1559, %v4910, 0.0
        %v4938 = vadd.f32 %v4936, %v4937
        %v4939 = vsel %vm1559, %v4913, 0.0
        %v4940 = vadd.f32 %v4938, %v4939
        %v4941 = vsel %vm1559, %v4918, 0.0
        %v4942 = vadd.f32 %v4940, %v4941
        %v4943 = vsel %vm1559, %v4921, 0.0
        %v4944 = vadd.f32 %v4942, %v4943
        %v4945 = vsel %vm1559, %v4926, 0.0
        %v4946 = vadd.f32 %v4944, %v4945
        %v4947 = vsel %vm1559, %v4929, 0.0
        %v4948 = vadd.f32 %v4946, %v4947
        %v4949 = vrot.slane %v4948, 4
        %v4950 = vadd.f32 %v4948, %v4949
        %v4951 = vrot.slane %v4950, 2
        %v4952 = vadd.f32 %v4950, %v4951
        %v4953 = vrot.slane %v4952, 1
        %v4954 = vadd.f32 %v4952, %v4953
        %v4955 = vld [vmem:[%s4] sm:$0xff]
        %v4956 = vld [vmem:[%s4 + $0x8] sm:$0xff]
        %v4958 = vsel %vm1559, %v4954, 0
        %4960 = vmatprep.subr.mxu0 0.0
        %4961 = vmatpush1.msra.mxu0 %v4955
        %4962 = vmatprep.subr.mxu0 0.0
        %4963 = vmatpush1.msra.mxu0 %v4956
        %4964 = vmatprep.subr.mxu0 0.0
        %4965 = vmatpush1.msra.mxu0 0.0
        %4966 = vmatprep.subr.mxu0 0.0
        %4967 = vmatpush1.msra.mxu0 0.0
        %4968 = vmatprep.subr.mxu0 0.0
        %4969 = vmatpush1.msra.mxu0 0.0
        %4970 = vmatprep.subr.mxu0 0.0
        %4971 = vmatpush1.msra.mxu0 0.0
        %4972 = vmatprep.subr.mxu0 0.0
        %4973 = vmatpush1.msra.mxu0 0.0
        %4974 = vmatprep.subr.mxu0 0.0
        %4975 = vmatpush1.msra.mxu0 0.0
        %4976 = vmatprep.subr.mxu0 0.0
        %4977 = vmatpush1.msra.mxu0 0.0
        %4978 = vmatprep.subr.mxu0 0.0
        %4979 = vmatpush1.msra.mxu0 0.0
        %4980 = vmatprep.subr.mxu0 0.0
        %4981 = vmatpush1.msra.mxu0 0.0
        %4982 = vmatprep.subr.mxu0 0.0
        %4983 = vmatpush1.msra.mxu0 0.0
        %4984 = vmatprep.subr.mxu0 0.0
        %4985 = vmatpush1.msra.mxu0 0.0
        %4986 = vmatprep.subr.mxu0 0.0
        %4987 = vmatpush1.msra.mxu0 0.0
        %4988 = vmatprep.subr.mxu0 0.0
        %4989 = vmatpush1.msra.mxu0 0.0
        %4990 = vmatprep.subr.mxu0 0.0
        %4991 = vmatpush1.msra.mxu0 0.0
        %4992 = vmatprep.subr.mxu0 0.0
        %4993 = vmatpush1.msra.mxu0 0.0
        %4994 = vmatprep.subr.mxu0 0.0
        %4995 = vmatpush1.msra.mxu0 0.0
        %4996 = vmatprep.subr.mxu0 0.0
        %4997 = vmatpush1.msra.mxu0 0.0
        %4998 = vmatprep.subr.mxu0 0.0
        %4999 = vmatpush1.msra.mxu0 0.0
        %5000 = vmatprep.subr.mxu0 0.0
        %5001 = vmatpush1.msra.mxu0 0.0
        %5002 = vmatprep.subr.mxu0 0.0
        %5003 = vmatpush1.msra.mxu0 0.0
        %5004 = vmatprep.subr.mxu0 0.0
        %5005 = vmatpush1.msra.mxu0 0.0
        %5006 = vmatprep.subr.mxu0 0.0
        %5007 = vmatpush1.msra.mxu0 0.0
        %5008 = vmatprep.subr.mxu0 0.0
        %5009 = vmatpush1.msra.mxu0 0.0
        %5010 = vmatprep.subr.mxu0 0.0
        %5011 = vmatpush1.msra.mxu0 0.0
        %5012 = vmatprep.subr.mxu0 0.0
        %5013 = vmatpush1.msra.mxu0 0.0
        %5014 = vmatprep.subr.mxu0 0.0
        %5015 = vmatpush1.msra.mxu0 0.0
        %5016 = vmatprep.subr.mxu0 0.0
        %5017 = vmatpush1.msra.mxu0 0.0
        %5018 = vmatprep.subr.mxu0 0.0
        %5019 = vmatpush1.msra.mxu0 0.0
        %5020 = vmatprep.subr.mxu0 0.0
        %5021 = vmatpush1.msra.mxu0 0.0
        %5022 = vmatprep.subr.mxu0 0.0
        %5023 = vmatpush1.msra.mxu0 0.0
        %5024 = vmatprep.mubr.f32.mxu0 0.0
        %5025 = vmatmul.mubr.f32.gmra.mrb[0].mxu0 %v4958
        %v5026 = vpop.f32.mrb[0].mxu0
        %v5027 = vadd.f32 0.0, %v5026
        %v5028 = vpop.f32.mrb[0].mxu0
        %5029 = vdwg.mxu0
        %v5030 = vmul.f32 %v5027, 0.0078125
        %v5031 = vlaneseq
        %v5032 = vshrl.u32 %v5031, 7
        %v5033 = vsub.s32 0, %v5032
        %v5034 = vrot.slane %v5030, %v5033
        %v5035 = vsub.f32 %v4902, %v5034
        %v5036 = vsub.f32 %v4905, %v5034
        %v5037 = vsub.f32 %v4910, %v5034
        %v5038 = vsub.f32 %v4913, %v5034
        %v5039 = vsub.f32 %v4918, %v5034
        %v5040 = vsub.f32 %v4921, %v5034
        %v5041 = vsub.f32 %v4926, %v5034
        %v5042 = vsub.f32 %v4929, %v5034
        %v5043 = vmul.f32 %v5035, %v5035
        %v5044 = vmul.f32 %v5036, %v5036
        %v5045 = vmul.f32 %v5037, %v5037
        %v5046 = vmul.f32 %v5038, %v5038
        %v5047 = vmul.f32 %v5039, %v5039
        %v5048 = vmul.f32 %v5040, %v5040
        %v5049 = vmul.f32 %v5041, %v5041
        %v5050 = vmul.f32 %v5042, %v5042
        %v5051 = vsel %vm1559, %v5043, 0.0
        %v5052 = vsel %vm1559, %v5044, 0.0
        %v5053 = vadd.f32 %v5051, %v5052
        %v5054 = vsel %vm1559, %v5045, 0.0
        %v5055 = vadd.f32 %v5053, %v5054
        %v5056 = vsel %vm1559, %v5046, 0.0
        %v5057 = vadd.f32 %v5055, %v5056
        %v5058 = vsel %vm1559, %v5047, 0.0
        %v5059 = vadd.f32 %v5057, %v5058
        %v5060 = vsel %vm1559, %v5048, 0.0
        %v5061 = vadd.f32 %v5059, %v5060
        %v5062 = vsel %vm1559, %v5049, 0.0
        %v5063 = vadd.f32 %v5061, %v5062
        %v5064 = vsel %vm1559, %v5050, 0.0
        %v5065 = vadd.f32 %v5063, %v5064
        %v5066 = vrot.slane %v5065, 4
        %v5067 = vadd.f32 %v5065, %v5066
        %v5068 = vrot.slane %v5067, 2
        %v5069 = vadd.f32 %v5067, %v5068
        %v5070 = vrot.slane %v5069, 1
        %v5071 = vadd.f32 %v5069, %v5070
        %v5073 = vsel %vm1559, %v5071, 0
        %5075 = vmatprep.subr.mxu0 0.0
        %5076 = vmatpush1.msra.mxu0 %v4955
        %5077 = vmatprep.subr.mxu0 0.0
        %5078 = vmatpush1.msra.mxu0 %v4956
        %5079 = vmatprep.subr.mxu0 0.0
        %5080 = vmatpush1.msra.mxu0 0.0
        %5081 = vmatprep.subr.mxu0 0.0
        %5082 = vmatpush1.msra.mxu0 0.0
        %5083 = vmatprep.subr.mxu0 0.0
        %5084 = vmatpush1.msra.mxu0 0.0
        %5085 = vmatprep.subr.mxu0 0.0
        %5086 = vmatpush1.msra.mxu0 0.0
        %5087 = vmatprep.subr.mxu0 0.0
        %5088 = vmatpush1.msra.mxu0 0.0
        %5089 = vmatprep.subr.mxu0 0.0
        %5090 = vmatpush1.msra.mxu0 0.0
        %5091 = vmatprep.subr.mxu0 0.0
        %5092 = vmatpush1.msra.mxu0 0.0
        %5093 = vmatprep.subr.mxu0 0.0
        %5094 = vmatpush1.msra.mxu0 0.0
        %5095 = vmatprep.subr.mxu0 0.0
        %5096 = vmatpush1.msra.mxu0 0.0
        %5097 = vmatprep.subr.mxu0 0.0
        %5098 = vmatpush1.msra.mxu0 0.0
        %5099 = vmatprep.subr.mxu0 0.0
        %5100 = vmatpush1.msra.mxu0 0.0
        %5101 = vmatprep.subr.mxu0 0.0
        %5102 = vmatpush1.msra.mxu0 0.0
        %5103 = vmatprep.subr.mxu0 0.0
        %5104 = vmatpush1.msra.mxu0 0.0
        %5105 = vmatprep.subr.mxu0 0.0
        %5106 = vmatpush1.msra.mxu0 0.0
        %5107 = vmatprep.subr.mxu0 0.0
        %5108 = vmatpush1.msra.mxu0 0.0
        %5109 = vmatprep.subr.mxu0 0.0
        %5110 = vmatpush1.msra.mxu0 0.0
        %5111 = vmatprep.subr.mxu0 0.0
        %5112 = vmatpush1.msra.mxu0 0.0
        %5113 = vmatprep.subr.mxu0 0.0
        %5114 = vmatpush1.msra.mxu0 0.0
        %5115 = vmatprep.subr.mxu0 0.0
        %5116 = vmatpush1.msra.mxu0 0.0
        %5117 = vmatprep.subr.mxu0 0.0
        %5118 = vmatpush1.msra.mxu0 0.0
        %5119 = vmatprep.subr.mxu0 0.0
        %5120 = vmatpush1.msra.mxu0 0.0
        %5121 = vmatprep.subr.mxu0 0.0
        %5122 = vmatpush1.msra.mxu0 0.0
        %5123 = vmatprep.subr.mxu0 0.0
        %5124 = vmatpush1.msra.mxu0 0.0
        %5125 = vmatprep.subr.mxu0 0.0
        %5126 = vmatpush1.msra.mxu0 0.0
        %5127 = vmatprep.subr.mxu0 0.0
        %5128 = vmatpush1.msra.mxu0 0.0
        %5129 = vmatprep.subr.mxu0 0.0
        %5130 = vmatpush1.msra.mxu0 0.0
        %5131 = vmatprep.subr.mxu0 0.0
        %5132 = vmatpush1.msra.mxu0 0.0
        %5133 = vmatprep.subr.mxu0 0.0
        %5134 = vmatpush1.msra.mxu0 0.0
        %5135 = vmatprep.subr.mxu0 0.0
        %5136 = vmatpush1.msra.mxu0 0.0
        %5137 = vmatprep.subr.mxu0 0.0
        %5138 = vmatpush1.msra.mxu0 0.0
        %5139 = vmatprep.mubr.f32.mxu0 0.0
        %5140 = vmatmul.mubr.f32.gmra.mrb[0].mxu0 %v5073
        %v5141 = vpop.f32.mrb[0].mxu0
        %v5142 = vadd.f32 0.0, %v5141
        %v5143 = vpop.f32.mrb[0].mxu0
        %5144 = vdwg.mxu0
        %v5145 = vmul.f32 %v5142, 0.0078125
        %v5146 = vadd.f32 %v5145, 1e-05
        %v5147 = vrsqrt.pop %v5146
        %v5148 = vlaneseq
        %v5149 = vshrl.u32 %v5148, 7
        %v5150 = vsub.s32 0, %v5149
        %v5151 = vrot.slane %v5147, %v5150
        %v5152 = vmul.f32 %v5035, %v5151
        %v5153 = vmul.f32 %v5036, %v5151
        %v5154 = vmul.f32 %v5037, %v5151
        %v5155 = vmul.f32 %v5038, %v5151
        %v5156 = vmul.f32 %v5039, %v5151
        %v5157 = vmul.f32 %v5040, %v5151
        %v5158 = vmul.f32 %v5041, %v5151
        %v5159 = vmul.f32 %v5042, %v5151
        %v5161 = vlaneseq
        %v5162 = vshrl.u32 %v5161, 7
        %v5163 = vsub.s32 0, %v5162
        %v5164 = vrot.slane %v4932, %v5163
        %v5166 = vmul.f32 %v5152, %v5164
        %v5167 = vmul.f32 %v5153, %v5164
        %v5168 = vmul.f32 %v5154, %v5164
        %v5169 = vmul.f32 %v5155, %v5164
        %v5170 = vmul.f32 %v5156, %v5164
        %v5171 = vmul.f32 %v5157, %v5164
        %v5172 = vmul.f32 %v5158, %v5164
        %v5173 = vmul.f32 %v5159, %v5164
        %v5175 = vlaneseq
        %v5176 = vshrl.u32 %v5175, 7
        %v5177 = vsub.s32 0, %v5176
        %v5178 = vrot.slane %v4933, %v5177
        %v5180 = vadd.f32 %v5166, %v5178
        %v5181 = vadd.f32 %v5167, %v5178
        %v5182 = vadd.f32 %v5168, %v5178
        %v5183 = vadd.f32 %v5169, %v5178
        %v5184 = vadd.f32 %v5170, %v5178
        %v5185 = vadd.f32 %v5171, %v5178
        %v5186 = vadd.f32 %v5172, %v5178
        %v5187 = vadd.f32 %v5173, %v5178
        %v5188 = vmax.f32 %v5180, 0.0
        %v5189 = vmax.f32 %v5181, 0.0
        %v5190 = vmax.f32 %v5182, 0.0
        %v5191 = vmax.f32 %v5183, 0.0
        %v5192 = vmax.f32 %v5184, 0.0
        %v5193 = vmax.f32 %v5185, 0.0
        %v5194 = vmax.f32 %v5186, 0.0
        %v5195 = vmax.f32 %v5187, 0.0
        %5196 = vst.msk [vmem:[%s448] sm:$0xff] %vm1559, %v5188
        %5197 = vst.msk [vmem:[%s448 + $0x8] sm:$0xff] %vm1559, %v5189
        %5198 = vst.msk [vmem:[%s448 + $0x10] sm:$0xff] %vm1559, %v5190
        %5199 = vst.msk [vmem:[%s448 + $0x18] sm:$0xff] %vm1559, %v5191
        %5200 = vst.msk [vmem:[%s448 + $0x20] sm:$0xff] %vm1559, %v5192
        %5201 = vst.msk [vmem:[%s448 + $0x28] sm:$0xff] %vm1559, %v5193
        %5202 = vst.msk [vmem:[%s448 + $0x30] sm:$0xff] %vm1559, %v5194
        %5203 = vst.msk [vmem:[%s448 + $0x38] sm:$0xff] %vm1559, %v5195
        %s5204 = sand.u32 %s318, 1
        %s5205 = scalar_lea.sflag [#allocation4], %s5204
        %s5206 = sand.u32 %s318, 1
        %s5207 = smul.addr %s5206, 64
        %s5208 = scalar_lea.vmem [#allocation3], %s5207
        // Predicated region
        $region73: #{tpu_custom_call.1} parent=71 // pred_check
          %p5209 = pneg %p328
        $region74: #{tpu_custom_call.1} parent=71 // pred_check_branch
          %5211 = sbr.rel (%p5209) target = $region76
        $region75: #{tpu_custom_call.1} parent=71 // pred_region
          %s5213 = ssub.s32 1024, 1024
          %5214 = vsyncadd %s5205, %s5213
          %s5215 = smul.addr %s27, 8
          %s5216 = smul.addr %s5215, 128
          %s5217 = scalar_lea.hbm %s13, %s5216
          %s5218 = sshll.u32 %s5208, 4
          %s5219 = int_to_ptr.vmem [resolvable:$true] %s5218
          %5224 = dma.vmem_to_hbm [thread:$0]  %s5219, 1024, %s5217, %s5205, 128, 128, 8
        $region76: #{tpu_custom_call.1} parent=71 // pred_fallthru
          _
      $region72: #{tpu_custom_call.1} parent=5 // pred_fallthru
        _
      %p5225 = scmp.le.s32.totalorder 2, %s22
      // Predicated region
      $region77: #{tpu_custom_call.1} parent=5 // pred_check
        %p5226 = pneg %p5225
      $region78: #{tpu_custom_call.1} parent=5 // pred_check_branch
        %5228 = sbr.rel (%p5226) target = $region80
      $region79: #{tpu_custom_call.1} parent=5 // pred_region
        %s5229 = ssub.s32 %s22, 2
        // Predicated region
        $region81: #{tpu_custom_call.1} parent=79 // pred_check
          %p5230 = pneg %p334
        $region82: #{tpu_custom_call.1} parent=79 // pred_check_branch
          %5232 = sbr.rel (%p5230) target = $region84
        $region83: #{tpu_custom_call.1} parent=79 // pred_region
          %s5233 = sand.u32 %s319, 1
          %s5234 = scalar_lea.sflag [#allocation4], %s5233
          %s5235 = sand.u32 %s319, 1
          %s5236 = smul.addr %s5235, 64
          %s5237 = scalar_lea.vmem [#allocation3], %s5236
          %5238 = dma.done %s5234, 1024
        $region84: #{tpu_custom_call.1} parent=79 // pred_fallthru
          _
      $region80: #{tpu_custom_call.1} parent=5 // pred_fallthru
        _
    $region6: #{tpu_custom_call.1} parent=1 // loop_footer
      %s26 = sadd.s32 1, %s22
    $region7: #{tpu_custom_call.1} parent=1 // loop_footer_branch
      %21 = sbr.rel target = $region3
    $region8: #{tpu_custom_call.1} parent=1 // loop_exit
      _
    %5239 = vsyncpa [#allocation4], 1
    %s5240 = scalar_lea.sflag [#allocation4], 1
    %5241 = vsyncpa %s5240, 1

</llo_original>
